<compile_context>
chip_gen: v7x
topology: tpu7x:2x2x1
jax: 0.10.0
libtpu: 0.0.40
codegen_flags: <defaults>
</compile_context>

<pallas_src>
import functools

import jax
import jax.numpy as jnp
import numpy as np
from jax.experimental import pallas as pl
from jax.experimental.pallas import tpu as pltpu


def _round_up(v, m):
    return (v + m - 1) // m * m


def _conv_bn_lrelu_kernel(x_ref, w_ref, shift_ref, o_ref, *,
                          cin, kh, kw, stride, ho, tile_oh, wo, slope):
    # x_ref:     (Hp, S*Cin, Wq) bf16 — whole padded image of one sample,
    #            phase-split along W: x_ref[h, q*Cin+c, w'] = x_pad[c, h, w'*s+q]
    # w_ref:     (KH*KW, Cout, Cin) bf16 — BN scale folded into the weights.
    # shift_ref: (Cout, 1) f32 — folded BN shift.
    # o_ref:     (Cout, TILE_OH, Wo) f32 — NCHW output rows of this tile.
    t = pl.program_id(1)
    w_taps = [w_ref[k] for k in range(kh * kw)]          # (Cout, Cin) each
    shift = shift_ref[...]                               # (Cout, 1)
    for r in range(tile_oh):                             # static unroll
        # Clamp rows of the (possibly padded) last tile; duplicates are sliced
        # off in the wrapper, so no OOB reads and no undefined output rows.
        oh = jnp.minimum(t * tile_oh + r, ho - 1)
        acc = None
        for i in range(kh):
            row = x_ref[oh * stride + i]                 # (S*Cin, Wq), 1 load
            for j in range(kw):
                q, base = j % stride, j // stride
                rhs = row[q * cin:(q + 1) * cin, base:base + wo]   # (Cin, Wo)
                part = jnp.dot(w_taps[i * kw + j], rhs,
                               preferred_element_type=jnp.float32)  # (Cout, Wo)
                acc = part if acc is None else acc + part
        y = acc + shift
        o_ref[:, r, :] = jnp.where(y > 0, y, slope * y).astype(o_ref.dtype)


def conv_block_forward(x, weight, gamma, beta, running_mean, running_var,
                       *, stride, padding, eps=1e-5, slope=0.1):
    """x: (N, Cin, H, W) f32 NCHW. weight: (Cout, Cin, K, K) f32. Returns f32 NCHW."""
    n, cin, h, w = x.shape
    cout, _, kh, kw = weight.shape
    s, p = stride, padding
    ho = (h + 2 * p - kh) // s + 1
    wo = (w + 2 * p - kw) // s + 1
    hp, wp = h + 2 * p, w + 2 * p

    # ---- input prep: ONE pass over x (pad + transpose to (N,Hp,Cin,Wp), bf16).
    # For stride>1 the W axis is phase-split so that every in-kernel tap slice
    # is a contiguous lane slice regardless of stride.
    xb = jnp.pad(x.astype(jnp.bfloat16),
                 ((0, 0), (0, 0), (p, p), (p, p)))       # (N, Cin, Hp, Wp)
    xb = xb.transpose(0, 2, 1, 3)                        # (N, Hp, Cin, Wp)
    if s > 1:
        wq = (wp + s - 1) // s
        xb = jnp.pad(xb, ((0, 0), (0, 0), (0, 0), (0, wq * s - wp)))
        xb = xb.reshape(n, hp, cin, wq, s).transpose(0, 1, 4, 2, 3)
        xb = xb.reshape(n, hp, s * cin, wq)              # [q*Cin+c, w'] layout
    else:
        wq = wp
    scin = s * cin

    # ---- fold BatchNorm (eval): scale into weights, shift into the epilogue.
    inv_std = jax.lax.rsqrt(running_var.astype(jnp.float32) + eps)
    scale = gamma.astype(jnp.float32) * inv_std                          # (Cout,)
    shift = beta.astype(jnp.float32) - running_mean.astype(jnp.float32) * scale
    w_taps = weight.astype(jnp.float32) * scale[:, None, None, None]
    w_taps = w_taps.transpose(2, 3, 0, 1).reshape(kh * kw, cout, cin)
    w_taps = w_taps.astype(jnp.bfloat16)                 # (KH*KW, Cout, Cin)
    shift2 = shift.reshape(cout, 1)                      # (Cout, 1) f32

    # ---- tiling: output-row tiles (sublane-aligned) per sample.
    tile_oh = 8 if ho >= 8 else ho        # multiple of 8, or full Ho (single tile)
    t_cnt = -(-ho // tile_oh)
    ho_pad = t_cnt * tile_oh

    # ---- VMEM budget, per generation (v7x 64 MiB vs v5e/v6e 128 MiB).
    x_blk = hp * _round_up(scin, 8) * _round_up(wq, 128) * 2
    w_blk = kh * kw * _round_up(cout, 8) * _round_up(cin, 128) * 2
    o_blk = cout * _round_up(tile_oh, 8) * _round_up(wo, 128) * 4
    need = 2 * x_blk + 2 * w_blk + 2 * o_blk + (2 << 20)
    try:
        cap = int(pltpu.get_tpu_info().vmem_capacity_bytes)
    except Exception:
        cap = 64 * 1024 * 1024
    vmem_limit = int(min(max(need, 16 * 1024 * 1024), (cap * 3) // 5))
    vmem_limit = int(max(vmem_limit, min(need, cap - (16 << 20))))

    cost = pl.CostEstimate(
        flops=2 * n * ho * wo * cout * cin * kh * kw,
        transcendentals=0,
        bytes_accessed=xb.size * 2 + w_taps.size * 2 + n * cout * ho_pad * wo * 4)

    kern = functools.partial(
        _conv_bn_lrelu_kernel, cin=cin, kh=kh, kw=kw, stride=s,
        ho=ho, tile_oh=tile_oh, wo=wo, slope=slope)

    out = pl.pallas_call(
        kern,
        out_shape=jax.ShapeDtypeStruct((n, cout, ho_pad, wo), jnp.float32),
        grid_spec=pltpu.PrefetchScalarGridSpec(
            num_scalar_prefetch=0,
            grid=(n, t_cnt),
            in_specs=[
                # Whole padded image of sample b; constant over the row-tile
                # axis so it is DMA'd once per sample and stays resident.
                pl.BlockSpec((None, hp, scin, wq), lambda b, t: (b, 0, 0, 0)),
                # Folded weights / shift: resident across the whole grid.
                pl.BlockSpec((kh * kw, cout, cin), lambda b, t: (0, 0, 0)),
                pl.BlockSpec((cout, 1), lambda b, t: (0, 0)),
            ],
            out_specs=pl.BlockSpec((None, cout, tile_oh, wo),
                                   lambda b, t: (b, 0, t, 0)),
        ),
        compiler_params=pltpu.CompilerParams(
            dimension_semantics=("parallel", "parallel"),
            vmem_limit_bytes=vmem_limit),
        cost_estimate=cost,
    )(xb, w_taps, shift2)

    # Only a row slice of the (cheap) Ho padding; already NCHW, no transpose.
    return out[:, :, :ho, :]


def _reference(x, weight, gamma, beta, running_mean, running_var,
               *, stride, padding, eps=1e-5, slope=0.1):
    y = jax.lax.conv_general_dilated(
        x, weight, window_strides=(stride, stride),
        padding=[(padding, padding), (padding, padding)],
        dimension_numbers=("NCHW", "OIHW", "NCHW"))
    inv_std = 1.0 / jnp.sqrt(running_var + eps)
    y = (y - running_mean[None, :, None, None]) * inv_std[None, :, None, None]
    y = y * gamma[None, :, None, None] + beta[None, :, None, None]
    return jnp.where(y > 0, y, slope * y)


if __name__ == "__main__":
    key = jax.random.PRNGKey(0)
    k_x, k_w, k_g, k_b, k_m, k_v = jax.random.split(key, 6)

    N, Cin, H, W = 2, 4, 16, 16
    Cout, K, stride, padding = 8, 3, 1, 1

    x = jax.random.normal(k_x, (N, Cin, H, W), dtype=jnp.float32)
    weight = jax.random.normal(k_w, (Cout, Cin, K, K), dtype=jnp.float32) * 0.1
    gamma = jax.random.uniform(k_g, (Cout,), dtype=jnp.float32, minval=0.5, maxval=1.5)
    beta = jax.random.normal(k_b, (Cout,), dtype=jnp.float32) * 0.1
    running_mean = jax.random.normal(k_m, (Cout,), dtype=jnp.float32) * 0.1
    running_var = jax.random.uniform(k_v, (Cout,), dtype=jnp.float32,
                                     minval=0.5, maxval=1.5)

    out = conv_block_forward(x, weight, gamma, beta, running_mean, running_var,
                             stride=stride, padding=padding)
    out = jax.block_until_ready(out)

    ref = _reference(x, weight, gamma, beta, running_mean, running_var,
                     stride=stride, padding=padding)
    ref = jax.block_until_ready(ref)

    assert out.shape == (N, Cout, H, W), out.shape
    # bf16 conv operands (f32 accumulation) -> looser tolerance than pure f32.
    np.testing.assert_allclose(np.asarray(out), np.asarray(ref),
                               rtol=5e-2, atol=5e-2)
    print("KERNEL_OK")
</pallas_src>

<mosaic_0001>
module attributes {stable_mosaic.version = 11 : i64} {
  func.func @_conv_bn_lrelu_kernel(%arg0: i32, %arg1: i32, %arg2: memref<1x18x4x18xbf16, #tpu.memory_space<vmem>>, %arg3: memref<9x8x4xbf16, #tpu.memory_space<vmem>>, %arg4: memref<8x1xf32, #tpu.memory_space<vmem>>, %arg5: memref<1x8x8x16xf32, #tpu.memory_space<vmem>>) attributes {dimension_semantics = [#tpu.dimension_semantics<parallel>, #tpu.dimension_semantics<parallel>], iteration_bounds = array<i64: 2, 2>, scalar_prefetch = 0 : i64, scratch_operands = 0 : i64, tpu.core_type = #tpu.core_type<tc>, window_params = [{transform_indices = @transform_0, window_bounds = array<i64: 1, 18, 4, 18>}, {pipeline_mode = #tpu.pipeline_mode<synchronous>, transform_indices = @transform_1, window_bounds = array<i64: 9, 8, 4>}, {pipeline_mode = #tpu.pipeline_mode<synchronous>, transform_indices = @transform_2, window_bounds = array<i64: 8, 1>}, {transform_indices = @transform_3, window_bounds = array<i64: 1, 8, 8, 16>}]} {
    %c0 = arith.constant 0 : index
    %c0_0 = arith.constant 0 : index
    %c0_1 = arith.constant 0 : index
    %0 = vector.load %arg3[%c0, %c0_0, %c0_1] : memref<9x8x4xbf16, #tpu.memory_space<vmem>>, vector<1x8x4xbf16>
    %1 = vector.shape_cast %0 : vector<1x8x4xbf16> to vector<8x4xbf16>
    %c1 = arith.constant 1 : index
    %c0_2 = arith.constant 0 : index
    %c0_3 = arith.constant 0 : index
    %2 = vector.load %arg3[%c1, %c0_2, %c0_3] : memref<9x8x4xbf16, #tpu.memory_space<vmem>>, vector<1x8x4xbf16>
    %3 = vector.shape_cast %2 : vector<1x8x4xbf16> to vector<8x4xbf16>
    %c2 = arith.constant 2 : index
    %c0_4 = arith.constant 0 : index
    %c0_5 = arith.constant 0 : index
    %4 = vector.load %arg3[%c2, %c0_4, %c0_5] : memref<9x8x4xbf16, #tpu.memory_space<vmem>>, vector<1x8x4xbf16>
    %5 = vector.shape_cast %4 : vector<1x8x4xbf16> to vector<8x4xbf16>
    %c3 = arith.constant 3 : index
    %c0_6 = arith.constant 0 : index
    %c0_7 = arith.constant 0 : index
    %6 = vector.load %arg3[%c3, %c0_6, %c0_7] : memref<9x8x4xbf16, #tpu.memory_space<vmem>>, vector<1x8x4xbf16>
    %7 = vector.shape_cast %6 : vector<1x8x4xbf16> to vector<8x4xbf16>
    %c4 = arith.constant 4 : index
    %c0_8 = arith.constant 0 : index
    %c0_9 = arith.constant 0 : index
    %8 = vector.load %arg3[%c4, %c0_8, %c0_9] : memref<9x8x4xbf16, #tpu.memory_space<vmem>>, vector<1x8x4xbf16>
    %9 = vector.shape_cast %8 : vector<1x8x4xbf16> to vector<8x4xbf16>
    %c5 = arith.constant 5 : index
    %c0_10 = arith.constant 0 : index
    %c0_11 = arith.constant 0 : index
    %10 = vector.load %arg3[%c5, %c0_10, %c0_11] : memref<9x8x4xbf16, #tpu.memory_space<vmem>>, vector<1x8x4xbf16>
    %11 = vector.shape_cast %10 : vector<1x8x4xbf16> to vector<8x4xbf16>
    %c6 = arith.constant 6 : index
    %c0_12 = arith.constant 0 : index
    %c0_13 = arith.constant 0 : index
    %12 = vector.load %arg3[%c6, %c0_12, %c0_13] : memref<9x8x4xbf16, #tpu.memory_space<vmem>>, vector<1x8x4xbf16>
    %13 = vector.shape_cast %12 : vector<1x8x4xbf16> to vector<8x4xbf16>
    %c7 = arith.constant 7 : index
    %c0_14 = arith.constant 0 : index
    %c0_15 = arith.constant 0 : index
    %14 = vector.load %arg3[%c7, %c0_14, %c0_15] : memref<9x8x4xbf16, #tpu.memory_space<vmem>>, vector<1x8x4xbf16>
    %15 = vector.shape_cast %14 : vector<1x8x4xbf16> to vector<8x4xbf16>
    %c8 = arith.constant 8 : index
    %c0_16 = arith.constant 0 : index
    %c0_17 = arith.constant 0 : index
    %16 = vector.load %arg3[%c8, %c0_16, %c0_17] : memref<9x8x4xbf16, #tpu.memory_space<vmem>>, vector<1x8x4xbf16>
    %17 = vector.shape_cast %16 : vector<1x8x4xbf16> to vector<8x4xbf16>
    %c0_18 = arith.constant 0 : index
    %c0_19 = arith.constant 0 : index
    %18 = vector.load %arg4[%c0_18, %c0_19] : memref<8x1xf32, #tpu.memory_space<vmem>>, vector<8x1xf32>
    %c8_i32 = arith.constant 8 : i32
    %19 = arith.muli %arg1, %c8_i32 : i32
    %c0_i32 = arith.constant 0 : i32
    %20 = arith.addi %19, %c0_i32 : i32
    %c15_i32 = arith.constant 15 : i32
    %21 = arith.minsi %20, %c15_i32 : i32
    %c1_i32 = arith.constant 1 : i32
    %22 = arith.muli %21, %c1_i32 : i32
    %c0_i32_20 = arith.constant 0 : i32
    %23 = arith.addi %22, %c0_i32_20 : i32
    %c0_21 = arith.constant 0 : index
    %24 = arith.index_cast %23 : i32 to index
    %c0_22 = arith.constant 0 : index
    %c0_23 = arith.constant 0 : index
    %25 = vector.load %arg2[%c0_21, %24, %c0_22, %c0_23] : memref<1x18x4x18xbf16, #tpu.memory_space<vmem>>, vector<1x1x4x18xbf16>
    %26 = vector.shape_cast %25 : vector<1x1x4x18xbf16> to vector<4x18xbf16>
    %27 = vector.extract_strided_slice %26 {offsets = [0, 0], sizes = [4, 16], strides = [1, 1]} : vector<4x18xbf16> to vector<4x16xbf16>
    %cst = arith.constant dense<0.000000e+00> : vector<8x16xf32>
    %28 = tpu.matmul %1, %27, %cst {dimension_numbers = #tpu.dot_dimension_numbers<[1], [0], [0], [1], [0, 0, 1, 1], [], []>} : vector<8x4xbf16>, vector<4x16xbf16>, vector<8x16xf32> -> vector<8x16xf32>
    %29 = vector.extract_strided_slice %26 {offsets = [0, 1], sizes = [4, 16], strides = [1, 1]} : vector<4x18xbf16> to vector<4x16xbf16>
    %cst_24 = arith.constant dense<0.000000e+00> : vector<8x16xf32>
    %30 = tpu.matmul %3, %29, %cst_24 {dimension_numbers = #tpu.dot_dimension_numbers<[1], [0], [0], [1], [0, 0, 1, 1], [], []>} : vector<8x4xbf16>, vector<4x16xbf16>, vector<8x16xf32> -> vector<8x16xf32>
    %31 = arith.addf %28, %30 : vector<8x16xf32>
    %32 = vector.extract_strided_slice %26 {offsets = [0, 2], sizes = [4, 16], strides = [1, 1]} : vector<4x18xbf16> to vector<4x16xbf16>
    %cst_25 = arith.constant dense<0.000000e+00> : vector<8x16xf32>
    %33 = tpu.matmul %5, %32, %cst_25 {dimension_numbers = #tpu.dot_dimension_numbers<[1], [0], [0], [1], [0, 0, 1, 1], [], []>} : vector<8x4xbf16>, vector<4x16xbf16>, vector<8x16xf32> -> vector<8x16xf32>
    %34 = arith.addf %31, %33 : vector<8x16xf32>
    %c1_i32_26 = arith.constant 1 : i32
    %35 = arith.muli %21, %c1_i32_26 : i32
    %c1_i32_27 = arith.constant 1 : i32
    %36 = arith.addi %35, %c1_i32_27 : i32
    %c0_28 = arith.constant 0 : index
    %37 = arith.index_cast %36 : i32 to index
    %c0_29 = arith.constant 0 : index
    %c0_30 = arith.constant 0 : index
    %38 = vector.load %arg2[%c0_28, %37, %c0_29, %c0_30] : memref<1x18x4x18xbf16, #tpu.memory_space<vmem>>, vector<1x1x4x18xbf16>
    %39 = vector.shape_cast %38 : vector<1x1x4x18xbf16> to vector<4x18xbf16>
    %40 = vector.extract_strided_slice %39 {offsets = [0, 0], sizes = [4, 16], strides = [1, 1]} : vector<4x18xbf16> to vector<4x16xbf16>
    %cst_31 = arith.constant dense<0.000000e+00> : vector<8x16xf32>
    %41 = tpu.matmul %7, %40, %cst_31 {dimension_numbers = #tpu.dot_dimension_numbers<[1], [0], [0], [1], [0, 0, 1, 1], [], []>} : vector<8x4xbf16>, vector<4x16xbf16>, vector<8x16xf32> -> vector<8x16xf32>
    %42 = arith.addf %34, %41 : vector<8x16xf32>
    %43 = vector.extract_strided_slice %39 {offsets = [0, 1], sizes = [4, 16], strides = [1, 1]} : vector<4x18xbf16> to vector<4x16xbf16>
    %cst_32 = arith.constant dense<0.000000e+00> : vector<8x16xf32>
    %44 = tpu.matmul %9, %43, %cst_32 {dimension_numbers = #tpu.dot_dimension_numbers<[1], [0], [0], [1], [0, 0, 1, 1], [], []>} : vector<8x4xbf16>, vector<4x16xbf16>, vector<8x16xf32> -> vector<8x16xf32>
    %45 = arith.addf %42, %44 : vector<8x16xf32>
    %46 = vector.extract_strided_slice %39 {offsets = [0, 2], sizes = [4, 16], strides = [1, 1]} : vector<4x18xbf16> to vector<4x16xbf16>
    %cst_33 = arith.constant dense<0.000000e+00> : vector<8x16xf32>
    %47 = tpu.matmul %11, %46, %cst_33 {dimension_numbers = #tpu.dot_dimension_numbers<[1], [0], [0], [1], [0, 0, 1, 1], [], []>} : vector<8x4xbf16>, vector<4x16xbf16>, vector<8x16xf32> -> vector<8x16xf32>
    %48 = arith.addf %45, %47 : vector<8x16xf32>
    %c1_i32_34 = arith.constant 1 : i32
    %49 = arith.muli %21, %c1_i32_34 : i32
    %c2_i32 = arith.constant 2 : i32
    %50 = arith.addi %49, %c2_i32 : i32
    %c0_35 = arith.constant 0 : index
    %51 = arith.index_cast %50 : i32 to index
    %c0_36 = arith.constant 0 : index
    %c0_37 = arith.constant 0 : index
    %52 = vector.load %arg2[%c0_35, %51, %c0_36, %c0_37] : memref<1x18x4x18xbf16, #tpu.memory_space<vmem>>, vector<1x1x4x18xbf16>
    %53 = vector.shape_cast %52 : vector<1x1x4x18xbf16> to vector<4x18xbf16>
    %54 = vector.extract_strided_slice %53 {offsets = [0, 0], sizes = [4, 16], strides = [1, 1]} : vector<4x18xbf16> to vector<4x16xbf16>
    %cst_38 = arith.constant dense<0.000000e+00> : vector<8x16xf32>
    %55 = tpu.matmul %13, %54, %cst_38 {dimension_numbers = #tpu.dot_dimension_numbers<[1], [0], [0], [1], [0, 0, 1, 1], [], []>} : vector<8x4xbf16>, vector<4x16xbf16>, vector<8x16xf32> -> vector<8x16xf32>
    %56 = arith.addf %48, %55 : vector<8x16xf32>
    %57 = vector.extract_strided_slice %53 {offsets = [0, 1], sizes = [4, 16], strides = [1, 1]} : vector<4x18xbf16> to vector<4x16xbf16>
    %cst_39 = arith.constant dense<0.000000e+00> : vector<8x16xf32>
    %58 = tpu.matmul %15, %57, %cst_39 {dimension_numbers = #tpu.dot_dimension_numbers<[1], [0], [0], [1], [0, 0, 1, 1], [], []>} : vector<8x4xbf16>, vector<4x16xbf16>, vector<8x16xf32> -> vector<8x16xf32>
    %59 = arith.addf %56, %58 : vector<8x16xf32>
    %60 = vector.extract_strided_slice %53 {offsets = [0, 2], sizes = [4, 16], strides = [1, 1]} : vector<4x18xbf16> to vector<4x16xbf16>
    %cst_40 = arith.constant dense<0.000000e+00> : vector<8x16xf32>
    %61 = tpu.matmul %17, %60, %cst_40 {dimension_numbers = #tpu.dot_dimension_numbers<[1], [0], [0], [1], [0, 0, 1, 1], [], []>} : vector<8x4xbf16>, vector<4x16xbf16>, vector<8x16xf32> -> vector<8x16xf32>
    %62 = arith.addf %59, %61 : vector<8x16xf32>
    %63 = vector.broadcast %18 : vector<8x1xf32> to vector<8x16xf32>
    %64 = arith.addf %62, %63 : vector<8x16xf32>
    %cst_41 = arith.constant 0.000000e+00 : f32
    %65 = vector.broadcast %cst_41 : f32 to vector<8x16xf32>
    %66 = arith.cmpf ogt, %64, %65 : vector<8x16xf32>
    %cst_42 = arith.constant 1.000000e-01 : f32
    %67 = vector.broadcast %cst_42 : f32 to vector<8x16xf32>
    %68 = arith.mulf %67, %64 : vector<8x16xf32>
    %69 = arith.select %66, %64, %68 : vector<8x16xi1>, vector<8x16xf32>
    %c0_43 = arith.constant 0 : index
    %c0_44 = arith.constant 0 : index
    %c0_45 = arith.constant 0 : index
    %c0_46 = arith.constant 0 : index
    %70 = vector.load %arg5[%c0_43, %c0_44, %c0_45, %c0_46] : memref<1x8x8x16xf32, #tpu.memory_space<vmem>>, vector<1x8x1x16xf32>
    %71 = vector.shape_cast %70 : vector<1x8x1x16xf32> to vector<8x16xf32>
    %72 = vector.shape_cast %69 : vector<8x16xf32> to vector<1x8x1x16xf32>
    tpu.vector_store %arg5[%c0_43, %c0_44, %c0_45, %c0_46], %72 {strides = array<i32>} : memref<1x8x8x16xf32, #tpu.memory_space<vmem>>, vector<1x8x1x16xf32>,
    %c8_i32_47 = arith.constant 8 : i32
    %73 = arith.muli %arg1, %c8_i32_47 : i32
    %c1_i32_48 = arith.constant 1 : i32
    %74 = arith.addi %73, %c1_i32_48 : i32
    %c15_i32_49 = arith.constant 15 : i32
    %75 = arith.minsi %74, %c15_i32_49 : i32
    %c1_i32_50 = arith.constant 1 : i32
    %76 = arith.muli %75, %c1_i32_50 : i32
    %c0_i32_51 = arith.constant 0 : i32
    %77 = arith.addi %76, %c0_i32_51 : i32
    %c0_52 = arith.constant 0 : index
    %78 = arith.index_cast %77 : i32 to index
    %c0_53 = arith.constant 0 : index
    %c0_54 = arith.constant 0 : index
    %79 = vector.load %arg2[%c0_52, %78, %c0_53, %c0_54] : memref<1x18x4x18xbf16, #tpu.memory_space<vmem>>, vector<1x1x4x18xbf16>
    %80 = vector.shape_cast %79 : vector<1x1x4x18xbf16> to vector<4x18xbf16>
    %81 = vector.extract_strided_slice %80 {offsets = [0, 0], sizes = [4, 16], strides = [1, 1]} : vector<4x18xbf16> to vector<4x16xbf16>
    %cst_55 = arith.constant dense<0.000000e+00> : vector<8x16xf32>
    %82 = tpu.matmul %1, %81, %cst_55 {dimension_numbers = #tpu.dot_dimension_numbers<[1], [0], [0], [1], [0, 0, 1, 1], [], []>} : vector<8x4xbf16>, vector<4x16xbf16>, vector<8x16xf32> -> vector<8x16xf32>
    %83 = vector.extract_strided_slice %80 {offsets = [0, 1], sizes = [4, 16], strides = [1, 1]} : vector<4x18xbf16> to vector<4x16xbf16>
    %cst_56 = arith.constant dense<0.000000e+00> : vector<8x16xf32>
    %84 = tpu.matmul %3, %83, %cst_56 {dimension_numbers = #tpu.dot_dimension_numbers<[1], [0], [0], [1], [0, 0, 1, 1], [], []>} : vector<8x4xbf16>, vector<4x16xbf16>, vector<8x16xf32> -> vector<8x16xf32>
    %85 = arith.addf %82, %84 : vector<8x16xf32>
    %86 = vector.extract_strided_slice %80 {offsets = [0, 2], sizes = [4, 16], strides = [1, 1]} : vector<4x18xbf16> to vector<4x16xbf16>
    %cst_57 = arith.constant dense<0.000000e+00> : vector<8x16xf32>
    %87 = tpu.matmul %5, %86, %cst_57 {dimension_numbers = #tpu.dot_dimension_numbers<[1], [0], [0], [1], [0, 0, 1, 1], [], []>} : vector<8x4xbf16>, vector<4x16xbf16>, vector<8x16xf32> -> vector<8x16xf32>
    %88 = arith.addf %85, %87 : vector<8x16xf32>
    %c1_i32_58 = arith.constant 1 : i32
    %89 = arith.muli %75, %c1_i32_58 : i32
    %c1_i32_59 = arith.constant 1 : i32
    %90 = arith.addi %89, %c1_i32_59 : i32
    %c0_60 = arith.constant 0 : index
    %91 = arith.index_cast %90 : i32 to index
    %c0_61 = arith.constant 0 : index
    %c0_62 = arith.constant 0 : index
    %92 = vector.load %arg2[%c0_60, %91, %c0_61, %c0_62] : memref<1x18x4x18xbf16, #tpu.memory_space<vmem>>, vector<1x1x4x18xbf16>
    %93 = vector.shape_cast %92 : vector<1x1x4x18xbf16> to vector<4x18xbf16>
    %94 = vector.extract_strided_slice %93 {offsets = [0, 0], sizes = [4, 16], strides = [1, 1]} : vector<4x18xbf16> to vector<4x16xbf16>
    %cst_63 = arith.constant dense<0.000000e+00> : vector<8x16xf32>
    %95 = tpu.matmul %7, %94, %cst_63 {dimension_numbers = #tpu.dot_dimension_numbers<[1], [0], [0], [1], [0, 0, 1, 1], [], []>} : vector<8x4xbf16>, vector<4x16xbf16>, vector<8x16xf32> -> vector<8x16xf32>
    %96 = arith.addf %88, %95 : vector<8x16xf32>
    %97 = vector.extract_strided_slice %93 {offsets = [0, 1], sizes = [4, 16], strides = [1, 1]} : vector<4x18xbf16> to vector<4x16xbf16>
    %cst_64 = arith.constant dense<0.000000e+00> : vector<8x16xf32>
    %98 = tpu.matmul %9, %97, %cst_64 {dimension_numbers = #tpu.dot_dimension_numbers<[1], [0], [0], [1], [0, 0, 1, 1], [], []>} : vector<8x4xbf16>, vector<4x16xbf16>, vector<8x16xf32> -> vector<8x16xf32>
    %99 = arith.addf %96, %98 : vector<8x16xf32>
    %100 = vector.extract_strided_slice %93 {offsets = [0, 2], sizes = [4, 16], strides = [1, 1]} : vector<4x18xbf16> to vector<4x16xbf16>
    %cst_65 = arith.constant dense<0.000000e+00> : vector<8x16xf32>
    %101 = tpu.matmul %11, %100, %cst_65 {dimension_numbers = #tpu.dot_dimension_numbers<[1], [0], [0], [1], [0, 0, 1, 1], [], []>} : vector<8x4xbf16>, vector<4x16xbf16>, vector<8x16xf32> -> vector<8x16xf32>
    %102 = arith.addf %99, %101 : vector<8x16xf32>
    %c1_i32_66 = arith.constant 1 : i32
    %103 = arith.muli %75, %c1_i32_66 : i32
    %c2_i32_67 = arith.constant 2 : i32
    %104 = arith.addi %103, %c2_i32_67 : i32
    %c0_68 = arith.constant 0 : index
    %105 = arith.index_cast %104 : i32 to index
    %c0_69 = arith.constant 0 : index
    %c0_70 = arith.constant 0 : index
    %106 = vector.load %arg2[%c0_68, %105, %c0_69, %c0_70] : memref<1x18x4x18xbf16, #tpu.memory_space<vmem>>, vector<1x1x4x18xbf16>
    %107 = vector.shape_cast %106 : vector<1x1x4x18xbf16> to vector<4x18xbf16>
    %108 = vector.extract_strided_slice %107 {offsets = [0, 0], sizes = [4, 16], strides = [1, 1]} : vector<4x18xbf16> to vector<4x16xbf16>
    %cst_71 = arith.constant dense<0.000000e+00> : vector<8x16xf32>
    %109 = tpu.matmul %13, %108, %cst_71 {dimension_numbers = #tpu.dot_dimension_numbers<[1], [0], [0], [1], [0, 0, 1, 1], [], []>} : vector<8x4xbf16>, vector<4x16xbf16>, vector<8x16xf32> -> vector<8x16xf32>
    %110 = arith.addf %102, %109 : vector<8x16xf32>
    %111 = vector.extract_strided_slice %107 {offsets = [0, 1], sizes = [4, 16], strides = [1, 1]} : vector<4x18xbf16> to vector<4x16xbf16>
    %cst_72 = arith.constant dense<0.000000e+00> : vector<8x16xf32>
    %112 = tpu.matmul %15, %111, %cst_72 {dimension_numbers = #tpu.dot_dimension_numbers<[1], [0], [0], [1], [0, 0, 1, 1], [], []>} : vector<8x4xbf16>, vector<4x16xbf16>, vector<8x16xf32> -> vector<8x16xf32>
    %113 = arith.addf %110, %112 : vector<8x16xf32>
    %114 = vector.extract_strided_slice %107 {offsets = [0, 2], sizes = [4, 16], strides = [1, 1]} : vector<4x18xbf16> to vector<4x16xbf16>
    %cst_73 = arith.constant dense<0.000000e+00> : vector<8x16xf32>
    %115 = tpu.matmul %17, %114, %cst_73 {dimension_numbers = #tpu.dot_dimension_numbers<[1], [0], [0], [1], [0, 0, 1, 1], [], []>} : vector<8x4xbf16>, vector<4x16xbf16>, vector<8x16xf32> -> vector<8x16xf32>
    %116 = arith.addf %113, %115 : vector<8x16xf32>
    %117 = vector.broadcast %18 : vector<8x1xf32> to vector<8x16xf32>
    %118 = arith.addf %116, %117 : vector<8x16xf32>
    %cst_74 = arith.constant 0.000000e+00 : f32
    %119 = vector.broadcast %cst_74 : f32 to vector<8x16xf32>
    %120 = arith.cmpf ogt, %118, %119 : vector<8x16xf32>
    %cst_75 = arith.constant 1.000000e-01 : f32
    %121 = vector.broadcast %cst_75 : f32 to vector<8x16xf32>
    %122 = arith.mulf %121, %118 : vector<8x16xf32>
    %123 = arith.select %120, %118, %122 : vector<8x16xi1>, vector<8x16xf32>
    %c0_76 = arith.constant 0 : index
    %c0_77 = arith.constant 0 : index
    %c1_78 = arith.constant 1 : index
    %c0_79 = arith.constant 0 : index
    %124 = vector.load %arg5[%c0_76, %c0_77, %c1_78, %c0_79] : memref<1x8x8x16xf32, #tpu.memory_space<vmem>>, vector<1x8x1x16xf32>
    %125 = vector.shape_cast %124 : vector<1x8x1x16xf32> to vector<8x16xf32>
    %126 = vector.shape_cast %123 : vector<8x16xf32> to vector<1x8x1x16xf32>
    tpu.vector_store %arg5[%c0_76, %c0_77, %c1_78, %c0_79], %126 {strides = array<i32>} : memref<1x8x8x16xf32, #tpu.memory_space<vmem>>, vector<1x8x1x16xf32>,
    %c8_i32_80 = arith.constant 8 : i32
    %127 = arith.muli %arg1, %c8_i32_80 : i32
    %c2_i32_81 = arith.constant 2 : i32
    %128 = arith.addi %127, %c2_i32_81 : i32
    %c15_i32_82 = arith.constant 15 : i32
    %129 = arith.minsi %128, %c15_i32_82 : i32
    %c1_i32_83 = arith.constant 1 : i32
    %130 = arith.muli %129, %c1_i32_83 : i32
    %c0_i32_84 = arith.constant 0 : i32
    %131 = arith.addi %130, %c0_i32_84 : i32
    %c0_85 = arith.constant 0 : index
    %132 = arith.index_cast %131 : i32 to index
    %c0_86 = arith.constant 0 : index
    %c0_87 = arith.constant 0 : index
    %133 = vector.load %arg2[%c0_85, %132, %c0_86, %c0_87] : memref<1x18x4x18xbf16, #tpu.memory_space<vmem>>, vector<1x1x4x18xbf16>
    %134 = vector.shape_cast %133 : vector<1x1x4x18xbf16> to vector<4x18xbf16>
    %135 = vector.extract_strided_slice %134 {offsets = [0, 0], sizes = [4, 16], strides = [1, 1]} : vector<4x18xbf16> to vector<4x16xbf16>
    %cst_88 = arith.constant dense<0.000000e+00> : vector<8x16xf32>
    %136 = tpu.matmul %1, %135, %cst_88 {dimension_numbers = #tpu.dot_dimension_numbers<[1], [0], [0], [1], [0, 0, 1, 1], [], []>} : vector<8x4xbf16>, vector<4x16xbf16>, vector<8x16xf32> -> vector<8x16xf32>
    %137 = vector.extract_strided_slice %134 {offsets = [0, 1], sizes = [4, 16], strides = [1, 1]} : vector<4x18xbf16> to vector<4x16xbf16>
    %cst_89 = arith.constant dense<0.000000e+00> : vector<8x16xf32>
    %138 = tpu.matmul %3, %137, %cst_89 {dimension_numbers = #tpu.dot_dimension_numbers<[1], [0], [0], [1], [0, 0, 1, 1], [], []>} : vector<8x4xbf16>, vector<4x16xbf16>, vector<8x16xf32> -> vector<8x16xf32>
    %139 = arith.addf %136, %138 : vector<8x16xf32>
    %140 = vector.extract_strided_slice %134 {offsets = [0, 2], sizes = [4, 16], strides = [1, 1]} : vector<4x18xbf16> to vector<4x16xbf16>
    %cst_90 = arith.constant dense<0.000000e+00> : vector<8x16xf32>
    %141 = tpu.matmul %5, %140, %cst_90 {dimension_numbers = #tpu.dot_dimension_numbers<[1], [0], [0], [1], [0, 0, 1, 1], [], []>} : vector<8x4xbf16>, vector<4x16xbf16>, vector<8x16xf32> -> vector<8x16xf32>
    %142 = arith.addf %139, %141 : vector<8x16xf32>
    %c1_i32_91 = arith.constant 1 : i32
    %143 = arith.muli %129, %c1_i32_91 : i32
    %c1_i32_92 = arith.constant 1 : i32
    %144 = arith.addi %143, %c1_i32_92 : i32
    %c0_93 = arith.constant 0 : index
    %145 = arith.index_cast %144 : i32 to index
    %c0_94 = arith.constant 0 : index
    %c0_95 = arith.constant 0 : index
    %146 = vector.load %arg2[%c0_93, %145, %c0_94, %c0_95] : memref<1x18x4x18xbf16, #tpu.memory_space<vmem>>, vector<1x1x4x18xbf16>
    %147 = vector.shape_cast %146 : vector<1x1x4x18xbf16> to vector<4x18xbf16>
    %148 = vector.extract_strided_slice %147 {offsets = [0, 0], sizes = [4, 16], strides = [1, 1]} : vector<4x18xbf16> to vector<4x16xbf16>
    %cst_96 = arith.constant dense<0.000000e+00> : vector<8x16xf32>
    %149 = tpu.matmul %7, %148, %cst_96 {dimension_numbers = #tpu.dot_dimension_numbers<[1], [0], [0], [1], [0, 0, 1, 1], [], []>} : vector<8x4xbf16>, vector<4x16xbf16>, vector<8x16xf32> -> vector<8x16xf32>
    %150 = arith.addf %142, %149 : vector<8x16xf32>
    %151 = vector.extract_strided_slice %147 {offsets = [0, 1], sizes = [4, 16], strides = [1, 1]} : vector<4x18xbf16> to vector<4x16xbf16>
    %cst_97 = arith.constant dense<0.000000e+00> : vector<8x16xf32>
    %152 = tpu.matmul %9, %151, %cst_97 {dimension_numbers = #tpu.dot_dimension_numbers<[1], [0], [0], [1], [0, 0, 1, 1], [], []>} : vector<8x4xbf16>, vector<4x16xbf16>, vector<8x16xf32> -> vector<8x16xf32>
    %153 = arith.addf %150, %152 : vector<8x16xf32>
    %154 = vector.extract_strided_slice %147 {offsets = [0, 2], sizes = [4, 16], strides = [1, 1]} : vector<4x18xbf16> to vector<4x16xbf16>
    %cst_98 = arith.constant dense<0.000000e+00> : vector<8x16xf32>
    %155 = tpu.matmul %11, %154, %cst_98 {dimension_numbers = #tpu.dot_dimension_numbers<[1], [0], [0], [1], [0, 0, 1, 1], [], []>} : vector<8x4xbf16>, vector<4x16xbf16>, vector<8x16xf32> -> vector<8x16xf32>
    %156 = arith.addf %153, %155 : vector<8x16xf32>
    %c1_i32_99 = arith.constant 1 : i32
    %157 = arith.muli %129, %c1_i32_99 : i32
    %c2_i32_100 = arith.constant 2 : i32
    %158 = arith.addi %157, %c2_i32_100 : i32
    %c0_101 = arith.constant 0 : index
    %159 = arith.index_cast %158 : i32 to index
    %c0_102 = arith.constant 0 : index
    %c0_103 = arith.constant 0 : index
    %160 = vector.load %arg2[%c0_101, %159, %c0_102, %c0_103] : memref<1x18x4x18xbf16, #tpu.memory_space<vmem>>, vector<1x1x4x18xbf16>
    %161 = vector.shape_cast %160 : vector<1x1x4x18xbf16> to vector<4x18xbf16>
    %162 = vector.extract_strided_slice %161 {offsets = [0, 0], sizes = [4, 16], strides = [1, 1]} : vector<4x18xbf16> to vector<4x16xbf16>
    %cst_104 = arith.constant dense<0.000000e+00> : vector<8x16xf32>
    %163 = tpu.matmul %13, %162, %cst_104 {dimension_numbers = #tpu.dot_dimension_numbers<[1], [0], [0], [1], [0, 0, 1, 1], [], []>} : vector<8x4xbf16>, vector<4x16xbf16>, vector<8x16xf32> -> vector<8x16xf32>
    %164 = arith.addf %156, %163 : vector<8x16xf32>
    %165 = vector.extract_strided_slice %161 {offsets = [0, 1], sizes = [4, 16], strides = [1, 1]} : vector<4x18xbf16> to vector<4x16xbf16>
    %cst_105 = arith.constant dense<0.000000e+00> : vector<8x16xf32>
    %166 = tpu.matmul %15, %165, %cst_105 {dimension_numbers = #tpu.dot_dimension_numbers<[1], [0], [0], [1], [0, 0, 1, 1], [], []>} : vector<8x4xbf16>, vector<4x16xbf16>, vector<8x16xf32> -> vector<8x16xf32>
    %167 = arith.addf %164, %166 : vector<8x16xf32>
    %168 = vector.extract_strided_slice %161 {offsets = [0, 2], sizes = [4, 16], strides = [1, 1]} : vector<4x18xbf16> to vector<4x16xbf16>
    %cst_106 = arith.constant dense<0.000000e+00> : vector<8x16xf32>
    %169 = tpu.matmul %17, %168, %cst_106 {dimension_numbers = #tpu.dot_dimension_numbers<[1], [0], [0], [1], [0, 0, 1, 1], [], []>} : vector<8x4xbf16>, vector<4x16xbf16>, vector<8x16xf32> -> vector<8x16xf32>
    %170 = arith.addf %167, %169 : vector<8x16xf32>
    %171 = vector.broadcast %18 : vector<8x1xf32> to vector<8x16xf32>
    %172 = arith.addf %170, %171 : vector<8x16xf32>
    %cst_107 = arith.constant 0.000000e+00 : f32
    %173 = vector.broadcast %cst_107 : f32 to vector<8x16xf32>
    %174 = arith.cmpf ogt, %172, %173 : vector<8x16xf32>
    %cst_108 = arith.constant 1.000000e-01 : f32
    %175 = vector.broadcast %cst_108 : f32 to vector<8x16xf32>
    %176 = arith.mulf %175, %172 : vector<8x16xf32>
    %177 = arith.select %174, %172, %176 : vector<8x16xi1>, vector<8x16xf32>
    %c0_109 = arith.constant 0 : index
    %c0_110 = arith.constant 0 : index
    %c2_111 = arith.constant 2 : index
    %c0_112 = arith.constant 0 : index
    %178 = vector.load %arg5[%c0_109, %c0_110, %c2_111, %c0_112] : memref<1x8x8x16xf32, #tpu.memory_space<vmem>>, vector<1x8x1x16xf32>
    %179 = vector.shape_cast %178 : vector<1x8x1x16xf32> to vector<8x16xf32>
    %180 = vector.shape_cast %177 : vector<8x16xf32> to vector<1x8x1x16xf32>
    tpu.vector_store %arg5[%c0_109, %c0_110, %c2_111, %c0_112], %180 {strides = array<i32>} : memref<1x8x8x16xf32, #tpu.memory_space<vmem>>, vector<1x8x1x16xf32>,
    %c8_i32_113 = arith.constant 8 : i32
    %181 = arith.muli %arg1, %c8_i32_113 : i32
    %c3_i32 = arith.constant 3 : i32
    %182 = arith.addi %181, %c3_i32 : i32
    %c15_i32_114 = arith.constant 15 : i32
    %183 = arith.minsi %182, %c15_i32_114 : i32
    %c1_i32_115 = arith.constant 1 : i32
    %184 = arith.muli %183, %c1_i32_115 : i32
    %c0_i32_116 = arith.constant 0 : i32
    %185 = arith.addi %184, %c0_i32_116 : i32
    %c0_117 = arith.constant 0 : index
    %186 = arith.index_cast %185 : i32 to index
    %c0_118 = arith.constant 0 : index
    %c0_119 = arith.constant 0 : index
    %187 = vector.load %arg2[%c0_117, %186, %c0_118, %c0_119] : memref<1x18x4x18xbf16, #tpu.memory_space<vmem>>, vector<1x1x4x18xbf16>
    %188 = vector.shape_cast %187 : vector<1x1x4x18xbf16> to vector<4x18xbf16>
    %189 = vector.extract_strided_slice %188 {offsets = [0, 0], sizes = [4, 16], strides = [1, 1]} : vector<4x18xbf16> to vector<4x16xbf16>
    %cst_120 = arith.constant dense<0.000000e+00> : vector<8x16xf32>
    %190 = tpu.matmul %1, %189, %cst_120 {dimension_numbers = #tpu.dot_dimension_numbers<[1], [0], [0], [1], [0, 0, 1, 1], [], []>} : vector<8x4xbf16>, vector<4x16xbf16>, vector<8x16xf32> -> vector<8x16xf32>
    %191 = vector.extract_strided_slice %188 {offsets = [0, 1], sizes = [4, 16], strides = [1, 1]} : vector<4x18xbf16> to vector<4x16xbf16>
    %cst_121 = arith.constant dense<0.000000e+00> : vector<8x16xf32>
    %192 = tpu.matmul %3, %191, %cst_121 {dimension_numbers = #tpu.dot_dimension_numbers<[1], [0], [0], [1], [0, 0, 1, 1], [], []>} : vector<8x4xbf16>, vector<4x16xbf16>, vector<8x16xf32> -> vector<8x16xf32>
    %193 = arith.addf %190, %192 : vector<8x16xf32>
    %194 = vector.extract_strided_slice %188 {offsets = [0, 2], sizes = [4, 16], strides = [1, 1]} : vector<4x18xbf16> to vector<4x16xbf16>
    %cst_122 = arith.constant dense<0.000000e+00> : vector<8x16xf32>
    %195 = tpu.matmul %5, %194, %cst_122 {dimension_numbers = #tpu.dot_dimension_numbers<[1], [0], [0], [1], [0, 0, 1, 1], [], []>} : vector<8x4xbf16>, vector<4x16xbf16>, vector<8x16xf32> -> vector<8x16xf32>
    %196 = arith.addf %193, %195 : vector<8x16xf32>
    %c1_i32_123 = arith.constant 1 : i32
    %197 = arith.muli %183, %c1_i32_123 : i32
    %c1_i32_124 = arith.constant 1 : i32
    %198 = arith.addi %197, %c1_i32_124 : i32
    %c0_125 = arith.constant 0 : index
    %199 = arith.index_cast %198 : i32 to index
    %c0_126 = arith.constant 0 : index
    %c0_127 = arith.constant 0 : index
    %200 = vector.load %arg2[%c0_125, %199, %c0_126, %c0_127] : memref<1x18x4x18xbf16, #tpu.memory_space<vmem>>, vector<1x1x4x18xbf16>
    %201 = vector.shape_cast %200 : vector<1x1x4x18xbf16> to vector<4x18xbf16>
    %202 = vector.extract_strided_slice %201 {offsets = [0, 0], sizes = [4, 16], strides = [1, 1]} : vector<4x18xbf16> to vector<4x16xbf16>
    %cst_128 = arith.constant dense<0.000000e+00> : vector<8x16xf32>
    %203 = tpu.matmul %7, %202, %cst_128 {dimension_numbers = #tpu.dot_dimension_numbers<[1], [0], [0], [1], [0, 0, 1, 1], [], []>} : vector<8x4xbf16>, vector<4x16xbf16>, vector<8x16xf32> -> vector<8x16xf32>
    %204 = arith.addf %196, %203 : vector<8x16xf32>
    %205 = vector.extract_strided_slice %201 {offsets = [0, 1], sizes = [4, 16], strides = [1, 1]} : vector<4x18xbf16> to vector<4x16xbf16>
    %cst_129 = arith.constant dense<0.000000e+00> : vector<8x16xf32>
    %206 = tpu.matmul %9, %205, %cst_129 {dimension_numbers = #tpu.dot_dimension_numbers<[1], [0], [0], [1], [0, 0, 1, 1], [], []>} : vector<8x4xbf16>, vector<4x16xbf16>, vector<8x16xf32> -> vector<8x16xf32>
    %207 = arith.addf %204, %206 : vector<8x16xf32>
    %208 = vector.extract_strided_slice %201 {offsets = [0, 2], sizes = [4, 16], strides = [1, 1]} : vector<4x18xbf16> to vector<4x16xbf16>
    %cst_130 = arith.constant dense<0.000000e+00> : vector<8x16xf32>
    %209 = tpu.matmul %11, %208, %cst_130 {dimension_numbers = #tpu.dot_dimension_numbers<[1], [0], [0], [1], [0, 0, 1, 1], [], []>} : vector<8x4xbf16>, vector<4x16xbf16>, vector<8x16xf32> -> vector<8x16xf32>
    %210 = arith.addf %207, %209 : vector<8x16xf32>
    %c1_i32_131 = arith.constant 1 : i32
    %211 = arith.muli %183, %c1_i32_131 : i32
    %c2_i32_132 = arith.constant 2 : i32
    %212 = arith.addi %211, %c2_i32_132 : i32
    %c0_133 = arith.constant 0 : index
    %213 = arith.index_cast %212 : i32 to index
    %c0_134 = arith.constant 0 : index
    %c0_135 = arith.constant 0 : index
    %214 = vector.load %arg2[%c0_133, %213, %c0_134, %c0_135] : memref<1x18x4x18xbf16, #tpu.memory_space<vmem>>, vector<1x1x4x18xbf16>
    %215 = vector.shape_cast %214 : vector<1x1x4x18xbf16> to vector<4x18xbf16>
    %216 = vector.extract_strided_slice %215 {offsets = [0, 0], sizes = [4, 16], strides = [1, 1]} : vector<4x18xbf16> to vector<4x16xbf16>
    %cst_136 = arith.constant dense<0.000000e+00> : vector<8x16xf32>
    %217 = tpu.matmul %13, %216, %cst_136 {dimension_numbers = #tpu.dot_dimension_numbers<[1], [0], [0], [1], [0, 0, 1, 1], [], []>} : vector<8x4xbf16>, vector<4x16xbf16>, vector<8x16xf32> -> vector<8x16xf32>
    %218 = arith.addf %210, %217 : vector<8x16xf32>
    %219 = vector.extract_strided_slice %215 {offsets = [0, 1], sizes = [4, 16], strides = [1, 1]} : vector<4x18xbf16> to vector<4x16xbf16>
    %cst_137 = arith.constant dense<0.000000e+00> : vector<8x16xf32>
    %220 = tpu.matmul %15, %219, %cst_137 {dimension_numbers = #tpu.dot_dimension_numbers<[1], [0], [0], [1], [0, 0, 1, 1], [], []>} : vector<8x4xbf16>, vector<4x16xbf16>, vector<8x16xf32> -> vector<8x16xf32>
    %221 = arith.addf %218, %220 : vector<8x16xf32>
    %222 = vector.extract_strided_slice %215 {offsets = [0, 2], sizes = [4, 16], strides = [1, 1]} : vector<4x18xbf16> to vector<4x16xbf16>
    %cst_138 = arith.constant dense<0.000000e+00> : vector<8x16xf32>
    %223 = tpu.matmul %17, %222, %cst_138 {dimension_numbers = #tpu.dot_dimension_numbers<[1], [0], [0], [1], [0, 0, 1, 1], [], []>} : vector<8x4xbf16>, vector<4x16xbf16>, vector<8x16xf32> -> vector<8x16xf32>
    %224 = arith.addf %221, %223 : vector<8x16xf32>
    %225 = vector.broadcast %18 : vector<8x1xf32> to vector<8x16xf32>
    %226 = arith.addf %224, %225 : vector<8x16xf32>
    %cst_139 = arith.constant 0.000000e+00 : f32
    %227 = vector.broadcast %cst_139 : f32 to vector<8x16xf32>
    %228 = arith.cmpf ogt, %226, %227 : vector<8x16xf32>
    %cst_140 = arith.constant 1.000000e-01 : f32
    %229 = vector.broadcast %cst_140 : f32 to vector<8x16xf32>
    %230 = arith.mulf %229, %226 : vector<8x16xf32>
    %231 = arith.select %228, %226, %230 : vector<8x16xi1>, vector<8x16xf32>
    %c0_141 = arith.constant 0 : index
    %c0_142 = arith.constant 0 : index
    %c3_143 = arith.constant 3 : index
    %c0_144 = arith.constant 0 : index
    %232 = vector.load %arg5[%c0_141, %c0_142, %c3_143, %c0_144] : memref<1x8x8x16xf32, #tpu.memory_space<vmem>>, vector<1x8x1x16xf32>
    %233 = vector.shape_cast %232 : vector<1x8x1x16xf32> to vector<8x16xf32>
    %234 = vector.shape_cast %231 : vector<8x16xf32> to vector<1x8x1x16xf32>
    tpu.vector_store %arg5[%c0_141, %c0_142, %c3_143, %c0_144], %234 {strides = array<i32>} : memref<1x8x8x16xf32, #tpu.memory_space<vmem>>, vector<1x8x1x16xf32>,
    %c8_i32_145 = arith.constant 8 : i32
    %235 = arith.muli %arg1, %c8_i32_145 : i32
    %c4_i32 = arith.constant 4 : i32
    %236 = arith.addi %235, %c4_i32 : i32
    %c15_i32_146 = arith.constant 15 : i32
    %237 = arith.minsi %236, %c15_i32_146 : i32
    %c1_i32_147 = arith.constant 1 : i32
    %238 = arith.muli %237, %c1_i32_147 : i32
    %c0_i32_148 = arith.constant 0 : i32
    %239 = arith.addi %238, %c0_i32_148 : i32
    %c0_149 = arith.constant 0 : index
    %240 = arith.index_cast %239 : i32 to index
    %c0_150 = arith.constant 0 : index
    %c0_151 = arith.constant 0 : index
    %241 = vector.load %arg2[%c0_149, %240, %c0_150, %c0_151] : memref<1x18x4x18xbf16, #tpu.memory_space<vmem>>, vector<1x1x4x18xbf16>
    %242 = vector.shape_cast %241 : vector<1x1x4x18xbf16> to vector<4x18xbf16>
    %243 = vector.extract_strided_slice %242 {offsets = [0, 0], sizes = [4, 16], strides = [1, 1]} : vector<4x18xbf16> to vector<4x16xbf16>
    %cst_152 = arith.constant dense<0.000000e+00> : vector<8x16xf32>
    %244 = tpu.matmul %1, %243, %cst_152 {dimension_numbers = #tpu.dot_dimension_numbers<[1], [0], [0], [1], [0, 0, 1, 1], [], []>} : vector<8x4xbf16>, vector<4x16xbf16>, vector<8x16xf32> -> vector<8x16xf32>
    %245 = vector.extract_strided_slice %242 {offsets = [0, 1], sizes = [4, 16], strides = [1, 1]} : vector<4x18xbf16> to vector<4x16xbf16>
    %cst_153 = arith.constant dense<0.000000e+00> : vector<8x16xf32>
    %246 = tpu.matmul %3, %245, %cst_153 {dimension_numbers = #tpu.dot_dimension_numbers<[1], [0], [0], [1], [0, 0, 1, 1], [], []>} : vector<8x4xbf16>, vector<4x16xbf16>, vector<8x16xf32> -> vector<8x16xf32>
    %247 = arith.addf %244, %246 : vector<8x16xf32>
    %248 = vector.extract_strided_slice %242 {offsets = [0, 2], sizes = [4, 16], strides = [1, 1]} : vector<4x18xbf16> to vector<4x16xbf16>
    %cst_154 = arith.constant dense<0.000000e+00> : vector<8x16xf32>
    %249 = tpu.matmul %5, %248, %cst_154 {dimension_numbers = #tpu.dot_dimension_numbers<[1], [0], [0], [1], [0, 0, 1, 1], [], []>} : vector<8x4xbf16>, vector<4x16xbf16>, vector<8x16xf32> -> vector<8x16xf32>
    %250 = arith.addf %247, %249 : vector<8x16xf32>
    %c1_i32_155 = arith.constant 1 : i32
    %251 = arith.muli %237, %c1_i32_155 : i32
    %c1_i32_156 = arith.constant 1 : i32
    %252 = arith.addi %251, %c1_i32_156 : i32
    %c0_157 = arith.constant 0 : index
    %253 = arith.index_cast %252 : i32 to index
    %c0_158 = arith.constant 0 : index
    %c0_159 = arith.constant 0 : index
    %254 = vector.load %arg2[%c0_157, %253, %c0_158, %c0_159] : memref<1x18x4x18xbf16, #tpu.memory_space<vmem>>, vector<1x1x4x18xbf16>
    %255 = vector.shape_cast %254 : vector<1x1x4x18xbf16> to vector<4x18xbf16>
    %256 = vector.extract_strided_slice %255 {offsets = [0, 0], sizes = [4, 16], strides = [1, 1]} : vector<4x18xbf16> to vector<4x16xbf16>
    %cst_160 = arith.constant dense<0.000000e+00> : vector<8x16xf32>
    %257 = tpu.matmul %7, %256, %cst_160 {dimension_numbers = #tpu.dot_dimension_numbers<[1], [0], [0], [1], [0, 0, 1, 1], [], []>} : vector<8x4xbf16>, vector<4x16xbf16>, vector<8x16xf32> -> vector<8x16xf32>
    %258 = arith.addf %250, %257 : vector<8x16xf32>
    %259 = vector.extract_strided_slice %255 {offsets = [0, 1], sizes = [4, 16], strides = [1, 1]} : vector<4x18xbf16> to vector<4x16xbf16>
    %cst_161 = arith.constant dense<0.000000e+00> : vector<8x16xf32>
    %260 = tpu.matmul %9, %259, %cst_161 {dimension_numbers = #tpu.dot_dimension_numbers<[1], [0], [0], [1], [0, 0, 1, 1], [], []>} : vector<8x4xbf16>, vector<4x16xbf16>, vector<8x16xf32> -> vector<8x16xf32>
    %261 = arith.addf %258, %260 : vector<8x16xf32>
    %262 = vector.extract_strided_slice %255 {offsets = [0, 2], sizes = [4, 16], strides = [1, 1]} : vector<4x18xbf16> to vector<4x16xbf16>
    %cst_162 = arith.constant dense<0.000000e+00> : vector<8x16xf32>
    %263 = tpu.matmul %11, %262, %cst_162 {dimension_numbers = #tpu.dot_dimension_numbers<[1], [0], [0], [1], [0, 0, 1, 1], [], []>} : vector<8x4xbf16>, vector<4x16xbf16>, vector<8x16xf32> -> vector<8x16xf32>
    %264 = arith.addf %261, %263 : vector<8x16xf32>
    %c1_i32_163 = arith.constant 1 : i32
    %265 = arith.muli %237, %c1_i32_163 : i32
    %c2_i32_164 = arith.constant 2 : i32
    %266 = arith.addi %265, %c2_i32_164 : i32
    %c0_165 = arith.constant 0 : index
    %267 = arith.index_cast %266 : i32 to index
    %c0_166 = arith.constant 0 : index
    %c0_167 = arith.constant 0 : index
    %268 = vector.load %arg2[%c0_165, %267, %c0_166, %c0_167] : memref<1x18x4x18xbf16, #tpu.memory_space<vmem>>, vector<1x1x4x18xbf16>
    %269 = vector.shape_cast %268 : vector<1x1x4x18xbf16> to vector<4x18xbf16>
    %270 = vector.extract_strided_slice %269 {offsets = [0, 0], sizes = [4, 16], strides = [1, 1]} : vector<4x18xbf16> to vector<4x16xbf16>
    %cst_168 = arith.constant dense<0.000000e+00> : vector<8x16xf32>
    %271 = tpu.matmul %13, %270, %cst_168 {dimension_numbers = #tpu.dot_dimension_numbers<[1], [0], [0], [1], [0, 0, 1, 1], [], []>} : vector<8x4xbf16>, vector<4x16xbf16>, vector<8x16xf32> -> vector<8x16xf32>
    %272 = arith.addf %264, %271 : vector<8x16xf32>
    %273 = vector.extract_strided_slice %269 {offsets = [0, 1], sizes = [4, 16], strides = [1, 1]} : vector<4x18xbf16> to vector<4x16xbf16>
    %cst_169 = arith.constant dense<0.000000e+00> : vector<8x16xf32>
    %274 = tpu.matmul %15, %273, %cst_169 {dimension_numbers = #tpu.dot_dimension_numbers<[1], [0], [0], [1], [0, 0, 1, 1], [], []>} : vector<8x4xbf16>, vector<4x16xbf16>, vector<8x16xf32> -> vector<8x16xf32>
    %275 = arith.addf %272, %274 : vector<8x16xf32>
    %276 = vector.extract_strided_slice %269 {offsets = [0, 2], sizes = [4, 16], strides = [1, 1]} : vector<4x18xbf16> to vector<4x16xbf16>
    %cst_170 = arith.constant dense<0.000000e+00> : vector<8x16xf32>
    %277 = tpu.matmul %17, %276, %cst_170 {dimension_numbers = #tpu.dot_dimension_numbers<[1], [0], [0], [1], [0, 0, 1, 1], [], []>} : vector<8x4xbf16>, vector<4x16xbf16>, vector<8x16xf32> -> vector<8x16xf32>
    %278 = arith.addf %275, %277 : vector<8x16xf32>
    %279 = vector.broadcast %18 : vector<8x1xf32> to vector<8x16xf32>
    %280 = arith.addf %278, %279 : vector<8x16xf32>
    %cst_171 = arith.constant 0.000000e+00 : f32
    %281 = vector.broadcast %cst_171 : f32 to vector<8x16xf32>
    %282 = arith.cmpf ogt, %280, %281 : vector<8x16xf32>
    %cst_172 = arith.constant 1.000000e-01 : f32
    %283 = vector.broadcast %cst_172 : f32 to vector<8x16xf32>
    %284 = arith.mulf %283, %280 : vector<8x16xf32>
    %285 = arith.select %282, %280, %284 : vector<8x16xi1>, vector<8x16xf32>
    %c0_173 = arith.constant 0 : index
    %c0_174 = arith.constant 0 : index
    %c4_175 = arith.constant 4 : index
    %c0_176 = arith.constant 0 : index
    %286 = vector.load %arg5[%c0_173, %c0_174, %c4_175, %c0_176] : memref<1x8x8x16xf32, #tpu.memory_space<vmem>>, vector<1x8x1x16xf32>
    %287 = vector.shape_cast %286 : vector<1x8x1x16xf32> to vector<8x16xf32>
    %288 = vector.shape_cast %285 : vector<8x16xf32> to vector<1x8x1x16xf32>
    tpu.vector_store %arg5[%c0_173, %c0_174, %c4_175, %c0_176], %288 {strides = array<i32>} : memref<1x8x8x16xf32, #tpu.memory_space<vmem>>, vector<1x8x1x16xf32>,
    %c8_i32_177 = arith.constant 8 : i32
    %289 = arith.muli %arg1, %c8_i32_177 : i32
    %c5_i32 = arith.constant 5 : i32
    %290 = arith.addi %289, %c5_i32 : i32
    %c15_i32_178 = arith.constant 15 : i32
    %291 = arith.minsi %290, %c15_i32_178 : i32
    %c1_i32_179 = arith.constant 1 : i32
    %292 = arith.muli %291, %c1_i32_179 : i32
    %c0_i32_180 = arith.constant 0 : i32
    %293 = arith.addi %292, %c0_i32_180 : i32
    %c0_181 = arith.constant 0 : index
    %294 = arith.index_cast %293 : i32 to index
    %c0_182 = arith.constant 0 : index
    %c0_183 = arith.constant 0 : index
    %295 = vector.load %arg2[%c0_181, %294, %c0_182, %c0_183] : memref<1x18x4x18xbf16, #tpu.memory_space<vmem>>, vector<1x1x4x18xbf16>
    %296 = vector.shape_cast %295 : vector<1x1x4x18xbf16> to vector<4x18xbf16>
    %297 = vector.extract_strided_slice %296 {offsets = [0, 0], sizes = [4, 16], strides = [1, 1]} : vector<4x18xbf16> to vector<4x16xbf16>
    %cst_184 = arith.constant dense<0.000000e+00> : vector<8x16xf32>
    %298 = tpu.matmul %1, %297, %cst_184 {dimension_numbers = #tpu.dot_dimension_numbers<[1], [0], [0], [1], [0, 0, 1, 1], [], []>} : vector<8x4xbf16>, vector<4x16xbf16>, vector<8x16xf32> -> vector<8x16xf32>
    %299 = vector.extract_strided_slice %296 {offsets = [0, 1], sizes = [4, 16], strides = [1, 1]} : vector<4x18xbf16> to vector<4x16xbf16>
    %cst_185 = arith.constant dense<0.000000e+00> : vector<8x16xf32>
    %300 = tpu.matmul %3, %299, %cst_185 {dimension_numbers = #tpu.dot_dimension_numbers<[1], [0], [0], [1], [0, 0, 1, 1], [], []>} : vector<8x4xbf16>, vector<4x16xbf16>, vector<8x16xf32> -> vector<8x16xf32>
    %301 = arith.addf %298, %300 : vector<8x16xf32>
    %302 = vector.extract_strided_slice %296 {offsets = [0, 2], sizes = [4, 16], strides = [1, 1]} : vector<4x18xbf16> to vector<4x16xbf16>
    %cst_186 = arith.constant dense<0.000000e+00> : vector<8x16xf32>
    %303 = tpu.matmul %5, %302, %cst_186 {dimension_numbers = #tpu.dot_dimension_numbers<[1], [0], [0], [1], [0, 0, 1, 1], [], []>} : vector<8x4xbf16>, vector<4x16xbf16>, vector<8x16xf32> -> vector<8x16xf32>
    %304 = arith.addf %301, %303 : vector<8x16xf32>
    %c1_i32_187 = arith.constant 1 : i32
    %305 = arith.muli %291, %c1_i32_187 : i32
    %c1_i32_188 = arith.constant 1 : i32
    %306 = arith.addi %305, %c1_i32_188 : i32
    %c0_189 = arith.constant 0 : index
    %307 = arith.index_cast %306 : i32 to index
    %c0_190 = arith.constant 0 : index
    %c0_191 = arith.constant 0 : index
    %308 = vector.load %arg2[%c0_189, %307, %c0_190, %c0_191] : memref<1x18x4x18xbf16, #tpu.memory_space<vmem>>, vector<1x1x4x18xbf16>
    %309 = vector.shape_cast %308 : vector<1x1x4x18xbf16> to vector<4x18xbf16>
    %310 = vector.extract_strided_slice %309 {offsets = [0, 0], sizes = [4, 16], strides = [1, 1]} : vector<4x18xbf16> to vector<4x16xbf16>
    %cst_192 = arith.constant dense<0.000000e+00> : vector<8x16xf32>
    %311 = tpu.matmul %7, %310, %cst_192 {dimension_numbers = #tpu.dot_dimension_numbers<[1], [0], [0], [1], [0, 0, 1, 1], [], []>} : vector<8x4xbf16>, vector<4x16xbf16>, vector<8x16xf32> -> vector<8x16xf32>
    %312 = arith.addf %304, %311 : vector<8x16xf32>
    %313 = vector.extract_strided_slice %309 {offsets = [0, 1], sizes = [4, 16], strides = [1, 1]} : vector<4x18xbf16> to vector<4x16xbf16>
    %cst_193 = arith.constant dense<0.000000e+00> : vector<8x16xf32>
    %314 = tpu.matmul %9, %313, %cst_193 {dimension_numbers = #tpu.dot_dimension_numbers<[1], [0], [0], [1], [0, 0, 1, 1], [], []>} : vector<8x4xbf16>, vector<4x16xbf16>, vector<8x16xf32> -> vector<8x16xf32>
    %315 = arith.addf %312, %314 : vector<8x16xf32>
    %316 = vector.extract_strided_slice %309 {offsets = [0, 2], sizes = [4, 16], strides = [1, 1]} : vector<4x18xbf16> to vector<4x16xbf16>
    %cst_194 = arith.constant dense<0.000000e+00> : vector<8x16xf32>
    %317 = tpu.matmul %11, %316, %cst_194 {dimension_numbers = #tpu.dot_dimension_numbers<[1], [0], [0], [1], [0, 0, 1, 1], [], []>} : vector<8x4xbf16>, vector<4x16xbf16>, vector<8x16xf32> -> vector<8x16xf32>
    %318 = arith.addf %315, %317 : vector<8x16xf32>
    %c1_i32_195 = arith.constant 1 : i32
    %319 = arith.muli %291, %c1_i32_195 : i32
    %c2_i32_196 = arith.constant 2 : i32
    %320 = arith.addi %319, %c2_i32_196 : i32
    %c0_197 = arith.constant 0 : index
    %321 = arith.index_cast %320 : i32 to index
    %c0_198 = arith.constant 0 : index
    %c0_199 = arith.constant 0 : index
    %322 = vector.load %arg2[%c0_197, %321, %c0_198, %c0_199] : memref<1x18x4x18xbf16, #tpu.memory_space<vmem>>, vector<1x1x4x18xbf16>
    %323 = vector.shape_cast %322 : vector<1x1x4x18xbf16> to vector<4x18xbf16>
    %324 = vector.extract_strided_slice %323 {offsets = [0, 0], sizes = [4, 16], strides = [1, 1]} : vector<4x18xbf16> to vector<4x16xbf16>
    %cst_200 = arith.constant dense<0.000000e+00> : vector<8x16xf32>
    %325 = tpu.matmul %13, %324, %cst_200 {dimension_numbers = #tpu.dot_dimension_numbers<[1], [0], [0], [1], [0, 0, 1, 1], [], []>} : vector<8x4xbf16>, vector<4x16xbf16>, vector<8x16xf32> -> vector<8x16xf32>
    %326 = arith.addf %318, %325 : vector<8x16xf32>
    %327 = vector.extract_strided_slice %323 {offsets = [0, 1], sizes = [4, 16], strides = [1, 1]} : vector<4x18xbf16> to vector<4x16xbf16>
    %cst_201 = arith.constant dense<0.000000e+00> : vector<8x16xf32>
    %328 = tpu.matmul %15, %327, %cst_201 {dimension_numbers = #tpu.dot_dimension_numbers<[1], [0], [0], [1], [0, 0, 1, 1], [], []>} : vector<8x4xbf16>, vector<4x16xbf16>, vector<8x16xf32> -> vector<8x16xf32>
    %329 = arith.addf %326, %328 : vector<8x16xf32>
    %330 = vector.extract_strided_slice %323 {offsets = [0, 2], sizes = [4, 16], strides = [1, 1]} : vector<4x18xbf16> to vector<4x16xbf16>
    %cst_202 = arith.constant dense<0.000000e+00> : vector<8x16xf32>
    %331 = tpu.matmul %17, %330, %cst_202 {dimension_numbers = #tpu.dot_dimension_numbers<[1], [0], [0], [1], [0, 0, 1, 1], [], []>} : vector<8x4xbf16>, vector<4x16xbf16>, vector<8x16xf32> -> vector<8x16xf32>
    %332 = arith.addf %329, %331 : vector<8x16xf32>
    %333 = vector.broadcast %18 : vector<8x1xf32> to vector<8x16xf32>
    %334 = arith.addf %332, %333 : vector<8x16xf32>
    %cst_203 = arith.constant 0.000000e+00 : f32
    %335 = vector.broadcast %cst_203 : f32 to vector<8x16xf32>
    %336 = arith.cmpf ogt, %334, %335 : vector<8x16xf32>
    %cst_204 = arith.constant 1.000000e-01 : f32
    %337 = vector.broadcast %cst_204 : f32 to vector<8x16xf32>
    %338 = arith.mulf %337, %334 : vector<8x16xf32>
    %339 = arith.select %336, %334, %338 : vector<8x16xi1>, vector<8x16xf32>
    %c0_205 = arith.constant 0 : index
    %c0_206 = arith.constant 0 : index
    %c5_207 = arith.constant 5 : index
    %c0_208 = arith.constant 0 : index
    %340 = vector.load %arg5[%c0_205, %c0_206, %c5_207, %c0_208] : memref<1x8x8x16xf32, #tpu.memory_space<vmem>>, vector<1x8x1x16xf32>
    %341 = vector.shape_cast %340 : vector<1x8x1x16xf32> to vector<8x16xf32>
    %342 = vector.shape_cast %339 : vector<8x16xf32> to vector<1x8x1x16xf32>
    tpu.vector_store %arg5[%c0_205, %c0_206, %c5_207, %c0_208], %342 {strides = array<i32>} : memref<1x8x8x16xf32, #tpu.memory_space<vmem>>, vector<1x8x1x16xf32>,
    %c8_i32_209 = arith.constant 8 : i32
    %343 = arith.muli %arg1, %c8_i32_209 : i32
    %c6_i32 = arith.constant 6 : i32
    %344 = arith.addi %343, %c6_i32 : i32
    %c15_i32_210 = arith.constant 15 : i32
    %345 = arith.minsi %344, %c15_i32_210 : i32
    %c1_i32_211 = arith.constant 1 : i32
    %346 = arith.muli %345, %c1_i32_211 : i32
    %c0_i32_212 = arith.constant 0 : i32
    %347 = arith.addi %346, %c0_i32_212 : i32
    %c0_213 = arith.constant 0 : index
    %348 = arith.index_cast %347 : i32 to index
    %c0_214 = arith.constant 0 : index
    %c0_215 = arith.constant 0 : index
    %349 = vector.load %arg2[%c0_213, %348, %c0_214, %c0_215] : memref<1x18x4x18xbf16, #tpu.memory_space<vmem>>, vector<1x1x4x18xbf16>
    %350 = vector.shape_cast %349 : vector<1x1x4x18xbf16> to vector<4x18xbf16>
    %351 = vector.extract_strided_slice %350 {offsets = [0, 0], sizes = [4, 16], strides = [1, 1]} : vector<4x18xbf16> to vector<4x16xbf16>
    %cst_216 = arith.constant dense<0.000000e+00> : vector<8x16xf32>
    %352 = tpu.matmul %1, %351, %cst_216 {dimension_numbers = #tpu.dot_dimension_numbers<[1], [0], [0], [1], [0, 0, 1, 1], [], []>} : vector<8x4xbf16>, vector<4x16xbf16>, vector<8x16xf32> -> vector<8x16xf32>
    %353 = vector.extract_strided_slice %350 {offsets = [0, 1], sizes = [4, 16], strides = [1, 1]} : vector<4x18xbf16> to vector<4x16xbf16>
    %cst_217 = arith.constant dense<0.000000e+00> : vector<8x16xf32>
    %354 = tpu.matmul %3, %353, %cst_217 {dimension_numbers = #tpu.dot_dimension_numbers<[1], [0], [0], [1], [0, 0, 1, 1], [], []>} : vector<8x4xbf16>, vector<4x16xbf16>, vector<8x16xf32> -> vector<8x16xf32>
    %355 = arith.addf %352, %354 : vector<8x16xf32>
    %356 = vector.extract_strided_slice %350 {offsets = [0, 2], sizes = [4, 16], strides = [1, 1]} : vector<4x18xbf16> to vector<4x16xbf16>
    %cst_218 = arith.constant dense<0.000000e+00> : vector<8x16xf32>
    %357 = tpu.matmul %5, %356, %cst_218 {dimension_numbers = #tpu.dot_dimension_numbers<[1], [0], [0], [1], [0, 0, 1, 1], [], []>} : vector<8x4xbf16>, vector<4x16xbf16>, vector<8x16xf32> -> vector<8x16xf32>
    %358 = arith.addf %355, %357 : vector<8x16xf32>
    %c1_i32_219 = arith.constant 1 : i32
    %359 = arith.muli %345, %c1_i32_219 : i32
    %c1_i32_220 = arith.constant 1 : i32
    %360 = arith.addi %359, %c1_i32_220 : i32
    %c0_221 = arith.constant 0 : index
    %361 = arith.index_cast %360 : i32 to index
    %c0_222 = arith.constant 0 : index
    %c0_223 = arith.constant 0 : index
    %362 = vector.load %arg2[%c0_221, %361, %c0_222, %c0_223] : memref<1x18x4x18xbf16, #tpu.memory_space<vmem>>, vector<1x1x4x18xbf16>
    %363 = vector.shape_cast %362 : vector<1x1x4x18xbf16> to vector<4x18xbf16>
    %364 = vector.extract_strided_slice %363 {offsets = [0, 0], sizes = [4, 16], strides = [1, 1]} : vector<4x18xbf16> to vector<4x16xbf16>
    %cst_224 = arith.constant dense<0.000000e+00> : vector<8x16xf32>
    %365 = tpu.matmul %7, %364, %cst_224 {dimension_numbers = #tpu.dot_dimension_numbers<[1], [0], [0], [1], [0, 0, 1, 1], [], []>} : vector<8x4xbf16>, vector<4x16xbf16>, vector<8x16xf32> -> vector<8x16xf32>
    %366 = arith.addf %358, %365 : vector<8x16xf32>
    %367 = vector.extract_strided_slice %363 {offsets = [0, 1], sizes = [4, 16], strides = [1, 1]} : vector<4x18xbf16> to vector<4x16xbf16>
    %cst_225 = arith.constant dense<0.000000e+00> : vector<8x16xf32>
    %368 = tpu.matmul %9, %367, %cst_225 {dimension_numbers = #tpu.dot_dimension_numbers<[1], [0], [0], [1], [0, 0, 1, 1], [], []>} : vector<8x4xbf16>, vector<4x16xbf16>, vector<8x16xf32> -> vector<8x16xf32>
    %369 = arith.addf %366, %368 : vector<8x16xf32>
    %370 = vector.extract_strided_slice %363 {offsets = [0, 2], sizes = [4, 16], strides = [1, 1]} : vector<4x18xbf16> to vector<4x16xbf16>
    %cst_226 = arith.constant dense<0.000000e+00> : vector<8x16xf32>
    %371 = tpu.matmul %11, %370, %cst_226 {dimension_numbers = #tpu.dot_dimension_numbers<[1], [0], [0], [1], [0, 0, 1, 1], [], []>} : vector<8x4xbf16>, vector<4x16xbf16>, vector<8x16xf32> -> vector<8x16xf32>
    %372 = arith.addf %369, %371 : vector<8x16xf32>
    %c1_i32_227 = arith.constant 1 : i32
    %373 = arith.muli %345, %c1_i32_227 : i32
    %c2_i32_228 = arith.constant 2 : i32
    %374 = arith.addi %373, %c2_i32_228 : i32
    %c0_229 = arith.constant 0 : index
    %375 = arith.index_cast %374 : i32 to index
    %c0_230 = arith.constant 0 : index
    %c0_231 = arith.constant 0 : index
    %376 = vector.load %arg2[%c0_229, %375, %c0_230, %c0_231] : memref<1x18x4x18xbf16, #tpu.memory_space<vmem>>, vector<1x1x4x18xbf16>
    %377 = vector.shape_cast %376 : vector<1x1x4x18xbf16> to vector<4x18xbf16>
    %378 = vector.extract_strided_slice %377 {offsets = [0, 0], sizes = [4, 16], strides = [1, 1]} : vector<4x18xbf16> to vector<4x16xbf16>
    %cst_232 = arith.constant dense<0.000000e+00> : vector<8x16xf32>
    %379 = tpu.matmul %13, %378, %cst_232 {dimension_numbers = #tpu.dot_dimension_numbers<[1], [0], [0], [1], [0, 0, 1, 1], [], []>} : vector<8x4xbf16>, vector<4x16xbf16>, vector<8x16xf32> -> vector<8x16xf32>
    %380 = arith.addf %372, %379 : vector<8x16xf32>
    %381 = vector.extract_strided_slice %377 {offsets = [0, 1], sizes = [4, 16], strides = [1, 1]} : vector<4x18xbf16> to vector<4x16xbf16>
    %cst_233 = arith.constant dense<0.000000e+00> : vector<8x16xf32>
    %382 = tpu.matmul %15, %381, %cst_233 {dimension_numbers = #tpu.dot_dimension_numbers<[1], [0], [0], [1], [0, 0, 1, 1], [], []>} : vector<8x4xbf16>, vector<4x16xbf16>, vector<8x16xf32> -> vector<8x16xf32>
    %383 = arith.addf %380, %382 : vector<8x16xf32>
    %384 = vector.extract_strided_slice %377 {offsets = [0, 2], sizes = [4, 16], strides = [1, 1]} : vector<4x18xbf16> to vector<4x16xbf16>
    %cst_234 = arith.constant dense<0.000000e+00> : vector<8x16xf32>
    %385 = tpu.matmul %17, %384, %cst_234 {dimension_numbers = #tpu.dot_dimension_numbers<[1], [0], [0], [1], [0, 0, 1, 1], [], []>} : vector<8x4xbf16>, vector<4x16xbf16>, vector<8x16xf32> -> vector<8x16xf32>
    %386 = arith.addf %383, %385 : vector<8x16xf32>
    %387 = vector.broadcast %18 : vector<8x1xf32> to vector<8x16xf32>
    %388 = arith.addf %386, %387 : vector<8x16xf32>
    %cst_235 = arith.constant 0.000000e+00 : f32
    %389 = vector.broadcast %cst_235 : f32 to vector<8x16xf32>
    %390 = arith.cmpf ogt, %388, %389 : vector<8x16xf32>
    %cst_236 = arith.constant 1.000000e-01 : f32
    %391 = vector.broadcast %cst_236 : f32 to vector<8x16xf32>
    %392 = arith.mulf %391, %388 : vector<8x16xf32>
    %393 = arith.select %390, %388, %392 : vector<8x16xi1>, vector<8x16xf32>
    %c0_237 = arith.constant 0 : index
    %c0_238 = arith.constant 0 : index
    %c6_239 = arith.constant 6 : index
    %c0_240 = arith.constant 0 : index
    %394 = vector.load %arg5[%c0_237, %c0_238, %c6_239, %c0_240] : memref<1x8x8x16xf32, #tpu.memory_space<vmem>>, vector<1x8x1x16xf32>
    %395 = vector.shape_cast %394 : vector<1x8x1x16xf32> to vector<8x16xf32>
    %396 = vector.shape_cast %393 : vector<8x16xf32> to vector<1x8x1x16xf32>
    tpu.vector_store %arg5[%c0_237, %c0_238, %c6_239, %c0_240], %396 {strides = array<i32>} : memref<1x8x8x16xf32, #tpu.memory_space<vmem>>, vector<1x8x1x16xf32>,
    %c8_i32_241 = arith.constant 8 : i32
    %397 = arith.muli %arg1, %c8_i32_241 : i32
    %c7_i32 = arith.constant 7 : i32
    %398 = arith.addi %397, %c7_i32 : i32
    %c15_i32_242 = arith.constant 15 : i32
    %399 = arith.minsi %398, %c15_i32_242 : i32
    %c1_i32_243 = arith.constant 1 : i32
    %400 = arith.muli %399, %c1_i32_243 : i32
    %c0_i32_244 = arith.constant 0 : i32
    %401 = arith.addi %400, %c0_i32_244 : i32
    %c0_245 = arith.constant 0 : index
    %402 = arith.index_cast %401 : i32 to index
    %c0_246 = arith.constant 0 : index
    %c0_247 = arith.constant 0 : index
    %403 = vector.load %arg2[%c0_245, %402, %c0_246, %c0_247] : memref<1x18x4x18xbf16, #tpu.memory_space<vmem>>, vector<1x1x4x18xbf16>
    %404 = vector.shape_cast %403 : vector<1x1x4x18xbf16> to vector<4x18xbf16>
    %405 = vector.extract_strided_slice %404 {offsets = [0, 0], sizes = [4, 16], strides = [1, 1]} : vector<4x18xbf16> to vector<4x16xbf16>
    %cst_248 = arith.constant dense<0.000000e+00> : vector<8x16xf32>
    %406 = tpu.matmul %1, %405, %cst_248 {dimension_numbers = #tpu.dot_dimension_numbers<[1], [0], [0], [1], [0, 0, 1, 1], [], []>} : vector<8x4xbf16>, vector<4x16xbf16>, vector<8x16xf32> -> vector<8x16xf32>
    %407 = vector.extract_strided_slice %404 {offsets = [0, 1], sizes = [4, 16], strides = [1, 1]} : vector<4x18xbf16> to vector<4x16xbf16>
    %cst_249 = arith.constant dense<0.000000e+00> : vector<8x16xf32>
    %408 = tpu.matmul %3, %407, %cst_249 {dimension_numbers = #tpu.dot_dimension_numbers<[1], [0], [0], [1], [0, 0, 1, 1], [], []>} : vector<8x4xbf16>, vector<4x16xbf16>, vector<8x16xf32> -> vector<8x16xf32>
    %409 = arith.addf %406, %408 : vector<8x16xf32>
    %410 = vector.extract_strided_slice %404 {offsets = [0, 2], sizes = [4, 16], strides = [1, 1]} : vector<4x18xbf16> to vector<4x16xbf16>
    %cst_250 = arith.constant dense<0.000000e+00> : vector<8x16xf32>
    %411 = tpu.matmul %5, %410, %cst_250 {dimension_numbers = #tpu.dot_dimension_numbers<[1], [0], [0], [1], [0, 0, 1, 1], [], []>} : vector<8x4xbf16>, vector<4x16xbf16>, vector<8x16xf32> -> vector<8x16xf32>
    %412 = arith.addf %409, %411 : vector<8x16xf32>
    %c1_i32_251 = arith.constant 1 : i32
    %413 = arith.muli %399, %c1_i32_251 : i32
    %c1_i32_252 = arith.constant 1 : i32
    %414 = arith.addi %413, %c1_i32_252 : i32
    %c0_253 = arith.constant 0 : index
    %415 = arith.index_cast %414 : i32 to index
    %c0_254 = arith.constant 0 : index
    %c0_255 = arith.constant 0 : index
    %416 = vector.load %arg2[%c0_253, %415, %c0_254, %c0_255] : memref<1x18x4x18xbf16, #tpu.memory_space<vmem>>, vector<1x1x4x18xbf16>
    %417 = vector.shape_cast %416 : vector<1x1x4x18xbf16> to vector<4x18xbf16>
    %418 = vector.extract_strided_slice %417 {offsets = [0, 0], sizes = [4, 16], strides = [1, 1]} : vector<4x18xbf16> to vector<4x16xbf16>
    %cst_256 = arith.constant dense<0.000000e+00> : vector<8x16xf32>
    %419 = tpu.matmul %7, %418, %cst_256 {dimension_numbers = #tpu.dot_dimension_numbers<[1], [0], [0], [1], [0, 0, 1, 1], [], []>} : vector<8x4xbf16>, vector<4x16xbf16>, vector<8x16xf32> -> vector<8x16xf32>
    %420 = arith.addf %412, %419 : vector<8x16xf32>
    %421 = vector.extract_strided_slice %417 {offsets = [0, 1], sizes = [4, 16], strides = [1, 1]} : vector<4x18xbf16> to vector<4x16xbf16>
    %cst_257 = arith.constant dense<0.000000e+00> : vector<8x16xf32>
    %422 = tpu.matmul %9, %421, %cst_257 {dimension_numbers = #tpu.dot_dimension_numbers<[1], [0], [0], [1], [0, 0, 1, 1], [], []>} : vector<8x4xbf16>, vector<4x16xbf16>, vector<8x16xf32> -> vector<8x16xf32>
    %423 = arith.addf %420, %422 : vector<8x16xf32>
    %424 = vector.extract_strided_slice %417 {offsets = [0, 2], sizes = [4, 16], strides = [1, 1]} : vector<4x18xbf16> to vector<4x16xbf16>
    %cst_258 = arith.constant dense<0.000000e+00> : vector<8x16xf32>
    %425 = tpu.matmul %11, %424, %cst_258 {dimension_numbers = #tpu.dot_dimension_numbers<[1], [0], [0], [1], [0, 0, 1, 1], [], []>} : vector<8x4xbf16>, vector<4x16xbf16>, vector<8x16xf32> -> vector<8x16xf32>
    %426 = arith.addf %423, %425 : vector<8x16xf32>
    %c1_i32_259 = arith.constant 1 : i32
    %427 = arith.muli %399, %c1_i32_259 : i32
    %c2_i32_260 = arith.constant 2 : i32
    %428 = arith.addi %427, %c2_i32_260 : i32
    %c0_261 = arith.constant 0 : index
    %429 = arith.index_cast %428 : i32 to index
    %c0_262 = arith.constant 0 : index
    %c0_263 = arith.constant 0 : index
    %430 = vector.load %arg2[%c0_261, %429, %c0_262, %c0_263] : memref<1x18x4x18xbf16, #tpu.memory_space<vmem>>, vector<1x1x4x18xbf16>
    %431 = vector.shape_cast %430 : vector<1x1x4x18xbf16> to vector<4x18xbf16>
    %432 = vector.extract_strided_slice %431 {offsets = [0, 0], sizes = [4, 16], strides = [1, 1]} : vector<4x18xbf16> to vector<4x16xbf16>
    %cst_264 = arith.constant dense<0.000000e+00> : vector<8x16xf32>
    %433 = tpu.matmul %13, %432, %cst_264 {dimension_numbers = #tpu.dot_dimension_numbers<[1], [0], [0], [1], [0, 0, 1, 1], [], []>} : vector<8x4xbf16>, vector<4x16xbf16>, vector<8x16xf32> -> vector<8x16xf32>
    %434 = arith.addf %426, %433 : vector<8x16xf32>
    %435 = vector.extract_strided_slice %431 {offsets = [0, 1], sizes = [4, 16], strides = [1, 1]} : vector<4x18xbf16> to vector<4x16xbf16>
    %cst_265 = arith.constant dense<0.000000e+00> : vector<8x16xf32>
    %436 = tpu.matmul %15, %435, %cst_265 {dimension_numbers = #tpu.dot_dimension_numbers<[1], [0], [0], [1], [0, 0, 1, 1], [], []>} : vector<8x4xbf16>, vector<4x16xbf16>, vector<8x16xf32> -> vector<8x16xf32>
    %437 = arith.addf %434, %436 : vector<8x16xf32>
    %438 = vector.extract_strided_slice %431 {offsets = [0, 2], sizes = [4, 16], strides = [1, 1]} : vector<4x18xbf16> to vector<4x16xbf16>
    %cst_266 = arith.constant dense<0.000000e+00> : vector<8x16xf32>
    %439 = tpu.matmul %17, %438, %cst_266 {dimension_numbers = #tpu.dot_dimension_numbers<[1], [0], [0], [1], [0, 0, 1, 1], [], []>} : vector<8x4xbf16>, vector<4x16xbf16>, vector<8x16xf32> -> vector<8x16xf32>
    %440 = arith.addf %437, %439 : vector<8x16xf32>
    %441 = vector.broadcast %18 : vector<8x1xf32> to vector<8x16xf32>
    %442 = arith.addf %440, %441 : vector<8x16xf32>
    %cst_267 = arith.constant 0.000000e+00 : f32
    %443 = vector.broadcast %cst_267 : f32 to vector<8x16xf32>
    %444 = arith.cmpf ogt, %442, %443 : vector<8x16xf32>
    %cst_268 = arith.constant 1.000000e-01 : f32
    %445 = vector.broadcast %cst_268 : f32 to vector<8x16xf32>
    %446 = arith.mulf %445, %442 : vector<8x16xf32>
    %447 = arith.select %444, %442, %446 : vector<8x16xi1>, vector<8x16xf32>
    %c0_269 = arith.constant 0 : index
    %c0_270 = arith.constant 0 : index
    %c7_271 = arith.constant 7 : index
    %c0_272 = arith.constant 0 : index
    %448 = vector.load %arg5[%c0_269, %c0_270, %c7_271, %c0_272] : memref<1x8x8x16xf32, #tpu.memory_space<vmem>>, vector<1x8x1x16xf32>
    %449 = vector.shape_cast %448 : vector<1x8x1x16xf32> to vector<8x16xf32>
    %450 = vector.shape_cast %447 : vector<8x16xf32> to vector<1x8x1x16xf32>
    tpu.vector_store %arg5[%c0_269, %c0_270, %c7_271, %c0_272], %450 {strides = array<i32>} : memref<1x8x8x16xf32, #tpu.memory_space<vmem>>, vector<1x8x1x16xf32>,
    return
  }
  func.func @transform_0(%arg0: i32, %arg1: i32) -> (i32, i32, i32, i32) {
    %c0_i32 = arith.constant 0 : i32
    %c0_i32_0 = arith.constant 0 : i32
    %c0_i32_1 = arith.constant 0 : i32
    %c0_i32_2 = arith.constant 0 : i32
    return %arg0, %c0_i32, %c0_i32_0, %c0_i32_1 : i32, i32, i32, i32
  }
  func.func @transform_1(%arg0: i32, %arg1: i32) -> (i32, i32, i32) {
    %c0_i32 = arith.constant 0 : i32
    %c0_i32_0 = arith.constant 0 : i32
    %c0_i32_1 = arith.constant 0 : i32
    %c0_i32_2 = arith.constant 0 : i32
    return %c0_i32, %c0_i32_0, %c0_i32_1 : i32, i32, i32
  }
  func.func @transform_2(%arg0: i32, %arg1: i32) -> (i32, i32) {
    %c0_i32 = arith.constant 0 : i32
    %c0_i32_0 = arith.constant 0 : i32
    %c0_i32_1 = arith.constant 0 : i32
    return %c0_i32, %c0_i32_0 : i32, i32
  }
  func.func @transform_3(%arg0: i32, %arg1: i32) -> (i32, i32, i32, i32) {
    %c0_i32 = arith.constant 0 : i32
    %c0_i32_0 = arith.constant 0 : i32
    %c0_i32_1 = arith.constant 0 : i32
    return %arg0, %c0_i32, %arg1, %c0_i32_0 : i32, i32, i32, i32
  }
}

</mosaic_0001>

<llo_original>
// kernel: tpu_custom_call.1
$region0: #{tpu_custom_call.1}
  #allocation0 [shape = 'u32[]', space=smem, size = 0x4, offset = 0x4, fixed_abs, tag = 'smem constant byte address 0x4 - core index']
  #allocation1 [shape = 'u32[144,128]{1,0:T(1,128)}', space=vmem, size = 0x12000, scoped, tag = 'internal scratch']
  %s0 = inlined_call_operand.hbm [shape: bf16[2,18,4,18], index: 0, kind: input, shape index: {}]
  %s1 = inlined_call_operand.vmem [shape: bf16[9,8,4], index: 1, kind: input, shape index: {}]
  %s2 = inlined_call_operand.vmem [shape: f32[8,1], index: 2, kind: input, shape index: {}]
  %s3 = inlined_call_operand.hbm [shape: f32[2,8,16,16], index: 3, kind: output, shape index: {}]
  %s4 = sld [smem:[#allocation0]]
  $region49: #{tpu_custom_call.1} parent=0
    _
  %s6 = ssub.s32 1, %s4
  %s7 = scalar_select 0, %s6, %s4
  $region1: #{tpu_custom_call.1} parent=0
    #allocation2 [shape = 'u8[36864]{0}', space=vmem, size = 0x9000, scoped, tag = 'input window, operand 0']
    #allocation3 [shape = 's32[2]{0}', space=sflag, size = 0x8, scoped, tag = 'scoped memory for tpu_custom_call.1']
    #allocation4 [shape = 's32[2]{0}', space=sflag, size = 0x8, scoped, tag = 'scoped memory for tpu_custom_call.1']
    #allocation5 [shape = 'u8[65536]{0}', space=vmem, size = 0x10000, scoped, tag = 'output window, operand 0']
    %8 = vsyncpa [#allocation3], 0
    %s9 = scalar_lea.sflag [#allocation3], 1
    %10 = vsyncpa %s9, 0
    %11 = vsyncpa [#allocation4], 0
    %s12 = scalar_lea.sflag [#allocation4], 1
    %13 = vsyncpa %s12, 0
    loop: start=0, step=1, limit=6
    $region2: #{tpu_custom_call.1} parent=1 // loop_pre_header
      _
    $region3: #{tpu_custom_call.1} parent=1 // loop_header
      %s15 = sphi 0, %s19
      %p16 = scmp.ge.s32.totalorder %s15, 6
      %s22 = sphi 0, %s34
      %s23 = sphi 0, %s30
      %s24 = sphi 0, %s22
      %s25 = sphi 0, %s23
      %s26 = sphi 0, %s24
      %s27 = sphi 0, %s25
      %s37 = sphi 0, %s39
      %s40 = sphi 0, %s37
      %s41 = sphi 0, %s40
      %s57 = sphi 0, %s41
      %s61 = sphi 0, %s61
      %s63 = sphi 0, %s61
      %s64 = sphi 0, %s63
      %s78 = sphi 0, %s64
      %s82 = sphi 0, %s82
      %s84 = sphi 0, %s82
      %s85 = sphi 0, %s84
      %s99 = sphi 0, %s85
      %s107 = sphi 0, %s109
      %s110 = sphi 0, %s107
      %s111 = sphi 0, %s110
      %s127 = sphi 0, %s111
    $region4: #{tpu_custom_call.1} parent=1 // loop_header_branch
      %18 = sbr.rel (%p16) target = $region8
    $region5: #{tpu_custom_call.1} parent=1 // loop_body
      %s20 = ssub.s32 %s15, 1
      %s21 = ssub.s32 %s15, 2
      %s28 = sadd.s32 1, %s23
      %p29 = scmp.ge.s32.totalorder %s28, 2
      %s30 = scalar_select %p29, 0, %s28
      %s31 = sadd.s32 1, %s22
      %s32 = scalar_select %p29, %s31, %s22
      %p33 = scmp.ge.s32.totalorder %s32, 2
      %s34 = scalar_select %p33, 0, %s32
      %s35 = ssub.s32 %s22, %s34
      %p36 = scmp.eq.s32.totalorder %s35, 0
      %s38 = sadd.s32 %s37, 1
      %s39 = scalar_select %p36, %s37, %s38
      %p42 = pneg %p36
      %p43 = scmp.eq.s32.totalorder %s15, 3
      %p44 = por %p42, %p43
      %p45 = scmp.ne.s32.totalorder %s37, %s40
      %p46 = scmp.eq.s32.totalorder %s15, 0
      %p47 = por %p45, %p46
      %p48 = scmp.ne.s32.totalorder %s37, %s40
      %p49 = scmp.eq.s32.totalorder %s20, 3
      %p50 = por %p48, %p49
      %p51 = scmp.ne.s32.totalorder %s40, %s41
      %p52 = scmp.eq.s32.totalorder %s20, 0
      %p53 = por %p51, %p52
      %p54 = scmp.ne.s32.totalorder %s40, %s41
      %p55 = scmp.eq.s32.totalorder %s21, 3
      %p56 = por %p54, %p55
      %p58 = scmp.ne.s32.totalorder %s41, %s57
      %p59 = scmp.eq.s32.totalorder %s21, 0
      %p60 = por %p58, %p59
      %s62 = sadd.s32 %s61, 1
      %p65 = scmp.eq.s32.totalorder %s15, 3
      %p66 = scmp.ne.s32.totalorder %s61, %s63
      %p67 = scmp.eq.s32.totalorder %s15, 0
      %p68 = por %p66, %p67
      %p69 = scmp.ne.s32.totalorder %s61, %s63
      %p70 = scmp.eq.s32.totalorder %s20, 3
      %p71 = por %p69, %p70
      %p72 = scmp.ne.s32.totalorder %s63, %s64
      %p73 = scmp.eq.s32.totalorder %s20, 0
      %p74 = por %p72, %p73
      %p75 = scmp.ne.s32.totalorder %s63, %s64
      %p76 = scmp.eq.s32.totalorder %s21, 3
      %p77 = por %p75, %p76
      %p79 = scmp.ne.s32.totalorder %s64, %s78
      %p80 = scmp.eq.s32.totalorder %s21, 0
      %p81 = por %p79, %p80
      %s83 = sadd.s32 %s82, 1
      %p86 = scmp.eq.s32.totalorder %s15, 3
      %p87 = scmp.ne.s32.totalorder %s82, %s84
      %p88 = scmp.eq.s32.totalorder %s15, 0
      %p89 = por %p87, %p88
      %p90 = scmp.ne.s32.totalorder %s82, %s84
      %p91 = scmp.eq.s32.totalorder %s20, 3
      %p92 = por %p90, %p91
      %p93 = scmp.ne.s32.totalorder %s84, %s85
      %p94 = scmp.eq.s32.totalorder %s20, 0
      %p95 = por %p93, %p94
      %p96 = scmp.ne.s32.totalorder %s84, %s85
      %p97 = scmp.eq.s32.totalorder %s21, 3
      %p98 = por %p96, %p97
      %p100 = scmp.ne.s32.totalorder %s85, %s99
      %p101 = scmp.eq.s32.totalorder %s21, 0
      %p102 = por %p100, %p101
      %s103 = ssub.s32 %s22, %s34
      %s104 = ssub.s32 %s23, %s30
      %s105 = sor.u32 %s103, %s104
      %p106 = scmp.eq.s32.totalorder %s105, 0
      %s108 = sadd.s32 %s107, 1
      %s109 = scalar_select %p106, %s107, %s108
      %p112 = pneg %p106
      %p113 = scmp.eq.s32.totalorder %s15, 3
      %p114 = por %p112, %p113
      %p115 = scmp.ne.s32.totalorder %s107, %s110
      %p116 = scmp.eq.s32.totalorder %s15, 0
      %p117 = por %p115, %p116
      %p118 = scmp.ne.s32.totalorder %s107, %s110
      %p119 = scmp.eq.s32.totalorder %s20, 3
      %p120 = por %p118, %p119
      %p121 = scmp.ne.s32.totalorder %s110, %s111
      %p122 = scmp.eq.s32.totalorder %s20, 0
      %p123 = por %p121, %p122
      %p124 = scmp.ne.s32.totalorder %s110, %s111
      %p125 = scmp.eq.s32.totalorder %s21, 3
      %p126 = por %p124, %p125
      %p128 = scmp.ne.s32.totalorder %s111, %s127
      %p129 = scmp.eq.s32.totalorder %s21, 0
      %p130 = por %p128, %p129
      %p131 = scmp.le.s32.totalorder 1, %s15
      %p132 = scmp.lt.s32.totalorder %s15, 5
      %p133 = pnand %p131, %p132
      %p134 = pneg %p133
      // Predicated region
      $region9: #{tpu_custom_call.1} parent=5 // pred_check
        _
      $region10: #{tpu_custom_call.1} parent=5 // pred_check_branch
        %136 = sbr.rel (%p133) target = $region12
      $region11: #{tpu_custom_call.1} parent=5 // pred_region
        %s137 = ssub.s32 %s15, 1
        // Predicated region
        $region13: #{tpu_custom_call.1} parent=11 // pred_check
          %p138 = pneg %p74
        $region14: #{tpu_custom_call.1} parent=11 // pred_check_branch
          %140 = sbr.rel (%p138) target = $region16
        $region15: #{tpu_custom_call.1} parent=11 // pred_region
          _
        $region16: #{tpu_custom_call.1} parent=11 // pred_fallthru
          _
        // Predicated region
        $region17: #{tpu_custom_call.1} parent=11 // pred_check
          %p141 = pneg %p95
        $region18: #{tpu_custom_call.1} parent=11 // pred_check_branch
          %143 = sbr.rel (%p141) target = $region20
        $region19: #{tpu_custom_call.1} parent=11 // pred_region
          _
        $region20: #{tpu_custom_call.1} parent=11 // pred_fallthru
          _
      $region12: #{tpu_custom_call.1} parent=5 // pred_fallthru
        _
      %p144 = scmp.lt.s32.totalorder %s15, 4
      // Predicated region
      $region21: #{tpu_custom_call.1} parent=5 // pred_check
        %p145 = pneg %p144
      $region22: #{tpu_custom_call.1} parent=5 // pred_check_branch
        %147 = sbr.rel (%p145) target = $region24
      $region23: #{tpu_custom_call.1} parent=5 // pred_region
        // Predicated region
        $region25: #{tpu_custom_call.1} parent=23 // pred_check
          %p148 = pneg %p47
        $region26: #{tpu_custom_call.1} parent=23 // pred_check_branch
          %150 = sbr.rel (%p148) target = $region28
        $region27: #{tpu_custom_call.1} parent=23 // pred_region
          %s151 = sand.u32 %s37, 1
          %s152 = scalar_lea.sflag [#allocation3], %s151
          %s153 = sand.u32 %s37, 1
          %s154 = smul.addr %s153, 36
          %s155 = scalar_lea.vmem [#allocation2], %s154
          %s157 = ssub.s32 576, 576
          %158 = vsyncadd %s152, %s157
          %s159 = smul.addr %s22, 18
          %s160 = smul.addr %s159, 32
          %s161 = scalar_lea.hbm %s0, %s160
          %s162 = sshll.u32 %s155, 4
          %s163 = int_to_ptr.vmem [resolvable:$true] %s162
          %168 = dma.hbm_to_vmem [thread:$0]  %s161, 576, %s163, %s152, 32, 32, 2
        $region28: #{tpu_custom_call.1} parent=23 // pred_fallthru
          _
      $region24: #{tpu_custom_call.1} parent=5 // pred_fallthru
        _
      %p169 = scmp.le.s32.totalorder 1, %s15
      %p170 = scmp.lt.s32.totalorder %s15, 5
      %p171 = pnand %p169, %p170
      %p172 = pneg %p171
      // Predicated region
      $region29: #{tpu_custom_call.1} parent=5 // pred_check
        _
      $region30: #{tpu_custom_call.1} parent=5 // pred_check_branch
        %174 = sbr.rel (%p171) target = $region32
      $region31: #{tpu_custom_call.1} parent=5 // pred_region
        %s175 = ssub.s32 %s15, 1
        %s176 = sand.u32 %s40, 1
        %s177 = scalar_lea.sflag [#allocation3], %s176
        %s178 = sand.u32 %s40, 1
        %s179 = smul.addr %s178, 36
        %s180 = scalar_lea.vmem [#allocation2], %s179
        // Predicated region
        $region33: #{tpu_custom_call.1} parent=31 // pred_check
          %p181 = pneg %p53
        $region34: #{tpu_custom_call.1} parent=31 // pred_check_branch
          %183 = sbr.rel (%p181) target = $region36
        $region35: #{tpu_custom_call.1} parent=31 // pred_region
          %184 = dma.done %s177, 576
        $region36: #{tpu_custom_call.1} parent=31 // pred_fallthru
          _
        %s185 = sand.u32 %s40, 1
        %s186 = scalar_lea.sflag [#allocation3], %s185
        %s187 = sand.u32 %s40, 1
        %s188 = smul.addr %s187, 36
        %s189 = scalar_lea.vmem [#allocation2], %s188
        %p190 = pneg %p53
        %p191 = pneg %p50
        %p192 = pneg %p74
        %p193 = pneg %p71
        %p194 = pneg %p95
        %p195 = pneg %p92
        %p196 = pneg %p123
        %p197 = pneg %p120
        %s198 = sand.u32 %s110, 1
        %s199 = scalar_lea.sflag [#allocation4], %s198
        %s200 = sand.u32 %s110, 1
        %s201 = smul.addr %s200, 64
        %s202 = scalar_lea.vmem [#allocation5], %s201
        %v204 = vld [vmem:[%s1] sm:$0xf]
        %s205 = scalar_lea.vmem %s1, 4
        %v206 = vld [vmem:[%s205] sm:$0xf]
        %s207 = scalar_lea.vmem %s1, 8
        %v208 = vld [vmem:[%s207] sm:$0xf]
        %s209 = scalar_lea.vmem %s1, 12
        %v210 = vld [vmem:[%s209] sm:$0xf]
        %s211 = scalar_lea.vmem %s1, 16
        %v212 = vld [vmem:[%s211] sm:$0xf]
        %s213 = scalar_lea.vmem %s1, 20
        %v214 = vld [vmem:[%s213] sm:$0xf]
        %s215 = scalar_lea.vmem %s1, 24
        %v216 = vld [vmem:[%s215] sm:$0xf]
        %s217 = scalar_lea.vmem %s1, 28
        %v218 = vld [vmem:[%s217] sm:$0xf]
        %s219 = scalar_lea.vmem %s1, 32
        %v220 = vld [vmem:[%s219] sm:$0xf]
        %v221 = vld [vmem:[%s2] sm:$0xff]
        %s222 = smul.u32 %s25, 8
        %p223 = scmp.lt.s32.totalorder %s222, 15
        %s224 = scalar_select %p223, %s222, 15
        %s225 = smul.addr %s224, 2
        %s226 = scalar_lea.vmem %s180, %s225 [#allocation2]
        %v227 = vld [vmem:[%s226] sm:$0x3]
        %v230 = vunpack.c.l.s4 1983009808
        %v231 = vunpack.c.0.s8 %v230
        %v232 = vlaneseq
        %v233 = vshrl.u32 %v232, 7
        %v234 = vsub.s32 %v231, %v233
        %v235 = vrot.slane %v227, %v234
        %236 = vrot.lane.b32.xlu0 %v235, 127
        %v237 = vpop.permute.xlu0 %236
        %vm238 = vcmask 31744
        %v240 = vsel %vm238, %v206, 0
        %vm242 = vcmask 1041408
        %v244 = vsel %vm242, %v237, 0
        %246 = vmatprep.subr.bf16.mxu0 0
        %247 = vmatpush1.bf16.msra.mxu0 %v244
        %248 = vmatprep.subr.bf16.mxu0 0
        %249 = vmatpush1.bf16.msra.mxu0 0
        %250 = vmatprep.subr.bf16.mxu0 0
        %251 = vmatpush1.bf16.msra.mxu0 0
        %252 = vmatprep.subr.bf16.mxu0 0
        %253 = vmatpush1.bf16.msra.mxu0 0
        %254 = vmatprep.subr.bf16.mxu0 0
        %255 = vmatpush1.bf16.msra.mxu0 0
        %256 = vmatprep.subr.bf16.mxu0 0
        %257 = vmatpush1.bf16.msra.mxu0 0
        %258 = vmatprep.subr.bf16.mxu0 0
        %259 = vmatpush1.bf16.msra.mxu0 0
        %260 = vmatprep.subr.bf16.mxu0 0
        %261 = vmatpush1.bf16.msra.mxu0 0
        %262 = vmatprep.subr.bf16.mxu0 0
        %263 = vmatpush1.bf16.msra.mxu0 0
        %264 = vmatprep.subr.bf16.mxu0 0
        %265 = vmatpush1.bf16.msra.mxu0 0
        %266 = vmatprep.subr.bf16.mxu0 0
        %267 = vmatpush1.bf16.msra.mxu0 0
        %268 = vmatprep.subr.bf16.mxu0 0
        %269 = vmatpush1.bf16.msra.mxu0 0
        %270 = vmatprep.subr.bf16.mxu0 0
        %271 = vmatpush1.bf16.msra.mxu0 0
        %272 = vmatprep.subr.bf16.mxu0 0
        %273 = vmatpush1.bf16.msra.mxu0 0
        %274 = vmatprep.subr.bf16.mxu0 0
        %275 = vmatpush1.bf16.msra.mxu0 0
        %276 = vmatprep.subr.bf16.mxu0 0
        %277 = vmatpush1.bf16.msra.mxu0 0
        %278 = vmatprep.mubr.bf16.mxu0 0
        %279 = vmatmul.mubr.bf16.gmra.mrb[0].mxu0 %v240
        %v280 = vpop.f32.mrb[0].mxu0
        %v281 = vadd.f32 0.0, %v280
        %v282 = vpop.f32.mrb[0].mxu0
        %v283 = vpop.f32.mrb[0].mxu0
        %v284 = vpop.f32.mrb[0].mxu0
        %285 = vdwg.mxu0
        %v287 = vsel %vm238, %v204, 0
        %v290 = vsel %vm242, %v227, 0
        %292 = vmatprep.subr.bf16.mxu0 0
        %293 = vmatpush1.bf16.msra.mxu0 %v290
        %294 = vmatprep.subr.bf16.mxu0 0
        %295 = vmatpush1.bf16.msra.mxu0 0
        %296 = vmatprep.subr.bf16.mxu0 0
        %297 = vmatpush1.bf16.msra.mxu0 0
        %298 = vmatprep.subr.bf16.mxu0 0
        %299 = vmatpush1.bf16.msra.mxu0 0
        %300 = vmatprep.subr.bf16.mxu0 0
        %301 = vmatpush1.bf16.msra.mxu0 0
        %302 = vmatprep.subr.bf16.mxu0 0
        %303 = vmatpush1.bf16.msra.mxu0 0
        %304 = vmatprep.subr.bf16.mxu0 0
        %305 = vmatpush1.bf16.msra.mxu0 0
        %306 = vmatprep.subr.bf16.mxu0 0
        %307 = vmatpush1.bf16.msra.mxu0 0
        %308 = vmatprep.subr.bf16.mxu0 0
        %309 = vmatpush1.bf16.msra.mxu0 0
        %310 = vmatprep.subr.bf16.mxu0 0
        %311 = vmatpush1.bf16.msra.mxu0 0
        %312 = vmatprep.subr.bf16.mxu0 0
        %313 = vmatpush1.bf16.msra.mxu0 0
        %314 = vmatprep.subr.bf16.mxu0 0
        %315 = vmatpush1.bf16.msra.mxu0 0
        %316 = vmatprep.subr.bf16.mxu0 0
        %317 = vmatpush1.bf16.msra.mxu0 0
        %318 = vmatprep.subr.bf16.mxu0 0
        %319 = vmatpush1.bf16.msra.mxu0 0
        %320 = vmatprep.subr.bf16.mxu0 0
        %321 = vmatpush1.bf16.msra.mxu0 0
        %322 = vmatprep.subr.bf16.mxu0 0
        %323 = vmatpush1.bf16.msra.mxu0 0
        %324 = vmatprep.mubr.bf16.mxu0 0
        %325 = vmatmul.mubr.bf16.gmra.mrb[0].mxu0 %v287
        %v326 = vpop.f32.mrb[0].mxu0
        %v327 = vadd.f32 %v281, %v326
        %v328 = vpop.f32.mrb[0].mxu0
        %v329 = vpop.f32.mrb[0].mxu0
        %v330 = vpop.f32.mrb[0].mxu0
        %331 = vdwg.mxu0
        %332 = vrot.lane.b32.xlu0 %v235, 126
        %v333 = vpop.permute.xlu0 %332
        %v335 = vsel %vm238, %v208, 0
        %v338 = vsel %vm242, %v333, 0
        %340 = vmatprep.subr.bf16.mxu0 0
        %341 = vmatpush1.bf16.msra.mxu0 %v338
        %342 = vmatprep.subr.bf16.mxu0 0
        %343 = vmatpush1.bf16.msra.mxu0 0
        %344 = vmatprep.subr.bf16.mxu0 0
        %345 = vmatpush1.bf16.msra.mxu0 0
        %346 = vmatprep.subr.bf16.mxu0 0
        %347 = vmatpush1.bf16.msra.mxu0 0
        %348 = vmatprep.subr.bf16.mxu0 0
        %349 = vmatpush1.bf16.msra.mxu0 0
        %350 = vmatprep.subr.bf16.mxu0 0
        %351 = vmatpush1.bf16.msra.mxu0 0
        %352 = vmatprep.subr.bf16.mxu0 0
        %353 = vmatpush1.bf16.msra.mxu0 0
        %354 = vmatprep.subr.bf16.mxu0 0
        %355 = vmatpush1.bf16.msra.mxu0 0
        %356 = vmatprep.subr.bf16.mxu0 0
        %357 = vmatpush1.bf16.msra.mxu0 0
        %358 = vmatprep.subr.bf16.mxu0 0
        %359 = vmatpush1.bf16.msra.mxu0 0
        %360 = vmatprep.subr.bf16.mxu0 0
        %361 = vmatpush1.bf16.msra.mxu0 0
        %362 = vmatprep.subr.bf16.mxu0 0
        %363 = vmatpush1.bf16.msra.mxu0 0
        %364 = vmatprep.subr.bf16.mxu0 0
        %365 = vmatpush1.bf16.msra.mxu0 0
        %366 = vmatprep.subr.bf16.mxu0 0
        %367 = vmatpush1.bf16.msra.mxu0 0
        %368 = vmatprep.subr.bf16.mxu0 0
        %369 = vmatpush1.bf16.msra.mxu0 0
        %370 = vmatprep.subr.bf16.mxu0 0
        %371 = vmatpush1.bf16.msra.mxu0 0
        %372 = vmatprep.mubr.bf16.mxu0 0
        %373 = vmatmul.mubr.bf16.gmra.mrb[0].mxu0 %v335
        %v374 = vpop.f32.mrb[0].mxu0
        %v375 = vadd.f32 0.0, %v374
        %v376 = vpop.f32.mrb[0].mxu0
        %v377 = vpop.f32.mrb[0].mxu0
        %v378 = vpop.f32.mrb[0].mxu0
        %379 = vdwg.mxu0
        %v380 = vadd.f32 %v327, %v375
        %s381 = sadd.s32 %s224, 1
        %s382 = smul.addr %s381, 2
        %s383 = scalar_lea.vmem %s180, %s382 [#allocation2]
        %v384 = vld [vmem:[%s383] sm:$0x3]
        %v386 = vsel %vm238, %v210, 0
        %v389 = vsel %vm242, %v384, 0
        %391 = vmatprep.subr.bf16.mxu0 0
        %392 = vmatpush1.bf16.msra.mxu0 %v389
        %393 = vmatprep.subr.bf16.mxu0 0
        %394 = vmatpush1.bf16.msra.mxu0 0
        %395 = vmatprep.subr.bf16.mxu0 0
        %396 = vmatpush1.bf16.msra.mxu0 0
        %397 = vmatprep.subr.bf16.mxu0 0
        %398 = vmatpush1.bf16.msra.mxu0 0
        %399 = vmatprep.subr.bf16.mxu0 0
        %400 = vmatpush1.bf16.msra.mxu0 0
        %401 = vmatprep.subr.bf16.mxu0 0
        %402 = vmatpush1.bf16.msra.mxu0 0
        %403 = vmatprep.subr.bf16.mxu0 0
        %404 = vmatpush1.bf16.msra.mxu0 0
        %405 = vmatprep.subr.bf16.mxu0 0
        %406 = vmatpush1.bf16.msra.mxu0 0
        %407 = vmatprep.subr.bf16.mxu0 0
        %408 = vmatpush1.bf16.msra.mxu0 0
        %409 = vmatprep.subr.bf16.mxu0 0
        %410 = vmatpush1.bf16.msra.mxu0 0
        %411 = vmatprep.subr.bf16.mxu0 0
        %412 = vmatpush1.bf16.msra.mxu0 0
        %413 = vmatprep.subr.bf16.mxu0 0
        %414 = vmatpush1.bf16.msra.mxu0 0
        %415 = vmatprep.subr.bf16.mxu0 0
        %416 = vmatpush1.bf16.msra.mxu0 0
        %417 = vmatprep.subr.bf16.mxu0 0
        %418 = vmatpush1.bf16.msra.mxu0 0
        %419 = vmatprep.subr.bf16.mxu0 0
        %420 = vmatpush1.bf16.msra.mxu0 0
        %421 = vmatprep.subr.bf16.mxu0 0
        %422 = vmatpush1.bf16.msra.mxu0 0
        %423 = vmatprep.mubr.bf16.mxu0 0
        %424 = vmatmul.mubr.bf16.gmra.mrb[0].mxu0 %v386
        %v425 = vpop.f32.mrb[0].mxu0
        %v426 = vadd.f32 0.0, %v425
        %v427 = vpop.f32.mrb[0].mxu0
        %v428 = vpop.f32.mrb[0].mxu0
        %v429 = vpop.f32.mrb[0].mxu0
        %430 = vdwg.mxu0
        %v431 = vadd.f32 %v380, %v426
        %v434 = vunpack.c.l.s4 1983009808
        %v435 = vunpack.c.0.s8 %v434
        %v436 = vlaneseq
        %v437 = vshrl.u32 %v436, 7
        %v438 = vsub.s32 %v435, %v437
        %v439 = vrot.slane %v384, %v438
        %440 = vrot.lane.b32.xlu0 %v439, 127
        %v441 = vpop.permute.xlu0 %440
        %v443 = vsel %vm238, %v212, 0
        %v446 = vsel %vm242, %v441, 0
        %448 = vmatprep.subr.bf16.mxu0 0
        %449 = vmatpush1.bf16.msra.mxu0 %v446
        %450 = vmatprep.subr.bf16.mxu0 0
        %451 = vmatpush1.bf16.msra.mxu0 0
        %452 = vmatprep.subr.bf16.mxu0 0
        %453 = vmatpush1.bf16.msra.mxu0 0
        %454 = vmatprep.subr.bf16.mxu0 0
        %455 = vmatpush1.bf16.msra.mxu0 0
        %456 = vmatprep.subr.bf16.mxu0 0
        %457 = vmatpush1.bf16.msra.mxu0 0
        %458 = vmatprep.subr.bf16.mxu0 0
        %459 = vmatpush1.bf16.msra.mxu0 0
        %460 = vmatprep.subr.bf16.mxu0 0
        %461 = vmatpush1.bf16.msra.mxu0 0
        %462 = vmatprep.subr.bf16.mxu0 0
        %463 = vmatpush1.bf16.msra.mxu0 0
        %464 = vmatprep.subr.bf16.mxu0 0
        %465 = vmatpush1.bf16.msra.mxu0 0
        %466 = vmatprep.subr.bf16.mxu0 0
        %467 = vmatpush1.bf16.msra.mxu0 0
        %468 = vmatprep.subr.bf16.mxu0 0
        %469 = vmatpush1.bf16.msra.mxu0 0
        %470 = vmatprep.subr.bf16.mxu0 0
        %471 = vmatpush1.bf16.msra.mxu0 0
        %472 = vmatprep.subr.bf16.mxu0 0
        %473 = vmatpush1.bf16.msra.mxu0 0
        %474 = vmatprep.subr.bf16.mxu0 0
        %475 = vmatpush1.bf16.msra.mxu0 0
        %476 = vmatprep.subr.bf16.mxu0 0
        %477 = vmatpush1.bf16.msra.mxu0 0
        %478 = vmatprep.subr.bf16.mxu0 0
        %479 = vmatpush1.bf16.msra.mxu0 0
        %480 = vmatprep.mubr.bf16.mxu0 0
        %481 = vmatmul.mubr.bf16.gmra.mrb[0].mxu0 %v443
        %v482 = vpop.f32.mrb[0].mxu0
        %v483 = vadd.f32 0.0, %v482
        %v484 = vpop.f32.mrb[0].mxu0
        %v485 = vpop.f32.mrb[0].mxu0
        %v486 = vpop.f32.mrb[0].mxu0
        %487 = vdwg.mxu0
        %v488 = vadd.f32 %v431, %v483
        %489 = vrot.lane.b32.xlu0 %v439, 126
        %v490 = vpop.permute.xlu0 %489
        %v492 = vsel %vm238, %v214, 0
        %v495 = vsel %vm242, %v490, 0
        %497 = vmatprep.subr.bf16.mxu0 0
        %498 = vmatpush1.bf16.msra.mxu0 %v495
        %499 = vmatprep.subr.bf16.mxu0 0
        %500 = vmatpush1.bf16.msra.mxu0 0
        %501 = vmatprep.subr.bf16.mxu0 0
        %502 = vmatpush1.bf16.msra.mxu0 0
        %503 = vmatprep.subr.bf16.mxu0 0
        %504 = vmatpush1.bf16.msra.mxu0 0
        %505 = vmatprep.subr.bf16.mxu0 0
        %506 = vmatpush1.bf16.msra.mxu0 0
        %507 = vmatprep.subr.bf16.mxu0 0
        %508 = vmatpush1.bf16.msra.mxu0 0
        %509 = vmatprep.subr.bf16.mxu0 0
        %510 = vmatpush1.bf16.msra.mxu0 0
        %511 = vmatprep.subr.bf16.mxu0 0
        %512 = vmatpush1.bf16.msra.mxu0 0
        %513 = vmatprep.subr.bf16.mxu0 0
        %514 = vmatpush1.bf16.msra.mxu0 0
        %515 = vmatprep.subr.bf16.mxu0 0
        %516 = vmatpush1.bf16.msra.mxu0 0
        %517 = vmatprep.subr.bf16.mxu0 0
        %518 = vmatpush1.bf16.msra.mxu0 0
        %519 = vmatprep.subr.bf16.mxu0 0
        %520 = vmatpush1.bf16.msra.mxu0 0
        %521 = vmatprep.subr.bf16.mxu0 0
        %522 = vmatpush1.bf16.msra.mxu0 0
        %523 = vmatprep.subr.bf16.mxu0 0
        %524 = vmatpush1.bf16.msra.mxu0 0
        %525 = vmatprep.subr.bf16.mxu0 0
        %526 = vmatpush1.bf16.msra.mxu0 0
        %527 = vmatprep.subr.bf16.mxu0 0
        %528 = vmatpush1.bf16.msra.mxu0 0
        %529 = vmatprep.mubr.bf16.mxu0 0
        %530 = vmatmul.mubr.bf16.gmra.mrb[0].mxu0 %v492
        %v531 = vpop.f32.mrb[0].mxu0
        %v532 = vadd.f32 0.0, %v531
        %v533 = vpop.f32.mrb[0].mxu0
        %v534 = vpop.f32.mrb[0].mxu0
        %v535 = vpop.f32.mrb[0].mxu0
        %536 = vdwg.mxu0
        %v537 = vadd.f32 %v488, %v532
        %s538 = sadd.s32 %s224, 2
        %s539 = smul.addr %s538, 2
        %s540 = scalar_lea.vmem %s180, %s539 [#allocation2]
        %v541 = vld [vmem:[%s540] sm:$0x3]
        %v543 = vsel %vm238, %v216, 0
        %v546 = vsel %vm242, %v541, 0
        %548 = vmatprep.subr.bf16.mxu0 0
        %549 = vmatpush1.bf16.msra.mxu0 %v546
        %550 = vmatprep.subr.bf16.mxu0 0
        %551 = vmatpush1.bf16.msra.mxu0 0
        %552 = vmatprep.subr.bf16.mxu0 0
        %553 = vmatpush1.bf16.msra.mxu0 0
        %554 = vmatprep.subr.bf16.mxu0 0
        %555 = vmatpush1.bf16.msra.mxu0 0
        %556 = vmatprep.subr.bf16.mxu0 0
        %557 = vmatpush1.bf16.msra.mxu0 0
        %558 = vmatprep.subr.bf16.mxu0 0
        %559 = vmatpush1.bf16.msra.mxu0 0
        %560 = vmatprep.subr.bf16.mxu0 0
        %561 = vmatpush1.bf16.msra.mxu0 0
        %562 = vmatprep.subr.bf16.mxu0 0
        %563 = vmatpush1.bf16.msra.mxu0 0
        %564 = vmatprep.subr.bf16.mxu0 0
        %565 = vmatpush1.bf16.msra.mxu0 0
        %566 = vmatprep.subr.bf16.mxu0 0
        %567 = vmatpush1.bf16.msra.mxu0 0
        %568 = vmatprep.subr.bf16.mxu0 0
        %569 = vmatpush1.bf16.msra.mxu0 0
        %570 = vmatprep.subr.bf16.mxu0 0
        %571 = vmatpush1.bf16.msra.mxu0 0
        %572 = vmatprep.subr.bf16.mxu0 0
        %573 = vmatpush1.bf16.msra.mxu0 0
        %574 = vmatprep.subr.bf16.mxu0 0
        %575 = vmatpush1.bf16.msra.mxu0 0
        %576 = vmatprep.subr.bf16.mxu0 0
        %577 = vmatpush1.bf16.msra.mxu0 0
        %578 = vmatprep.subr.bf16.mxu0 0
        %579 = vmatpush1.bf16.msra.mxu0 0
        %580 = vmatprep.mubr.bf16.mxu0 0
        %581 = vmatmul.mubr.bf16.gmra.mrb[0].mxu0 %v543
        %v582 = vpop.f32.mrb[0].mxu0
        %v583 = vadd.f32 0.0, %v582
        %v584 = vpop.f32.mrb[0].mxu0
        %v585 = vpop.f32.mrb[0].mxu0
        %v586 = vpop.f32.mrb[0].mxu0
        %587 = vdwg.mxu0
        %v588 = vadd.f32 %v537, %v583
        %v591 = vunpack.c.l.s4 1983009808
        %v592 = vunpack.c.0.s8 %v591
        %v593 = vlaneseq
        %v594 = vshrl.u32 %v593, 7
        %v595 = vsub.s32 %v592, %v594
        %v596 = vrot.slane %v541, %v595
        %597 = vrot.lane.b32.xlu0 %v596, 127
        %v598 = vpop.permute.xlu0 %597
        %v600 = vsel %vm238, %v218, 0
        %v603 = vsel %vm242, %v598, 0
        %605 = vmatprep.subr.bf16.mxu0 0
        %606 = vmatpush1.bf16.msra.mxu0 %v603
        %607 = vmatprep.subr.bf16.mxu0 0
        %608 = vmatpush1.bf16.msra.mxu0 0
        %609 = vmatprep.subr.bf16.mxu0 0
        %610 = vmatpush1.bf16.msra.mxu0 0
        %611 = vmatprep.subr.bf16.mxu0 0
        %612 = vmatpush1.bf16.msra.mxu0 0
        %613 = vmatprep.subr.bf16.mxu0 0
        %614 = vmatpush1.bf16.msra.mxu0 0
        %615 = vmatprep.subr.bf16.mxu0 0
        %616 = vmatpush1.bf16.msra.mxu0 0
        %617 = vmatprep.subr.bf16.mxu0 0
        %618 = vmatpush1.bf16.msra.mxu0 0
        %619 = vmatprep.subr.bf16.mxu0 0
        %620 = vmatpush1.bf16.msra.mxu0 0
        %621 = vmatprep.subr.bf16.mxu0 0
        %622 = vmatpush1.bf16.msra.mxu0 0
        %623 = vmatprep.subr.bf16.mxu0 0
        %624 = vmatpush1.bf16.msra.mxu0 0
        %625 = vmatprep.subr.bf16.mxu0 0
        %626 = vmatpush1.bf16.msra.mxu0 0
        %627 = vmatprep.subr.bf16.mxu0 0
        %628 = vmatpush1.bf16.msra.mxu0 0
        %629 = vmatprep.subr.bf16.mxu0 0
        %630 = vmatpush1.bf16.msra.mxu0 0
        %631 = vmatprep.subr.bf16.mxu0 0
        %632 = vmatpush1.bf16.msra.mxu0 0
        %633 = vmatprep.subr.bf16.mxu0 0
        %634 = vmatpush1.bf16.msra.mxu0 0
        %635 = vmatprep.subr.bf16.mxu0 0
        %636 = vmatpush1.bf16.msra.mxu0 0
        %637 = vmatprep.mubr.bf16.mxu0 0
        %638 = vmatmul.mubr.bf16.gmra.mrb[0].mxu0 %v600
        %v639 = vpop.f32.mrb[0].mxu0
        %v640 = vadd.f32 0.0, %v639
        %v641 = vpop.f32.mrb[0].mxu0
        %v642 = vpop.f32.mrb[0].mxu0
        %v643 = vpop.f32.mrb[0].mxu0
        %644 = vdwg.mxu0
        %v645 = vadd.f32 %v588, %v640
        %646 = vrot.lane.b32.xlu0 %v596, 126
        %v647 = vpop.permute.xlu0 %646
        %v649 = vsel %vm238, %v220, 0
        %v652 = vsel %vm242, %v647, 0
        %654 = vmatprep.subr.bf16.mxu0 0
        %655 = vmatpush1.bf16.msra.mxu0 %v652
        %656 = vmatprep.subr.bf16.mxu0 0
        %657 = vmatpush1.bf16.msra.mxu0 0
        %658 = vmatprep.subr.bf16.mxu0 0
        %659 = vmatpush1.bf16.msra.mxu0 0
        %660 = vmatprep.subr.bf16.mxu0 0
        %661 = vmatpush1.bf16.msra.mxu0 0
        %662 = vmatprep.subr.bf16.mxu0 0
        %663 = vmatpush1.bf16.msra.mxu0 0
        %664 = vmatprep.subr.bf16.mxu0 0
        %665 = vmatpush1.bf16.msra.mxu0 0
        %666 = vmatprep.subr.bf16.mxu0 0
        %667 = vmatpush1.bf16.msra.mxu0 0
        %668 = vmatprep.subr.bf16.mxu0 0
        %669 = vmatpush1.bf16.msra.mxu0 0
        %670 = vmatprep.subr.bf16.mxu0 0
        %671 = vmatpush1.bf16.msra.mxu0 0
        %672 = vmatprep.subr.bf16.mxu0 0
        %673 = vmatpush1.bf16.msra.mxu0 0
        %674 = vmatprep.subr.bf16.mxu0 0
        %675 = vmatpush1.bf16.msra.mxu0 0
        %676 = vmatprep.subr.bf16.mxu0 0
        %677 = vmatpush1.bf16.msra.mxu0 0
        %678 = vmatprep.subr.bf16.mxu0 0
        %679 = vmatpush1.bf16.msra.mxu0 0
        %680 = vmatprep.subr.bf16.mxu0 0
        %681 = vmatpush1.bf16.msra.mxu0 0
        %682 = vmatprep.subr.bf16.mxu0 0
        %683 = vmatpush1.bf16.msra.mxu0 0
        %684 = vmatprep.subr.bf16.mxu0 0
        %685 = vmatpush1.bf16.msra.mxu0 0
        %686 = vmatprep.mubr.bf16.mxu0 0
        %687 = vmatmul.mubr.bf16.gmra.mrb[0].mxu0 %v649
        %v688 = vpop.f32.mrb[0].mxu0
        %v689 = vadd.f32 0.0, %v688
        %v690 = vpop.f32.mrb[0].mxu0
        %v691 = vpop.f32.mrb[0].mxu0
        %v692 = vpop.f32.mrb[0].mxu0
        %693 = vdwg.mxu0
        %v694 = vadd.f32 %v645, %v689
        %696 = vset.pattern.permute.xlu0 0
        %697 = vperm.xlu0 %696, %v221
        %v698 = vpop.permute.xlu0 %697
        %v700 = vadd.f32 %v694, %v698
        %vm701 = vcmp.gt.f32.partialorder %v700, 0.0
        %v702 = vmul.f32 %v700, 0.1
        %v703 = vsel %vm701, %v700, %v702
        %v705 = vcombine.high %v703, %v703
        %v707 = vunpack.c.l.s4 1966171168
        %v708 = vunpack.c.0.s8 %v707
        %v709 = vlaneseq
        %v710 = vshrl.u32 %v709, 7
        %v711 = vsub.s32 %v708, %v710
        %v712 = vrot.slane %v703, %v711
        %v714 = vunpack.c.l.s4 1966171168
        %v715 = vunpack.c.0.s8 %v714
        %v716 = vlaneseq
        %v717 = vshrl.u32 %v716, 7
        %v718 = vsub.s32 %v715, %v717
        %v719 = vrot.slane %v705, %v718
        %v720 = vcombine.high %v712, %v712
        %v721 = vcombine.high %v719, %v719
        %v723 = vunpack.c.l.s4 1966171168
        %v724 = vunpack.c.0.s8 %v723
        %v725 = vlaneseq
        %v726 = vshrl.u32 %v725, 7
        %v727 = vsub.s32 %v724, %v726
        %v728 = vrot.slane %v712, %v727
        %v730 = vunpack.c.l.s4 1966171168
        %v731 = vunpack.c.0.s8 %v730
        %v732 = vlaneseq
        %v733 = vshrl.u32 %v732, 7
        %v734 = vsub.s32 %v731, %v733
        %v735 = vrot.slane %v719, %v734
        %v737 = vunpack.c.l.s4 1966171168
        %v738 = vunpack.c.0.s8 %v737
        %v739 = vlaneseq
        %v740 = vshrl.u32 %v739, 7
        %v741 = vsub.s32 %v738, %v740
        %v742 = vrot.slane %v720, %v741
        %v744 = vunpack.c.l.s4 1966171168
        %v745 = vunpack.c.0.s8 %v744
        %v746 = vlaneseq
        %v747 = vshrl.u32 %v746, 7
        %v748 = vsub.s32 %v745, %v747
        %v749 = vrot.slane %v721, %v748
        %v750 = vcombine.high %v728, %v728
        %v751 = vcombine.high %v735, %v735
        %v752 = vcombine.high %v742, %v742
        %v753 = vcombine.high %v749, %v749
        %vm762 = vcmask 122880
        %763 = vst.msk [vmem:[%s202] sm:$0x1] %vm762, %v728
        %764 = vst.msk [vmem:[%s202 + $0x8] sm:$0x1] %vm762, %v742
        %765 = vst.msk [vmem:[%s202 + $0x10] sm:$0x1] %vm762, %v750
        %766 = vst.msk [vmem:[%s202 + $0x18] sm:$0x1] %vm762, %v752
        %767 = vst.msk [vmem:[%s202 + $0x20] sm:$0x1] %vm762, %v735
        %768 = vst.msk [vmem:[%s202 + $0x28] sm:$0x1] %vm762, %v749
        %769 = vst.msk [vmem:[%s202 + $0x30] sm:$0x1] %vm762, %v751
        %770 = vst.msk [vmem:[%s202 + $0x38] sm:$0x1] %vm762, %v753
        %s771 = sadd.s32 %s222, 1
        %p772 = scmp.lt.s32.totalorder %s771, 15
        %s773 = scalar_select %p772, %s771, 15
        %s774 = smul.addr %s773, 2
        %s775 = scalar_lea.vmem %s180, %s774 [#allocation2]
        %v776 = vld [vmem:[%s775] sm:$0x3]
        %v779 = vunpack.c.l.s4 1983009808
        %v780 = vunpack.c.0.s8 %v779
        %v781 = vlaneseq
        %v782 = vshrl.u32 %v781, 7
        %v783 = vsub.s32 %v780, %v782
        %v784 = vrot.slane %v776, %v783
        %785 = vrot.lane.b32.xlu0 %v784, 127
        %v786 = vpop.permute.xlu0 %785
        %v788 = vsel %vm242, %v786, 0
        %790 = vmatprep.subr.bf16.mxu0 0
        %791 = vmatpush1.bf16.msra.mxu0 %v788
        %792 = vmatprep.subr.bf16.mxu0 0
        %793 = vmatpush1.bf16.msra.mxu0 0
        %794 = vmatprep.subr.bf16.mxu0 0
        %795 = vmatpush1.bf16.msra.mxu0 0
        %796 = vmatprep.subr.bf16.mxu0 0
        %797 = vmatpush1.bf16.msra.mxu0 0
        %798 = vmatprep.subr.bf16.mxu0 0
        %799 = vmatpush1.bf16.msra.mxu0 0
        %800 = vmatprep.subr.bf16.mxu0 0
        %801 = vmatpush1.bf16.msra.mxu0 0
        %802 = vmatprep.subr.bf16.mxu0 0
        %803 = vmatpush1.bf16.msra.mxu0 0
        %804 = vmatprep.subr.bf16.mxu0 0
        %805 = vmatpush1.bf16.msra.mxu0 0
        %806 = vmatprep.subr.bf16.mxu0 0
        %807 = vmatpush1.bf16.msra.mxu0 0
        %808 = vmatprep.subr.bf16.mxu0 0
        %809 = vmatpush1.bf16.msra.mxu0 0
        %810 = vmatprep.subr.bf16.mxu0 0
        %811 = vmatpush1.bf16.msra.mxu0 0
        %812 = vmatprep.subr.bf16.mxu0 0
        %813 = vmatpush1.bf16.msra.mxu0 0
        %814 = vmatprep.subr.bf16.mxu0 0
        %815 = vmatpush1.bf16.msra.mxu0 0
        %816 = vmatprep.subr.bf16.mxu0 0
        %817 = vmatpush1.bf16.msra.mxu0 0
        %818 = vmatprep.subr.bf16.mxu0 0
        %819 = vmatpush1.bf16.msra.mxu0 0
        %820 = vmatprep.subr.bf16.mxu0 0
        %821 = vmatpush1.bf16.msra.mxu0 0
        %822 = vmatprep.mubr.bf16.mxu0 0
        %823 = vmatmul.mubr.bf16.gmra.mrb[0].mxu0 %v240
        %v824 = vpop.f32.mrb[0].mxu0
        %v825 = vadd.f32 0.0, %v824
        %v826 = vpop.f32.mrb[0].mxu0
        %v827 = vpop.f32.mrb[0].mxu0
        %v828 = vpop.f32.mrb[0].mxu0
        %829 = vdwg.mxu0
        %v831 = vsel %vm242, %v776, 0
        %833 = vmatprep.subr.bf16.mxu0 0
        %834 = vmatpush1.bf16.msra.mxu0 %v831
        %835 = vmatprep.subr.bf16.mxu0 0
        %836 = vmatpush1.bf16.msra.mxu0 0
        %837 = vmatprep.subr.bf16.mxu0 0
        %838 = vmatpush1.bf16.msra.mxu0 0
        %839 = vmatprep.subr.bf16.mxu0 0
        %840 = vmatpush1.bf16.msra.mxu0 0
        %841 = vmatprep.subr.bf16.mxu0 0
        %842 = vmatpush1.bf16.msra.mxu0 0
        %843 = vmatprep.subr.bf16.mxu0 0
        %844 = vmatpush1.bf16.msra.mxu0 0
        %845 = vmatprep.subr.bf16.mxu0 0
        %846 = vmatpush1.bf16.msra.mxu0 0
        %847 = vmatprep.subr.bf16.mxu0 0
        %848 = vmatpush1.bf16.msra.mxu0 0
        %849 = vmatprep.subr.bf16.mxu0 0
        %850 = vmatpush1.bf16.msra.mxu0 0
        %851 = vmatprep.subr.bf16.mxu0 0
        %852 = vmatpush1.bf16.msra.mxu0 0
        %853 = vmatprep.subr.bf16.mxu0 0
        %854 = vmatpush1.bf16.msra.mxu0 0
        %855 = vmatprep.subr.bf16.mxu0 0
        %856 = vmatpush1.bf16.msra.mxu0 0
        %857 = vmatprep.subr.bf16.mxu0 0
        %858 = vmatpush1.bf16.msra.mxu0 0
        %859 = vmatprep.subr.bf16.mxu0 0
        %860 = vmatpush1.bf16.msra.mxu0 0
        %861 = vmatprep.subr.bf16.mxu0 0
        %862 = vmatpush1.bf16.msra.mxu0 0
        %863 = vmatprep.subr.bf16.mxu0 0
        %864 = vmatpush1.bf16.msra.mxu0 0
        %865 = vmatprep.mubr.bf16.mxu0 0
        %866 = vmatmul.mubr.bf16.gmra.mrb[0].mxu0 %v287
        %v867 = vpop.f32.mrb[0].mxu0
        %v868 = vadd.f32 %v825, %v867
        %v869 = vpop.f32.mrb[0].mxu0
        %v870 = vpop.f32.mrb[0].mxu0
        %v871 = vpop.f32.mrb[0].mxu0
        %872 = vdwg.mxu0
        %873 = vrot.lane.b32.xlu0 %v784, 126
        %v874 = vpop.permute.xlu0 %873
        %v876 = vsel %vm242, %v874, 0
        %878 = vmatprep.subr.bf16.mxu0 0
        %879 = vmatpush1.bf16.msra.mxu0 %v876
        %880 = vmatprep.subr.bf16.mxu0 0
        %881 = vmatpush1.bf16.msra.mxu0 0
        %882 = vmatprep.subr.bf16.mxu0 0
        %883 = vmatpush1.bf16.msra.mxu0 0
        %884 = vmatprep.subr.bf16.mxu0 0
        %885 = vmatpush1.bf16.msra.mxu0 0
        %886 = vmatprep.subr.bf16.mxu0 0
        %887 = vmatpush1.bf16.msra.mxu0 0
        %888 = vmatprep.subr.bf16.mxu0 0
        %889 = vmatpush1.bf16.msra.mxu0 0
        %890 = vmatprep.subr.bf16.mxu0 0
        %891 = vmatpush1.bf16.msra.mxu0 0
        %892 = vmatprep.subr.bf16.mxu0 0
        %893 = vmatpush1.bf16.msra.mxu0 0
        %894 = vmatprep.subr.bf16.mxu0 0
        %895 = vmatpush1.bf16.msra.mxu0 0
        %896 = vmatprep.subr.bf16.mxu0 0
        %897 = vmatpush1.bf16.msra.mxu0 0
        %898 = vmatprep.subr.bf16.mxu0 0
        %899 = vmatpush1.bf16.msra.mxu0 0
        %900 = vmatprep.subr.bf16.mxu0 0
        %901 = vmatpush1.bf16.msra.mxu0 0
        %902 = vmatprep.subr.bf16.mxu0 0
        %903 = vmatpush1.bf16.msra.mxu0 0
        %904 = vmatprep.subr.bf16.mxu0 0
        %905 = vmatpush1.bf16.msra.mxu0 0
        %906 = vmatprep.subr.bf16.mxu0 0
        %907 = vmatpush1.bf16.msra.mxu0 0
        %908 = vmatprep.subr.bf16.mxu0 0
        %909 = vmatpush1.bf16.msra.mxu0 0
        %910 = vmatprep.mubr.bf16.mxu0 0
        %911 = vmatmul.mubr.bf16.gmra.mrb[0].mxu0 %v335
        %v912 = vpop.f32.mrb[0].mxu0
        %v913 = vadd.f32 0.0, %v912
        %v914 = vpop.f32.mrb[0].mxu0
        %v915 = vpop.f32.mrb[0].mxu0
        %v916 = vpop.f32.mrb[0].mxu0
        %917 = vdwg.mxu0
        %v918 = vadd.f32 %v868, %v913
        %s919 = sadd.s32 %s773, 1
        %s920 = smul.addr %s919, 2
        %s921 = scalar_lea.vmem %s180, %s920 [#allocation2]
        %v922 = vld [vmem:[%s921] sm:$0x3]
        %v924 = vsel %vm242, %v922, 0
        %926 = vmatprep.subr.bf16.mxu0 0
        %927 = vmatpush1.bf16.msra.mxu0 %v924
        %928 = vmatprep.subr.bf16.mxu0 0
        %929 = vmatpush1.bf16.msra.mxu0 0
        %930 = vmatprep.subr.bf16.mxu0 0
        %931 = vmatpush1.bf16.msra.mxu0 0
        %932 = vmatprep.subr.bf16.mxu0 0
        %933 = vmatpush1.bf16.msra.mxu0 0
        %934 = vmatprep.subr.bf16.mxu0 0
        %935 = vmatpush1.bf16.msra.mxu0 0
        %936 = vmatprep.subr.bf16.mxu0 0
        %937 = vmatpush1.bf16.msra.mxu0 0
        %938 = vmatprep.subr.bf16.mxu0 0
        %939 = vmatpush1.bf16.msra.mxu0 0
        %940 = vmatprep.subr.bf16.mxu0 0
        %941 = vmatpush1.bf16.msra.mxu0 0
        %942 = vmatprep.subr.bf16.mxu0 0
        %943 = vmatpush1.bf16.msra.mxu0 0
        %944 = vmatprep.subr.bf16.mxu0 0
        %945 = vmatpush1.bf16.msra.mxu0 0
        %946 = vmatprep.subr.bf16.mxu0 0
        %947 = vmatpush1.bf16.msra.mxu0 0
        %948 = vmatprep.subr.bf16.mxu0 0
        %949 = vmatpush1.bf16.msra.mxu0 0
        %950 = vmatprep.subr.bf16.mxu0 0
        %951 = vmatpush1.bf16.msra.mxu0 0
        %952 = vmatprep.subr.bf16.mxu0 0
        %953 = vmatpush1.bf16.msra.mxu0 0
        %954 = vmatprep.subr.bf16.mxu0 0
        %955 = vmatpush1.bf16.msra.mxu0 0
        %956 = vmatprep.subr.bf16.mxu0 0
        %957 = vmatpush1.bf16.msra.mxu0 0
        %958 = vmatprep.mubr.bf16.mxu0 0
        %959 = vmatmul.mubr.bf16.gmra.mrb[0].mxu0 %v386
        %v960 = vpop.f32.mrb[0].mxu0
        %v961 = vadd.f32 0.0, %v960
        %v962 = vpop.f32.mrb[0].mxu0
        %v963 = vpop.f32.mrb[0].mxu0
        %v964 = vpop.f32.mrb[0].mxu0
        %965 = vdwg.mxu0
        %v966 = vadd.f32 %v918, %v961
        %v969 = vunpack.c.l.s4 1983009808
        %v970 = vunpack.c.0.s8 %v969
        %v971 = vlaneseq
        %v972 = vshrl.u32 %v971, 7
        %v973 = vsub.s32 %v970, %v972
        %v974 = vrot.slane %v922, %v973
        %975 = vrot.lane.b32.xlu0 %v974, 127
        %v976 = vpop.permute.xlu0 %975
        %v978 = vsel %vm242, %v976, 0
        %980 = vmatprep.subr.bf16.mxu0 0
        %981 = vmatpush1.bf16.msra.mxu0 %v978
        %982 = vmatprep.subr.bf16.mxu0 0
        %983 = vmatpush1.bf16.msra.mxu0 0
        %984 = vmatprep.subr.bf16.mxu0 0
        %985 = vmatpush1.bf16.msra.mxu0 0
        %986 = vmatprep.subr.bf16.mxu0 0
        %987 = vmatpush1.bf16.msra.mxu0 0
        %988 = vmatprep.subr.bf16.mxu0 0
        %989 = vmatpush1.bf16.msra.mxu0 0
        %990 = vmatprep.subr.bf16.mxu0 0
        %991 = vmatpush1.bf16.msra.mxu0 0
        %992 = vmatprep.subr.bf16.mxu0 0
        %993 = vmatpush1.bf16.msra.mxu0 0
        %994 = vmatprep.subr.bf16.mxu0 0
        %995 = vmatpush1.bf16.msra.mxu0 0
        %996 = vmatprep.subr.bf16.mxu0 0
        %997 = vmatpush1.bf16.msra.mxu0 0
        %998 = vmatprep.subr.bf16.mxu0 0
        %999 = vmatpush1.bf16.msra.mxu0 0
        %1000 = vmatprep.subr.bf16.mxu0 0
        %1001 = vmatpush1.bf16.msra.mxu0 0
        %1002 = vmatprep.subr.bf16.mxu0 0
        %1003 = vmatpush1.bf16.msra.mxu0 0
        %1004 = vmatprep.subr.bf16.mxu0 0
        %1005 = vmatpush1.bf16.msra.mxu0 0
        %1006 = vmatprep.subr.bf16.mxu0 0
        %1007 = vmatpush1.bf16.msra.mxu0 0
        %1008 = vmatprep.subr.bf16.mxu0 0
        %1009 = vmatpush1.bf16.msra.mxu0 0
        %1010 = vmatprep.subr.bf16.mxu0 0
        %1011 = vmatpush1.bf16.msra.mxu0 0
        %1012 = vmatprep.mubr.bf16.mxu0 0
        %1013 = vmatmul.mubr.bf16.gmra.mrb[0].mxu0 %v443
        %v1014 = vpop.f32.mrb[0].mxu0
        %v1015 = vadd.f32 0.0, %v1014
        %v1016 = vpop.f32.mrb[0].mxu0
        %v1017 = vpop.f32.mrb[0].mxu0
        %v1018 = vpop.f32.mrb[0].mxu0
        %1019 = vdwg.mxu0
        %v1020 = vadd.f32 %v966, %v1015
        %1021 = vrot.lane.b32.xlu0 %v974, 126
        %v1022 = vpop.permute.xlu0 %1021
        %v1024 = vsel %vm242, %v1022, 0
        %1026 = vmatprep.subr.bf16.mxu0 0
        %1027 = vmatpush1.bf16.msra.mxu0 %v1024
        %1028 = vmatprep.subr.bf16.mxu0 0
        %1029 = vmatpush1.bf16.msra.mxu0 0
        %1030 = vmatprep.subr.bf16.mxu0 0
        %1031 = vmatpush1.bf16.msra.mxu0 0
        %1032 = vmatprep.subr.bf16.mxu0 0
        %1033 = vmatpush1.bf16.msra.mxu0 0
        %1034 = vmatprep.subr.bf16.mxu0 0
        %1035 = vmatpush1.bf16.msra.mxu0 0
        %1036 = vmatprep.subr.bf16.mxu0 0
        %1037 = vmatpush1.bf16.msra.mxu0 0
        %1038 = vmatprep.subr.bf16.mxu0 0
        %1039 = vmatpush1.bf16.msra.mxu0 0
        %1040 = vmatprep.subr.bf16.mxu0 0
        %1041 = vmatpush1.bf16.msra.mxu0 0
        %1042 = vmatprep.subr.bf16.mxu0 0
        %1043 = vmatpush1.bf16.msra.mxu0 0
        %1044 = vmatprep.subr.bf16.mxu0 0
        %1045 = vmatpush1.bf16.msra.mxu0 0
        %1046 = vmatprep.subr.bf16.mxu0 0
        %1047 = vmatpush1.bf16.msra.mxu0 0
        %1048 = vmatprep.subr.bf16.mxu0 0
        %1049 = vmatpush1.bf16.msra.mxu0 0
        %1050 = vmatprep.subr.bf16.mxu0 0
        %1051 = vmatpush1.bf16.msra.mxu0 0
        %1052 = vmatprep.subr.bf16.mxu0 0
        %1053 = vmatpush1.bf16.msra.mxu0 0
        %1054 = vmatprep.subr.bf16.mxu0 0
        %1055 = vmatpush1.bf16.msra.mxu0 0
        %1056 = vmatprep.subr.bf16.mxu0 0
        %1057 = vmatpush1.bf16.msra.mxu0 0
        %1058 = vmatprep.mubr.bf16.mxu0 0
        %1059 = vmatmul.mubr.bf16.gmra.mrb[0].mxu0 %v492
        %v1060 = vpop.f32.mrb[0].mxu0
        %v1061 = vadd.f32 0.0, %v1060
        %v1062 = vpop.f32.mrb[0].mxu0
        %v1063 = vpop.f32.mrb[0].mxu0
        %v1064 = vpop.f32.mrb[0].mxu0
        %1065 = vdwg.mxu0
        %v1066 = vadd.f32 %v1020, %v1061
        %s1067 = sadd.s32 %s773, 2
        %s1068 = smul.addr %s1067, 2
        %s1069 = scalar_lea.vmem %s180, %s1068 [#allocation2]
        %v1070 = vld [vmem:[%s1069] sm:$0x3]
        %v1072 = vsel %vm242, %v1070, 0
        %1074 = vmatprep.subr.bf16.mxu0 0
        %1075 = vmatpush1.bf16.msra.mxu0 %v1072
        %1076 = vmatprep.subr.bf16.mxu0 0
        %1077 = vmatpush1.bf16.msra.mxu0 0
        %1078 = vmatprep.subr.bf16.mxu0 0
        %1079 = vmatpush1.bf16.msra.mxu0 0
        %1080 = vmatprep.subr.bf16.mxu0 0
        %1081 = vmatpush1.bf16.msra.mxu0 0
        %1082 = vmatprep.subr.bf16.mxu0 0
        %1083 = vmatpush1.bf16.msra.mxu0 0
        %1084 = vmatprep.subr.bf16.mxu0 0
        %1085 = vmatpush1.bf16.msra.mxu0 0
        %1086 = vmatprep.subr.bf16.mxu0 0
        %1087 = vmatpush1.bf16.msra.mxu0 0
        %1088 = vmatprep.subr.bf16.mxu0 0
        %1089 = vmatpush1.bf16.msra.mxu0 0
        %1090 = vmatprep.subr.bf16.mxu0 0
        %1091 = vmatpush1.bf16.msra.mxu0 0
        %1092 = vmatprep.subr.bf16.mxu0 0
        %1093 = vmatpush1.bf16.msra.mxu0 0
        %1094 = vmatprep.subr.bf16.mxu0 0
        %1095 = vmatpush1.bf16.msra.mxu0 0
        %1096 = vmatprep.subr.bf16.mxu0 0
        %1097 = vmatpush1.bf16.msra.mxu0 0
        %1098 = vmatprep.subr.bf16.mxu0 0
        %1099 = vmatpush1.bf16.msra.mxu0 0
        %1100 = vmatprep.subr.bf16.mxu0 0
        %1101 = vmatpush1.bf16.msra.mxu0 0
        %1102 = vmatprep.subr.bf16.mxu0 0
        %1103 = vmatpush1.bf16.msra.mxu0 0
        %1104 = vmatprep.subr.bf16.mxu0 0
        %1105 = vmatpush1.bf16.msra.mxu0 0
        %1106 = vmatprep.mubr.bf16.mxu0 0
        %1107 = vmatmul.mubr.bf16.gmra.mrb[0].mxu0 %v543
        %v1108 = vpop.f32.mrb[0].mxu0
        %v1109 = vadd.f32 0.0, %v1108
        %v1110 = vpop.f32.mrb[0].mxu0
        %v1111 = vpop.f32.mrb[0].mxu0
        %v1112 = vpop.f32.mrb[0].mxu0
        %1113 = vdwg.mxu0
        %v1114 = vadd.f32 %v1066, %v1109
        %v1117 = vunpack.c.l.s4 1983009808
        %v1118 = vunpack.c.0.s8 %v1117
        %v1119 = vlaneseq
        %v1120 = vshrl.u32 %v1119, 7
        %v1121 = vsub.s32 %v1118, %v1120
        %v1122 = vrot.slane %v1070, %v1121
        %1123 = vrot.lane.b32.xlu0 %v1122, 127
        %v1124 = vpop.permute.xlu0 %1123
        %v1126 = vsel %vm242, %v1124, 0
        %1128 = vmatprep.subr.bf16.mxu0 0
        %1129 = vmatpush1.bf16.msra.mxu0 %v1126
        %1130 = vmatprep.subr.bf16.mxu0 0
        %1131 = vmatpush1.bf16.msra.mxu0 0
        %1132 = vmatprep.subr.bf16.mxu0 0
        %1133 = vmatpush1.bf16.msra.mxu0 0
        %1134 = vmatprep.subr.bf16.mxu0 0
        %1135 = vmatpush1.bf16.msra.mxu0 0
        %1136 = vmatprep.subr.bf16.mxu0 0
        %1137 = vmatpush1.bf16.msra.mxu0 0
        %1138 = vmatprep.subr.bf16.mxu0 0
        %1139 = vmatpush1.bf16.msra.mxu0 0
        %1140 = vmatprep.subr.bf16.mxu0 0
        %1141 = vmatpush1.bf16.msra.mxu0 0
        %1142 = vmatprep.subr.bf16.mxu0 0
        %1143 = vmatpush1.bf16.msra.mxu0 0
        %1144 = vmatprep.subr.bf16.mxu0 0
        %1145 = vmatpush1.bf16.msra.mxu0 0
        %1146 = vmatprep.subr.bf16.mxu0 0
        %1147 = vmatpush1.bf16.msra.mxu0 0
        %1148 = vmatprep.subr.bf16.mxu0 0
        %1149 = vmatpush1.bf16.msra.mxu0 0
        %1150 = vmatprep.subr.bf16.mxu0 0
        %1151 = vmatpush1.bf16.msra.mxu0 0
        %1152 = vmatprep.subr.bf16.mxu0 0
        %1153 = vmatpush1.bf16.msra.mxu0 0
        %1154 = vmatprep.subr.bf16.mxu0 0
        %1155 = vmatpush1.bf16.msra.mxu0 0
        %1156 = vmatprep.subr.bf16.mxu0 0
        %1157 = vmatpush1.bf16.msra.mxu0 0
        %1158 = vmatprep.subr.bf16.mxu0 0
        %1159 = vmatpush1.bf16.msra.mxu0 0
        %1160 = vmatprep.mubr.bf16.mxu0 0
        %1161 = vmatmul.mubr.bf16.gmra.mrb[0].mxu0 %v600
        %v1162 = vpop.f32.mrb[0].mxu0
        %v1163 = vadd.f32 0.0, %v1162
        %v1164 = vpop.f32.mrb[0].mxu0
        %v1165 = vpop.f32.mrb[0].mxu0
        %v1166 = vpop.f32.mrb[0].mxu0
        %1167 = vdwg.mxu0
        %v1168 = vadd.f32 %v1114, %v1163
        %1169 = vrot.lane.b32.xlu0 %v1122, 126
        %v1170 = vpop.permute.xlu0 %1169
        %v1172 = vsel %vm242, %v1170, 0
        %1174 = vmatprep.subr.bf16.mxu0 0
        %1175 = vmatpush1.bf16.msra.mxu0 %v1172
        %1176 = vmatprep.subr.bf16.mxu0 0
        %1177 = vmatpush1.bf16.msra.mxu0 0
        %1178 = vmatprep.subr.bf16.mxu0 0
        %1179 = vmatpush1.bf16.msra.mxu0 0
        %1180 = vmatprep.subr.bf16.mxu0 0
        %1181 = vmatpush1.bf16.msra.mxu0 0
        %1182 = vmatprep.subr.bf16.mxu0 0
        %1183 = vmatpush1.bf16.msra.mxu0 0
        %1184 = vmatprep.subr.bf16.mxu0 0
        %1185 = vmatpush1.bf16.msra.mxu0 0
        %1186 = vmatprep.subr.bf16.mxu0 0
        %1187 = vmatpush1.bf16.msra.mxu0 0
        %1188 = vmatprep.subr.bf16.mxu0 0
        %1189 = vmatpush1.bf16.msra.mxu0 0
        %1190 = vmatprep.subr.bf16.mxu0 0
        %1191 = vmatpush1.bf16.msra.mxu0 0
        %1192 = vmatprep.subr.bf16.mxu0 0
        %1193 = vmatpush1.bf16.msra.mxu0 0
        %1194 = vmatprep.subr.bf16.mxu0 0
        %1195 = vmatpush1.bf16.msra.mxu0 0
        %1196 = vmatprep.subr.bf16.mxu0 0
        %1197 = vmatpush1.bf16.msra.mxu0 0
        %1198 = vmatprep.subr.bf16.mxu0 0
        %1199 = vmatpush1.bf16.msra.mxu0 0
        %1200 = vmatprep.subr.bf16.mxu0 0
        %1201 = vmatpush1.bf16.msra.mxu0 0
        %1202 = vmatprep.subr.bf16.mxu0 0
        %1203 = vmatpush1.bf16.msra.mxu0 0
        %1204 = vmatprep.subr.bf16.mxu0 0
        %1205 = vmatpush1.bf16.msra.mxu0 0
        %1206 = vmatprep.mubr.bf16.mxu0 0
        %1207 = vmatmul.mubr.bf16.gmra.mrb[0].mxu0 %v649
        %v1208 = vpop.f32.mrb[0].mxu0
        %v1209 = vadd.f32 0.0, %v1208
        %v1210 = vpop.f32.mrb[0].mxu0
        %v1211 = vpop.f32.mrb[0].mxu0
        %v1212 = vpop.f32.mrb[0].mxu0
        %1213 = vdwg.mxu0
        %v1214 = vadd.f32 %v1168, %v1209
        %v1215 = vadd.f32 %v1214, %v698
        %vm1216 = vcmp.gt.f32.partialorder %v1215, 0.0
        %v1217 = vmul.f32 %v1215, 0.1
        %v1218 = vsel %vm1216, %v1215, %v1217
        %v1220 = vcombine.high %v1218, %v1218
        %v1222 = vunpack.c.l.s4 1966171168
        %v1223 = vunpack.c.0.s8 %v1222
        %v1224 = vlaneseq
        %v1225 = vshrl.u32 %v1224, 7
        %v1226 = vsub.s32 %v1223, %v1225
        %v1227 = vrot.slane %v1218, %v1226
        %v1229 = vunpack.c.l.s4 1966171168
        %v1230 = vunpack.c.0.s8 %v1229
        %v1231 = vlaneseq
        %v1232 = vshrl.u32 %v1231, 7
        %v1233 = vsub.s32 %v1230, %v1232
        %v1234 = vrot.slane %v1220, %v1233
        %v1235 = vcombine.high %v1227, %v1227
        %v1236 = vcombine.high %v1234, %v1234
        %v1238 = vunpack.c.l.s4 1966171168
        %v1239 = vunpack.c.0.s8 %v1238
        %v1240 = vlaneseq
        %v1241 = vshrl.u32 %v1240, 7
        %v1242 = vsub.s32 %v1239, %v1241
        %v1243 = vrot.slane %v1227, %v1242
        %v1245 = vunpack.c.l.s4 1966171168
        %v1246 = vunpack.c.0.s8 %v1245
        %v1247 = vlaneseq
        %v1248 = vshrl.u32 %v1247, 7
        %v1249 = vsub.s32 %v1246, %v1248
        %v1250 = vrot.slane %v1234, %v1249
        %v1252 = vunpack.c.l.s4 1966171168
        %v1253 = vunpack.c.0.s8 %v1252
        %v1254 = vlaneseq
        %v1255 = vshrl.u32 %v1254, 7
        %v1256 = vsub.s32 %v1253, %v1255
        %v1257 = vrot.slane %v1235, %v1256
        %v1259 = vunpack.c.l.s4 1966171168
        %v1260 = vunpack.c.0.s8 %v1259
        %v1261 = vlaneseq
        %v1262 = vshrl.u32 %v1261, 7
        %v1263 = vsub.s32 %v1260, %v1262
        %v1264 = vrot.slane %v1236, %v1263
        %v1265 = vcombine.high %v1243, %v1243
        %v1266 = vcombine.high %v1250, %v1250
        %v1267 = vcombine.high %v1257, %v1257
        %v1268 = vcombine.high %v1264, %v1264
        %1277 = vst.msk [vmem:[%s202 + $0x1] sm:$0x1] %vm762, %v1243
        %1278 = vst.msk [vmem:[%s202 + $0x9] sm:$0x1] %vm762, %v1257
        %1279 = vst.msk [vmem:[%s202 + $0x11] sm:$0x1] %vm762, %v1265
        %1280 = vst.msk [vmem:[%s202 + $0x19] sm:$0x1] %vm762, %v1267
        %1281 = vst.msk [vmem:[%s202 + $0x21] sm:$0x1] %vm762, %v1250
        %1282 = vst.msk [vmem:[%s202 + $0x29] sm:$0x1] %vm762, %v1264
        %1283 = vst.msk [vmem:[%s202 + $0x31] sm:$0x1] %vm762, %v1266
        %1284 = vst.msk [vmem:[%s202 + $0x39] sm:$0x1] %vm762, %v1268
        %s1285 = sadd.s32 %s222, 2
        %p1286 = scmp.lt.s32.totalorder %s1285, 15
        %s1287 = scalar_select %p1286, %s1285, 15
        %s1288 = smul.addr %s1287, 2
        %s1289 = scalar_lea.vmem %s180, %s1288 [#allocation2]
        %v1290 = vld [vmem:[%s1289] sm:$0x3]
        %v1293 = vunpack.c.l.s4 1983009808
        %v1294 = vunpack.c.0.s8 %v1293
        %v1295 = vlaneseq
        %v1296 = vshrl.u32 %v1295, 7
        %v1297 = vsub.s32 %v1294, %v1296
        %v1298 = vrot.slane %v1290, %v1297
        %1299 = vrot.lane.b32.xlu0 %v1298, 127
        %v1300 = vpop.permute.xlu0 %1299
        %v1302 = vsel %vm242, %v1300, 0
        %1304 = vmatprep.subr.bf16.mxu0 0
        %1305 = vmatpush1.bf16.msra.mxu0 %v1302
        %1306 = vmatprep.subr.bf16.mxu0 0
        %1307 = vmatpush1.bf16.msra.mxu0 0
        %1308 = vmatprep.subr.bf16.mxu0 0
        %1309 = vmatpush1.bf16.msra.mxu0 0
        %1310 = vmatprep.subr.bf16.mxu0 0
        %1311 = vmatpush1.bf16.msra.mxu0 0
        %1312 = vmatprep.subr.bf16.mxu0 0
        %1313 = vmatpush1.bf16.msra.mxu0 0
        %1314 = vmatprep.subr.bf16.mxu0 0
        %1315 = vmatpush1.bf16.msra.mxu0 0
        %1316 = vmatprep.subr.bf16.mxu0 0
        %1317 = vmatpush1.bf16.msra.mxu0 0
        %1318 = vmatprep.subr.bf16.mxu0 0
        %1319 = vmatpush1.bf16.msra.mxu0 0
        %1320 = vmatprep.subr.bf16.mxu0 0
        %1321 = vmatpush1.bf16.msra.mxu0 0
        %1322 = vmatprep.subr.bf16.mxu0 0
        %1323 = vmatpush1.bf16.msra.mxu0 0
        %1324 = vmatprep.subr.bf16.mxu0 0
        %1325 = vmatpush1.bf16.msra.mxu0 0
        %1326 = vmatprep.subr.bf16.mxu0 0
        %1327 = vmatpush1.bf16.msra.mxu0 0
        %1328 = vmatprep.subr.bf16.mxu0 0
        %1329 = vmatpush1.bf16.msra.mxu0 0
        %1330 = vmatprep.subr.bf16.mxu0 0
        %1331 = vmatpush1.bf16.msra.mxu0 0
        %1332 = vmatprep.subr.bf16.mxu0 0
        %1333 = vmatpush1.bf16.msra.mxu0 0
        %1334 = vmatprep.subr.bf16.mxu0 0
        %1335 = vmatpush1.bf16.msra.mxu0 0
        %1336 = vmatprep.mubr.bf16.mxu0 0
        %1337 = vmatmul.mubr.bf16.gmra.mrb[0].mxu0 %v240
        %v1338 = vpop.f32.mrb[0].mxu0
        %v1339 = vadd.f32 0.0, %v1338
        %v1340 = vpop.f32.mrb[0].mxu0
        %v1341 = vpop.f32.mrb[0].mxu0
        %v1342 = vpop.f32.mrb[0].mxu0
        %1343 = vdwg.mxu0
        %v1345 = vsel %vm242, %v1290, 0
        %1347 = vmatprep.subr.bf16.mxu0 0
        %1348 = vmatpush1.bf16.msra.mxu0 %v1345
        %1349 = vmatprep.subr.bf16.mxu0 0
        %1350 = vmatpush1.bf16.msra.mxu0 0
        %1351 = vmatprep.subr.bf16.mxu0 0
        %1352 = vmatpush1.bf16.msra.mxu0 0
        %1353 = vmatprep.subr.bf16.mxu0 0
        %1354 = vmatpush1.bf16.msra.mxu0 0
        %1355 = vmatprep.subr.bf16.mxu0 0
        %1356 = vmatpush1.bf16.msra.mxu0 0
        %1357 = vmatprep.subr.bf16.mxu0 0
        %1358 = vmatpush1.bf16.msra.mxu0 0
        %1359 = vmatprep.subr.bf16.mxu0 0
        %1360 = vmatpush1.bf16.msra.mxu0 0
        %1361 = vmatprep.subr.bf16.mxu0 0
        %1362 = vmatpush1.bf16.msra.mxu0 0
        %1363 = vmatprep.subr.bf16.mxu0 0
        %1364 = vmatpush1.bf16.msra.mxu0 0
        %1365 = vmatprep.subr.bf16.mxu0 0
        %1366 = vmatpush1.bf16.msra.mxu0 0
        %1367 = vmatprep.subr.bf16.mxu0 0
        %1368 = vmatpush1.bf16.msra.mxu0 0
        %1369 = vmatprep.subr.bf16.mxu0 0
        %1370 = vmatpush1.bf16.msra.mxu0 0
        %1371 = vmatprep.subr.bf16.mxu0 0
        %1372 = vmatpush1.bf16.msra.mxu0 0
        %1373 = vmatprep.subr.bf16.mxu0 0
        %1374 = vmatpush1.bf16.msra.mxu0 0
        %1375 = vmatprep.subr.bf16.mxu0 0
        %1376 = vmatpush1.bf16.msra.mxu0 0
        %1377 = vmatprep.subr.bf16.mxu0 0
        %1378 = vmatpush1.bf16.msra.mxu0 0
        %1379 = vmatprep.mubr.bf16.mxu0 0
        %1380 = vmatmul.mubr.bf16.gmra.mrb[0].mxu0 %v287
        %v1381 = vpop.f32.mrb[0].mxu0
        %v1382 = vadd.f32 %v1339, %v1381
        %v1383 = vpop.f32.mrb[0].mxu0
        %v1384 = vpop.f32.mrb[0].mxu0
        %v1385 = vpop.f32.mrb[0].mxu0
        %1386 = vdwg.mxu0
        %1387 = vrot.lane.b32.xlu0 %v1298, 126
        %v1388 = vpop.permute.xlu0 %1387
        %v1390 = vsel %vm242, %v1388, 0
        %1392 = vmatprep.subr.bf16.mxu0 0
        %1393 = vmatpush1.bf16.msra.mxu0 %v1390
        %1394 = vmatprep.subr.bf16.mxu0 0
        %1395 = vmatpush1.bf16.msra.mxu0 0
        %1396 = vmatprep.subr.bf16.mxu0 0
        %1397 = vmatpush1.bf16.msra.mxu0 0
        %1398 = vmatprep.subr.bf16.mxu0 0
        %1399 = vmatpush1.bf16.msra.mxu0 0
        %1400 = vmatprep.subr.bf16.mxu0 0
        %1401 = vmatpush1.bf16.msra.mxu0 0
        %1402 = vmatprep.subr.bf16.mxu0 0
        %1403 = vmatpush1.bf16.msra.mxu0 0
        %1404 = vmatprep.subr.bf16.mxu0 0
        %1405 = vmatpush1.bf16.msra.mxu0 0
        %1406 = vmatprep.subr.bf16.mxu0 0
        %1407 = vmatpush1.bf16.msra.mxu0 0
        %1408 = vmatprep.subr.bf16.mxu0 0
        %1409 = vmatpush1.bf16.msra.mxu0 0
        %1410 = vmatprep.subr.bf16.mxu0 0
        %1411 = vmatpush1.bf16.msra.mxu0 0
        %1412 = vmatprep.subr.bf16.mxu0 0
        %1413 = vmatpush1.bf16.msra.mxu0 0
        %1414 = vmatprep.subr.bf16.mxu0 0
        %1415 = vmatpush1.bf16.msra.mxu0 0
        %1416 = vmatprep.subr.bf16.mxu0 0
        %1417 = vmatpush1.bf16.msra.mxu0 0
        %1418 = vmatprep.subr.bf16.mxu0 0
        %1419 = vmatpush1.bf16.msra.mxu0 0
        %1420 = vmatprep.subr.bf16.mxu0 0
        %1421 = vmatpush1.bf16.msra.mxu0 0
        %1422 = vmatprep.subr.bf16.mxu0 0
        %1423 = vmatpush1.bf16.msra.mxu0 0
        %1424 = vmatprep.mubr.bf16.mxu0 0
        %1425 = vmatmul.mubr.bf16.gmra.mrb[0].mxu0 %v335
        %v1426 = vpop.f32.mrb[0].mxu0
        %v1427 = vadd.f32 0.0, %v1426
        %v1428 = vpop.f32.mrb[0].mxu0
        %v1429 = vpop.f32.mrb[0].mxu0
        %v1430 = vpop.f32.mrb[0].mxu0
        %1431 = vdwg.mxu0
        %v1432 = vadd.f32 %v1382, %v1427
        %s1433 = sadd.s32 %s1287, 1
        %s1434 = smul.addr %s1433, 2
        %s1435 = scalar_lea.vmem %s180, %s1434 [#allocation2]
        %v1436 = vld [vmem:[%s1435] sm:$0x3]
        %v1438 = vsel %vm242, %v1436, 0
        %1440 = vmatprep.subr.bf16.mxu0 0
        %1441 = vmatpush1.bf16.msra.mxu0 %v1438
        %1442 = vmatprep.subr.bf16.mxu0 0
        %1443 = vmatpush1.bf16.msra.mxu0 0
        %1444 = vmatprep.subr.bf16.mxu0 0
        %1445 = vmatpush1.bf16.msra.mxu0 0
        %1446 = vmatprep.subr.bf16.mxu0 0
        %1447 = vmatpush1.bf16.msra.mxu0 0
        %1448 = vmatprep.subr.bf16.mxu0 0
        %1449 = vmatpush1.bf16.msra.mxu0 0
        %1450 = vmatprep.subr.bf16.mxu0 0
        %1451 = vmatpush1.bf16.msra.mxu0 0
        %1452 = vmatprep.subr.bf16.mxu0 0
        %1453 = vmatpush1.bf16.msra.mxu0 0
        %1454 = vmatprep.subr.bf16.mxu0 0
        %1455 = vmatpush1.bf16.msra.mxu0 0
        %1456 = vmatprep.subr.bf16.mxu0 0
        %1457 = vmatpush1.bf16.msra.mxu0 0
        %1458 = vmatprep.subr.bf16.mxu0 0
        %1459 = vmatpush1.bf16.msra.mxu0 0
        %1460 = vmatprep.subr.bf16.mxu0 0
        %1461 = vmatpush1.bf16.msra.mxu0 0
        %1462 = vmatprep.subr.bf16.mxu0 0
        %1463 = vmatpush1.bf16.msra.mxu0 0
        %1464 = vmatprep.subr.bf16.mxu0 0
        %1465 = vmatpush1.bf16.msra.mxu0 0
        %1466 = vmatprep.subr.bf16.mxu0 0
        %1467 = vmatpush1.bf16.msra.mxu0 0
        %1468 = vmatprep.subr.bf16.mxu0 0
        %1469 = vmatpush1.bf16.msra.mxu0 0
        %1470 = vmatprep.subr.bf16.mxu0 0
        %1471 = vmatpush1.bf16.msra.mxu0 0
        %1472 = vmatprep.mubr.bf16.mxu0 0
        %1473 = vmatmul.mubr.bf16.gmra.mrb[0].mxu0 %v386
        %v1474 = vpop.f32.mrb[0].mxu0
        %v1475 = vadd.f32 0.0, %v1474
        %v1476 = vpop.f32.mrb[0].mxu0
        %v1477 = vpop.f32.mrb[0].mxu0
        %v1478 = vpop.f32.mrb[0].mxu0
        %1479 = vdwg.mxu0
        %v1480 = vadd.f32 %v1432, %v1475
        %v1483 = vunpack.c.l.s4 1983009808
        %v1484 = vunpack.c.0.s8 %v1483
        %v1485 = vlaneseq
        %v1486 = vshrl.u32 %v1485, 7
        %v1487 = vsub.s32 %v1484, %v1486
        %v1488 = vrot.slane %v1436, %v1487
        %1489 = vrot.lane.b32.xlu0 %v1488, 127
        %v1490 = vpop.permute.xlu0 %1489
        %v1492 = vsel %vm242, %v1490, 0
        %1494 = vmatprep.subr.bf16.mxu0 0
        %1495 = vmatpush1.bf16.msra.mxu0 %v1492
        %1496 = vmatprep.subr.bf16.mxu0 0
        %1497 = vmatpush1.bf16.msra.mxu0 0
        %1498 = vmatprep.subr.bf16.mxu0 0
        %1499 = vmatpush1.bf16.msra.mxu0 0
        %1500 = vmatprep.subr.bf16.mxu0 0
        %1501 = vmatpush1.bf16.msra.mxu0 0
        %1502 = vmatprep.subr.bf16.mxu0 0
        %1503 = vmatpush1.bf16.msra.mxu0 0
        %1504 = vmatprep.subr.bf16.mxu0 0
        %1505 = vmatpush1.bf16.msra.mxu0 0
        %1506 = vmatprep.subr.bf16.mxu0 0
        %1507 = vmatpush1.bf16.msra.mxu0 0
        %1508 = vmatprep.subr.bf16.mxu0 0
        %1509 = vmatpush1.bf16.msra.mxu0 0
        %1510 = vmatprep.subr.bf16.mxu0 0
        %1511 = vmatpush1.bf16.msra.mxu0 0
        %1512 = vmatprep.subr.bf16.mxu0 0
        %1513 = vmatpush1.bf16.msra.mxu0 0
        %1514 = vmatprep.subr.bf16.mxu0 0
        %1515 = vmatpush1.bf16.msra.mxu0 0
        %1516 = vmatprep.subr.bf16.mxu0 0
        %1517 = vmatpush1.bf16.msra.mxu0 0
        %1518 = vmatprep.subr.bf16.mxu0 0
        %1519 = vmatpush1.bf16.msra.mxu0 0
        %1520 = vmatprep.subr.bf16.mxu0 0
        %1521 = vmatpush1.bf16.msra.mxu0 0
        %1522 = vmatprep.subr.bf16.mxu0 0
        %1523 = vmatpush1.bf16.msra.mxu0 0
        %1524 = vmatprep.subr.bf16.mxu0 0
        %1525 = vmatpush1.bf16.msra.mxu0 0
        %1526 = vmatprep.mubr.bf16.mxu0 0
        %1527 = vmatmul.mubr.bf16.gmra.mrb[0].mxu0 %v443
        %v1528 = vpop.f32.mrb[0].mxu0
        %v1529 = vadd.f32 0.0, %v1528
        %v1530 = vpop.f32.mrb[0].mxu0
        %v1531 = vpop.f32.mrb[0].mxu0
        %v1532 = vpop.f32.mrb[0].mxu0
        %1533 = vdwg.mxu0
        %v1534 = vadd.f32 %v1480, %v1529
        %1535 = vrot.lane.b32.xlu0 %v1488, 126
        %v1536 = vpop.permute.xlu0 %1535
        %v1538 = vsel %vm242, %v1536, 0
        %1540 = vmatprep.subr.bf16.mxu0 0
        %1541 = vmatpush1.bf16.msra.mxu0 %v1538
        %1542 = vmatprep.subr.bf16.mxu0 0
        %1543 = vmatpush1.bf16.msra.mxu0 0
        %1544 = vmatprep.subr.bf16.mxu0 0
        %1545 = vmatpush1.bf16.msra.mxu0 0
        %1546 = vmatprep.subr.bf16.mxu0 0
        %1547 = vmatpush1.bf16.msra.mxu0 0
        %1548 = vmatprep.subr.bf16.mxu0 0
        %1549 = vmatpush1.bf16.msra.mxu0 0
        %1550 = vmatprep.subr.bf16.mxu0 0
        %1551 = vmatpush1.bf16.msra.mxu0 0
        %1552 = vmatprep.subr.bf16.mxu0 0
        %1553 = vmatpush1.bf16.msra.mxu0 0
        %1554 = vmatprep.subr.bf16.mxu0 0
        %1555 = vmatpush1.bf16.msra.mxu0 0
        %1556 = vmatprep.subr.bf16.mxu0 0
        %1557 = vmatpush1.bf16.msra.mxu0 0
        %1558 = vmatprep.subr.bf16.mxu0 0
        %1559 = vmatpush1.bf16.msra.mxu0 0
        %1560 = vmatprep.subr.bf16.mxu0 0
        %1561 = vmatpush1.bf16.msra.mxu0 0
        %1562 = vmatprep.subr.bf16.mxu0 0
        %1563 = vmatpush1.bf16.msra.mxu0 0
        %1564 = vmatprep.subr.bf16.mxu0 0
        %1565 = vmatpush1.bf16.msra.mxu0 0
        %1566 = vmatprep.subr.bf16.mxu0 0
        %1567 = vmatpush1.bf16.msra.mxu0 0
        %1568 = vmatprep.subr.bf16.mxu0 0
        %1569 = vmatpush1.bf16.msra.mxu0 0
        %1570 = vmatprep.subr.bf16.mxu0 0
        %1571 = vmatpush1.bf16.msra.mxu0 0
        %1572 = vmatprep.mubr.bf16.mxu0 0
        %1573 = vmatmul.mubr.bf16.gmra.mrb[0].mxu0 %v492
        %v1574 = vpop.f32.mrb[0].mxu0
        %v1575 = vadd.f32 0.0, %v1574
        %v1576 = vpop.f32.mrb[0].mxu0
        %v1577 = vpop.f32.mrb[0].mxu0
        %v1578 = vpop.f32.mrb[0].mxu0
        %1579 = vdwg.mxu0
        %v1580 = vadd.f32 %v1534, %v1575
        %s1581 = sadd.s32 %s1287, 2
        %s1582 = smul.addr %s1581, 2
        %s1583 = scalar_lea.vmem %s180, %s1582 [#allocation2]
        %v1584 = vld [vmem:[%s1583] sm:$0x3]
        %v1586 = vsel %vm242, %v1584, 0
        %1588 = vmatprep.subr.bf16.mxu0 0
        %1589 = vmatpush1.bf16.msra.mxu0 %v1586
        %1590 = vmatprep.subr.bf16.mxu0 0
        %1591 = vmatpush1.bf16.msra.mxu0 0
        %1592 = vmatprep.subr.bf16.mxu0 0
        %1593 = vmatpush1.bf16.msra.mxu0 0
        %1594 = vmatprep.subr.bf16.mxu0 0
        %1595 = vmatpush1.bf16.msra.mxu0 0
        %1596 = vmatprep.subr.bf16.mxu0 0
        %1597 = vmatpush1.bf16.msra.mxu0 0
        %1598 = vmatprep.subr.bf16.mxu0 0
        %1599 = vmatpush1.bf16.msra.mxu0 0
        %1600 = vmatprep.subr.bf16.mxu0 0
        %1601 = vmatpush1.bf16.msra.mxu0 0
        %1602 = vmatprep.subr.bf16.mxu0 0
        %1603 = vmatpush1.bf16.msra.mxu0 0
        %1604 = vmatprep.subr.bf16.mxu0 0
        %1605 = vmatpush1.bf16.msra.mxu0 0
        %1606 = vmatprep.subr.bf16.mxu0 0
        %1607 = vmatpush1.bf16.msra.mxu0 0
        %1608 = vmatprep.subr.bf16.mxu0 0
        %1609 = vmatpush1.bf16.msra.mxu0 0
        %1610 = vmatprep.subr.bf16.mxu0 0
        %1611 = vmatpush1.bf16.msra.mxu0 0
        %1612 = vmatprep.subr.bf16.mxu0 0
        %1613 = vmatpush1.bf16.msra.mxu0 0
        %1614 = vmatprep.subr.bf16.mxu0 0
        %1615 = vmatpush1.bf16.msra.mxu0 0
        %1616 = vmatprep.subr.bf16.mxu0 0
        %1617 = vmatpush1.bf16.msra.mxu0 0
        %1618 = vmatprep.subr.bf16.mxu0 0
        %1619 = vmatpush1.bf16.msra.mxu0 0
        %1620 = vmatprep.mubr.bf16.mxu0 0
        %1621 = vmatmul.mubr.bf16.gmra.mrb[0].mxu0 %v543
        %v1622 = vpop.f32.mrb[0].mxu0
        %v1623 = vadd.f32 0.0, %v1622
        %v1624 = vpop.f32.mrb[0].mxu0
        %v1625 = vpop.f32.mrb[0].mxu0
        %v1626 = vpop.f32.mrb[0].mxu0
        %1627 = vdwg.mxu0
        %v1628 = vadd.f32 %v1580, %v1623
        %v1631 = vunpack.c.l.s4 1983009808
        %v1632 = vunpack.c.0.s8 %v1631
        %v1633 = vlaneseq
        %v1634 = vshrl.u32 %v1633, 7
        %v1635 = vsub.s32 %v1632, %v1634
        %v1636 = vrot.slane %v1584, %v1635
        %1637 = vrot.lane.b32.xlu0 %v1636, 127
        %v1638 = vpop.permute.xlu0 %1637
        %v1640 = vsel %vm242, %v1638, 0
        %1642 = vmatprep.subr.bf16.mxu0 0
        %1643 = vmatpush1.bf16.msra.mxu0 %v1640
        %1644 = vmatprep.subr.bf16.mxu0 0
        %1645 = vmatpush1.bf16.msra.mxu0 0
        %1646 = vmatprep.subr.bf16.mxu0 0
        %1647 = vmatpush1.bf16.msra.mxu0 0
        %1648 = vmatprep.subr.bf16.mxu0 0
        %1649 = vmatpush1.bf16.msra.mxu0 0
        %1650 = vmatprep.subr.bf16.mxu0 0
        %1651 = vmatpush1.bf16.msra.mxu0 0
        %1652 = vmatprep.subr.bf16.mxu0 0
        %1653 = vmatpush1.bf16.msra.mxu0 0
        %1654 = vmatprep.subr.bf16.mxu0 0
        %1655 = vmatpush1.bf16.msra.mxu0 0
        %1656 = vmatprep.subr.bf16.mxu0 0
        %1657 = vmatpush1.bf16.msra.mxu0 0
        %1658 = vmatprep.subr.bf16.mxu0 0
        %1659 = vmatpush1.bf16.msra.mxu0 0
        %1660 = vmatprep.subr.bf16.mxu0 0
        %1661 = vmatpush1.bf16.msra.mxu0 0
        %1662 = vmatprep.subr.bf16.mxu0 0
        %1663 = vmatpush1.bf16.msra.mxu0 0
        %1664 = vmatprep.subr.bf16.mxu0 0
        %1665 = vmatpush1.bf16.msra.mxu0 0
        %1666 = vmatprep.subr.bf16.mxu0 0
        %1667 = vmatpush1.bf16.msra.mxu0 0
        %1668 = vmatprep.subr.bf16.mxu0 0
        %1669 = vmatpush1.bf16.msra.mxu0 0
        %1670 = vmatprep.subr.bf16.mxu0 0
        %1671 = vmatpush1.bf16.msra.mxu0 0
        %1672 = vmatprep.subr.bf16.mxu0 0
        %1673 = vmatpush1.bf16.msra.mxu0 0
        %1674 = vmatprep.mubr.bf16.mxu0 0
        %1675 = vmatmul.mubr.bf16.gmra.mrb[0].mxu0 %v600
        %v1676 = vpop.f32.mrb[0].mxu0
        %v1677 = vadd.f32 0.0, %v1676
        %v1678 = vpop.f32.mrb[0].mxu0
        %v1679 = vpop.f32.mrb[0].mxu0
        %v1680 = vpop.f32.mrb[0].mxu0
        %1681 = vdwg.mxu0
        %v1682 = vadd.f32 %v1628, %v1677
        %1683 = vrot.lane.b32.xlu0 %v1636, 126
        %v1684 = vpop.permute.xlu0 %1683
        %v1686 = vsel %vm242, %v1684, 0
        %1688 = vmatprep.subr.bf16.mxu0 0
        %1689 = vmatpush1.bf16.msra.mxu0 %v1686
        %1690 = vmatprep.subr.bf16.mxu0 0
        %1691 = vmatpush1.bf16.msra.mxu0 0
        %1692 = vmatprep.subr.bf16.mxu0 0
        %1693 = vmatpush1.bf16.msra.mxu0 0
        %1694 = vmatprep.subr.bf16.mxu0 0
        %1695 = vmatpush1.bf16.msra.mxu0 0
        %1696 = vmatprep.subr.bf16.mxu0 0
        %1697 = vmatpush1.bf16.msra.mxu0 0
        %1698 = vmatprep.subr.bf16.mxu0 0
        %1699 = vmatpush1.bf16.msra.mxu0 0
        %1700 = vmatprep.subr.bf16.mxu0 0
        %1701 = vmatpush1.bf16.msra.mxu0 0
        %1702 = vmatprep.subr.bf16.mxu0 0
        %1703 = vmatpush1.bf16.msra.mxu0 0
        %1704 = vmatprep.subr.bf16.mxu0 0
        %1705 = vmatpush1.bf16.msra.mxu0 0
        %1706 = vmatprep.subr.bf16.mxu0 0
        %1707 = vmatpush1.bf16.msra.mxu0 0
        %1708 = vmatprep.subr.bf16.mxu0 0
        %1709 = vmatpush1.bf16.msra.mxu0 0
        %1710 = vmatprep.subr.bf16.mxu0 0
        %1711 = vmatpush1.bf16.msra.mxu0 0
        %1712 = vmatprep.subr.bf16.mxu0 0
        %1713 = vmatpush1.bf16.msra.mxu0 0
        %1714 = vmatprep.subr.bf16.mxu0 0
        %1715 = vmatpush1.bf16.msra.mxu0 0
        %1716 = vmatprep.subr.bf16.mxu0 0
        %1717 = vmatpush1.bf16.msra.mxu0 0
        %1718 = vmatprep.subr.bf16.mxu0 0
        %1719 = vmatpush1.bf16.msra.mxu0 0
        %1720 = vmatprep.mubr.bf16.mxu0 0
        %1721 = vmatmul.mubr.bf16.gmra.mrb[0].mxu0 %v649
        %v1722 = vpop.f32.mrb[0].mxu0
        %v1723 = vadd.f32 0.0, %v1722
        %v1724 = vpop.f32.mrb[0].mxu0
        %v1725 = vpop.f32.mrb[0].mxu0
        %v1726 = vpop.f32.mrb[0].mxu0
        %1727 = vdwg.mxu0
        %v1728 = vadd.f32 %v1682, %v1723
        %v1729 = vadd.f32 %v1728, %v698
        %vm1730 = vcmp.gt.f32.partialorder %v1729, 0.0
        %v1731 = vmul.f32 %v1729, 0.1
        %v1732 = vsel %vm1730, %v1729, %v1731
        %v1734 = vcombine.high %v1732, %v1732
        %v1736 = vunpack.c.l.s4 1966171168
        %v1737 = vunpack.c.0.s8 %v1736
        %v1738 = vlaneseq
        %v1739 = vshrl.u32 %v1738, 7
        %v1740 = vsub.s32 %v1737, %v1739
        %v1741 = vrot.slane %v1732, %v1740
        %v1743 = vunpack.c.l.s4 1966171168
        %v1744 = vunpack.c.0.s8 %v1743
        %v1745 = vlaneseq
        %v1746 = vshrl.u32 %v1745, 7
        %v1747 = vsub.s32 %v1744, %v1746
        %v1748 = vrot.slane %v1734, %v1747
        %v1749 = vcombine.high %v1741, %v1741
        %v1750 = vcombine.high %v1748, %v1748
        %v1752 = vunpack.c.l.s4 1966171168
        %v1753 = vunpack.c.0.s8 %v1752
        %v1754 = vlaneseq
        %v1755 = vshrl.u32 %v1754, 7
        %v1756 = vsub.s32 %v1753, %v1755
        %v1757 = vrot.slane %v1741, %v1756
        %v1759 = vunpack.c.l.s4 1966171168
        %v1760 = vunpack.c.0.s8 %v1759
        %v1761 = vlaneseq
        %v1762 = vshrl.u32 %v1761, 7
        %v1763 = vsub.s32 %v1760, %v1762
        %v1764 = vrot.slane %v1748, %v1763
        %v1766 = vunpack.c.l.s4 1966171168
        %v1767 = vunpack.c.0.s8 %v1766
        %v1768 = vlaneseq
        %v1769 = vshrl.u32 %v1768, 7
        %v1770 = vsub.s32 %v1767, %v1769
        %v1771 = vrot.slane %v1749, %v1770
        %v1773 = vunpack.c.l.s4 1966171168
        %v1774 = vunpack.c.0.s8 %v1773
        %v1775 = vlaneseq
        %v1776 = vshrl.u32 %v1775, 7
        %v1777 = vsub.s32 %v1774, %v1776
        %v1778 = vrot.slane %v1750, %v1777
        %v1779 = vcombine.high %v1757, %v1757
        %v1780 = vcombine.high %v1764, %v1764
        %v1781 = vcombine.high %v1771, %v1771
        %v1782 = vcombine.high %v1778, %v1778
        %1791 = vst.msk [vmem:[%s202 + $0x2] sm:$0x1] %vm762, %v1757
        %1792 = vst.msk [vmem:[%s202 + $0xa] sm:$0x1] %vm762, %v1771
        %1793 = vst.msk [vmem:[%s202 + $0x12] sm:$0x1] %vm762, %v1779
        %1794 = vst.msk [vmem:[%s202 + $0x1a] sm:$0x1] %vm762, %v1781
        %1795 = vst.msk [vmem:[%s202 + $0x22] sm:$0x1] %vm762, %v1764
        %1796 = vst.msk [vmem:[%s202 + $0x2a] sm:$0x1] %vm762, %v1778
        %1797 = vst.msk [vmem:[%s202 + $0x32] sm:$0x1] %vm762, %v1780
        %1798 = vst.msk [vmem:[%s202 + $0x3a] sm:$0x1] %vm762, %v1782
        %s1799 = sadd.s32 %s222, 3
        %p1800 = scmp.lt.s32.totalorder %s1799, 15
        %s1801 = scalar_select %p1800, %s1799, 15
        %s1802 = smul.addr %s1801, 2
        %s1803 = scalar_lea.vmem %s180, %s1802 [#allocation2]
        %v1804 = vld [vmem:[%s1803] sm:$0x3]
        %v1807 = vunpack.c.l.s4 1983009808
        %v1808 = vunpack.c.0.s8 %v1807
        %v1809 = vlaneseq
        %v1810 = vshrl.u32 %v1809, 7
        %v1811 = vsub.s32 %v1808, %v1810
        %v1812 = vrot.slane %v1804, %v1811
        %1813 = vrot.lane.b32.xlu0 %v1812, 127
        %v1814 = vpop.permute.xlu0 %1813
        %v1816 = vsel %vm242, %v1814, 0
        %1818 = vmatprep.subr.bf16.mxu0 0
        %1819 = vmatpush1.bf16.msra.mxu0 %v1816
        %1820 = vmatprep.subr.bf16.mxu0 0
        %1821 = vmatpush1.bf16.msra.mxu0 0
        %1822 = vmatprep.subr.bf16.mxu0 0
        %1823 = vmatpush1.bf16.msra.mxu0 0
        %1824 = vmatprep.subr.bf16.mxu0 0
        %1825 = vmatpush1.bf16.msra.mxu0 0
        %1826 = vmatprep.subr.bf16.mxu0 0
        %1827 = vmatpush1.bf16.msra.mxu0 0
        %1828 = vmatprep.subr.bf16.mxu0 0
        %1829 = vmatpush1.bf16.msra.mxu0 0
        %1830 = vmatprep.subr.bf16.mxu0 0
        %1831 = vmatpush1.bf16.msra.mxu0 0
        %1832 = vmatprep.subr.bf16.mxu0 0
        %1833 = vmatpush1.bf16.msra.mxu0 0
        %1834 = vmatprep.subr.bf16.mxu0 0
        %1835 = vmatpush1.bf16.msra.mxu0 0
        %1836 = vmatprep.subr.bf16.mxu0 0
        %1837 = vmatpush1.bf16.msra.mxu0 0
        %1838 = vmatprep.subr.bf16.mxu0 0
        %1839 = vmatpush1.bf16.msra.mxu0 0
        %1840 = vmatprep.subr.bf16.mxu0 0
        %1841 = vmatpush1.bf16.msra.mxu0 0
        %1842 = vmatprep.subr.bf16.mxu0 0
        %1843 = vmatpush1.bf16.msra.mxu0 0
        %1844 = vmatprep.subr.bf16.mxu0 0
        %1845 = vmatpush1.bf16.msra.mxu0 0
        %1846 = vmatprep.subr.bf16.mxu0 0
        %1847 = vmatpush1.bf16.msra.mxu0 0
        %1848 = vmatprep.subr.bf16.mxu0 0
        %1849 = vmatpush1.bf16.msra.mxu0 0
        %1850 = vmatprep.mubr.bf16.mxu0 0
        %1851 = vmatmul.mubr.bf16.gmra.mrb[0].mxu0 %v240
        %v1852 = vpop.f32.mrb[0].mxu0
        %v1853 = vadd.f32 0.0, %v1852
        %v1854 = vpop.f32.mrb[0].mxu0
        %v1855 = vpop.f32.mrb[0].mxu0
        %v1856 = vpop.f32.mrb[0].mxu0
        %1857 = vdwg.mxu0
        %v1859 = vsel %vm242, %v1804, 0
        %1861 = vmatprep.subr.bf16.mxu0 0
        %1862 = vmatpush1.bf16.msra.mxu0 %v1859
        %1863 = vmatprep.subr.bf16.mxu0 0
        %1864 = vmatpush1.bf16.msra.mxu0 0
        %1865 = vmatprep.subr.bf16.mxu0 0
        %1866 = vmatpush1.bf16.msra.mxu0 0
        %1867 = vmatprep.subr.bf16.mxu0 0
        %1868 = vmatpush1.bf16.msra.mxu0 0
        %1869 = vmatprep.subr.bf16.mxu0 0
        %1870 = vmatpush1.bf16.msra.mxu0 0
        %1871 = vmatprep.subr.bf16.mxu0 0
        %1872 = vmatpush1.bf16.msra.mxu0 0
        %1873 = vmatprep.subr.bf16.mxu0 0
        %1874 = vmatpush1.bf16.msra.mxu0 0
        %1875 = vmatprep.subr.bf16.mxu0 0
        %1876 = vmatpush1.bf16.msra.mxu0 0
        %1877 = vmatprep.subr.bf16.mxu0 0
        %1878 = vmatpush1.bf16.msra.mxu0 0
        %1879 = vmatprep.subr.bf16.mxu0 0
        %1880 = vmatpush1.bf16.msra.mxu0 0
        %1881 = vmatprep.subr.bf16.mxu0 0
        %1882 = vmatpush1.bf16.msra.mxu0 0
        %1883 = vmatprep.subr.bf16.mxu0 0
        %1884 = vmatpush1.bf16.msra.mxu0 0
        %1885 = vmatprep.subr.bf16.mxu0 0
        %1886 = vmatpush1.bf16.msra.mxu0 0
        %1887 = vmatprep.subr.bf16.mxu0 0
        %1888 = vmatpush1.bf16.msra.mxu0 0
        %1889 = vmatprep.subr.bf16.mxu0 0
        %1890 = vmatpush1.bf16.msra.mxu0 0
        %1891 = vmatprep.subr.bf16.mxu0 0
        %1892 = vmatpush1.bf16.msra.mxu0 0
        %1893 = vmatprep.mubr.bf16.mxu0 0
        %1894 = vmatmul.mubr.bf16.gmra.mrb[0].mxu0 %v287
        %v1895 = vpop.f32.mrb[0].mxu0
        %v1896 = vadd.f32 %v1853, %v1895
        %v1897 = vpop.f32.mrb[0].mxu0
        %v1898 = vpop.f32.mrb[0].mxu0
        %v1899 = vpop.f32.mrb[0].mxu0
        %1900 = vdwg.mxu0
        %1901 = vrot.lane.b32.xlu0 %v1812, 126
        %v1902 = vpop.permute.xlu0 %1901
        %v1904 = vsel %vm242, %v1902, 0
        %1906 = vmatprep.subr.bf16.mxu0 0
        %1907 = vmatpush1.bf16.msra.mxu0 %v1904
        %1908 = vmatprep.subr.bf16.mxu0 0
        %1909 = vmatpush1.bf16.msra.mxu0 0
        %1910 = vmatprep.subr.bf16.mxu0 0
        %1911 = vmatpush1.bf16.msra.mxu0 0
        %1912 = vmatprep.subr.bf16.mxu0 0
        %1913 = vmatpush1.bf16.msra.mxu0 0
        %1914 = vmatprep.subr.bf16.mxu0 0
        %1915 = vmatpush1.bf16.msra.mxu0 0
        %1916 = vmatprep.subr.bf16.mxu0 0
        %1917 = vmatpush1.bf16.msra.mxu0 0
        %1918 = vmatprep.subr.bf16.mxu0 0
        %1919 = vmatpush1.bf16.msra.mxu0 0
        %1920 = vmatprep.subr.bf16.mxu0 0
        %1921 = vmatpush1.bf16.msra.mxu0 0
        %1922 = vmatprep.subr.bf16.mxu0 0
        %1923 = vmatpush1.bf16.msra.mxu0 0
        %1924 = vmatprep.subr.bf16.mxu0 0
        %1925 = vmatpush1.bf16.msra.mxu0 0
        %1926 = vmatprep.subr.bf16.mxu0 0
        %1927 = vmatpush1.bf16.msra.mxu0 0
        %1928 = vmatprep.subr.bf16.mxu0 0
        %1929 = vmatpush1.bf16.msra.mxu0 0
        %1930 = vmatprep.subr.bf16.mxu0 0
        %1931 = vmatpush1.bf16.msra.mxu0 0
        %1932 = vmatprep.subr.bf16.mxu0 0
        %1933 = vmatpush1.bf16.msra.mxu0 0
        %1934 = vmatprep.subr.bf16.mxu0 0
        %1935 = vmatpush1.bf16.msra.mxu0 0
        %1936 = vmatprep.subr.bf16.mxu0 0
        %1937 = vmatpush1.bf16.msra.mxu0 0
        %1938 = vmatprep.mubr.bf16.mxu0 0
        %1939 = vmatmul.mubr.bf16.gmra.mrb[0].mxu0 %v335
        %v1940 = vpop.f32.mrb[0].mxu0
        %v1941 = vadd.f32 0.0, %v1940
        %v1942 = vpop.f32.mrb[0].mxu0
        %v1943 = vpop.f32.mrb[0].mxu0
        %v1944 = vpop.f32.mrb[0].mxu0
        %1945 = vdwg.mxu0
        %v1946 = vadd.f32 %v1896, %v1941
        %s1947 = sadd.s32 %s1801, 1
        %s1948 = smul.addr %s1947, 2
        %s1949 = scalar_lea.vmem %s180, %s1948 [#allocation2]
        %v1950 = vld [vmem:[%s1949] sm:$0x3]
        %v1952 = vsel %vm242, %v1950, 0
        %1954 = vmatprep.subr.bf16.mxu0 0
        %1955 = vmatpush1.bf16.msra.mxu0 %v1952
        %1956 = vmatprep.subr.bf16.mxu0 0
        %1957 = vmatpush1.bf16.msra.mxu0 0
        %1958 = vmatprep.subr.bf16.mxu0 0
        %1959 = vmatpush1.bf16.msra.mxu0 0
        %1960 = vmatprep.subr.bf16.mxu0 0
        %1961 = vmatpush1.bf16.msra.mxu0 0
        %1962 = vmatprep.subr.bf16.mxu0 0
        %1963 = vmatpush1.bf16.msra.mxu0 0
        %1964 = vmatprep.subr.bf16.mxu0 0
        %1965 = vmatpush1.bf16.msra.mxu0 0
        %1966 = vmatprep.subr.bf16.mxu0 0
        %1967 = vmatpush1.bf16.msra.mxu0 0
        %1968 = vmatprep.subr.bf16.mxu0 0
        %1969 = vmatpush1.bf16.msra.mxu0 0
        %1970 = vmatprep.subr.bf16.mxu0 0
        %1971 = vmatpush1.bf16.msra.mxu0 0
        %1972 = vmatprep.subr.bf16.mxu0 0
        %1973 = vmatpush1.bf16.msra.mxu0 0
        %1974 = vmatprep.subr.bf16.mxu0 0
        %1975 = vmatpush1.bf16.msra.mxu0 0
        %1976 = vmatprep.subr.bf16.mxu0 0
        %1977 = vmatpush1.bf16.msra.mxu0 0
        %1978 = vmatprep.subr.bf16.mxu0 0
        %1979 = vmatpush1.bf16.msra.mxu0 0
        %1980 = vmatprep.subr.bf16.mxu0 0
        %1981 = vmatpush1.bf16.msra.mxu0 0
        %1982 = vmatprep.subr.bf16.mxu0 0
        %1983 = vmatpush1.bf16.msra.mxu0 0
        %1984 = vmatprep.subr.bf16.mxu0 0
        %1985 = vmatpush1.bf16.msra.mxu0 0
        %1986 = vmatprep.mubr.bf16.mxu0 0
        %1987 = vmatmul.mubr.bf16.gmra.mrb[0].mxu0 %v386
        %v1988 = vpop.f32.mrb[0].mxu0
        %v1989 = vadd.f32 0.0, %v1988
        %v1990 = vpop.f32.mrb[0].mxu0
        %v1991 = vpop.f32.mrb[0].mxu0
        %v1992 = vpop.f32.mrb[0].mxu0
        %1993 = vdwg.mxu0
        %v1994 = vadd.f32 %v1946, %v1989
        %v1997 = vunpack.c.l.s4 1983009808
        %v1998 = vunpack.c.0.s8 %v1997
        %v1999 = vlaneseq
        %v2000 = vshrl.u32 %v1999, 7
        %v2001 = vsub.s32 %v1998, %v2000
        %v2002 = vrot.slane %v1950, %v2001
        %2003 = vrot.lane.b32.xlu0 %v2002, 127
        %v2004 = vpop.permute.xlu0 %2003
        %v2006 = vsel %vm242, %v2004, 0
        %2008 = vmatprep.subr.bf16.mxu0 0
        %2009 = vmatpush1.bf16.msra.mxu0 %v2006
        %2010 = vmatprep.subr.bf16.mxu0 0
        %2011 = vmatpush1.bf16.msra.mxu0 0
        %2012 = vmatprep.subr.bf16.mxu0 0
        %2013 = vmatpush1.bf16.msra.mxu0 0
        %2014 = vmatprep.subr.bf16.mxu0 0
        %2015 = vmatpush1.bf16.msra.mxu0 0
        %2016 = vmatprep.subr.bf16.mxu0 0
        %2017 = vmatpush1.bf16.msra.mxu0 0
        %2018 = vmatprep.subr.bf16.mxu0 0
        %2019 = vmatpush1.bf16.msra.mxu0 0
        %2020 = vmatprep.subr.bf16.mxu0 0
        %2021 = vmatpush1.bf16.msra.mxu0 0
        %2022 = vmatprep.subr.bf16.mxu0 0
        %2023 = vmatpush1.bf16.msra.mxu0 0
        %2024 = vmatprep.subr.bf16.mxu0 0
        %2025 = vmatpush1.bf16.msra.mxu0 0
        %2026 = vmatprep.subr.bf16.mxu0 0
        %2027 = vmatpush1.bf16.msra.mxu0 0
        %2028 = vmatprep.subr.bf16.mxu0 0
        %2029 = vmatpush1.bf16.msra.mxu0 0
        %2030 = vmatprep.subr.bf16.mxu0 0
        %2031 = vmatpush1.bf16.msra.mxu0 0
        %2032 = vmatprep.subr.bf16.mxu0 0
        %2033 = vmatpush1.bf16.msra.mxu0 0
        %2034 = vmatprep.subr.bf16.mxu0 0
        %2035 = vmatpush1.bf16.msra.mxu0 0
        %2036 = vmatprep.subr.bf16.mxu0 0
        %2037 = vmatpush1.bf16.msra.mxu0 0
        %2038 = vmatprep.subr.bf16.mxu0 0
        %2039 = vmatpush1.bf16.msra.mxu0 0
        %2040 = vmatprep.mubr.bf16.mxu0 0
        %2041 = vmatmul.mubr.bf16.gmra.mrb[0].mxu0 %v443
        %v2042 = vpop.f32.mrb[0].mxu0
        %v2043 = vadd.f32 0.0, %v2042
        %v2044 = vpop.f32.mrb[0].mxu0
        %v2045 = vpop.f32.mrb[0].mxu0
        %v2046 = vpop.f32.mrb[0].mxu0
        %2047 = vdwg.mxu0
        %v2048 = vadd.f32 %v1994, %v2043
        %2049 = vrot.lane.b32.xlu0 %v2002, 126
        %v2050 = vpop.permute.xlu0 %2049
        %v2052 = vsel %vm242, %v2050, 0
        %2054 = vmatprep.subr.bf16.mxu0 0
        %2055 = vmatpush1.bf16.msra.mxu0 %v2052
        %2056 = vmatprep.subr.bf16.mxu0 0
        %2057 = vmatpush1.bf16.msra.mxu0 0
        %2058 = vmatprep.subr.bf16.mxu0 0
        %2059 = vmatpush1.bf16.msra.mxu0 0
        %2060 = vmatprep.subr.bf16.mxu0 0
        %2061 = vmatpush1.bf16.msra.mxu0 0
        %2062 = vmatprep.subr.bf16.mxu0 0
        %2063 = vmatpush1.bf16.msra.mxu0 0
        %2064 = vmatprep.subr.bf16.mxu0 0
        %2065 = vmatpush1.bf16.msra.mxu0 0
        %2066 = vmatprep.subr.bf16.mxu0 0
        %2067 = vmatpush1.bf16.msra.mxu0 0
        %2068 = vmatprep.subr.bf16.mxu0 0
        %2069 = vmatpush1.bf16.msra.mxu0 0
        %2070 = vmatprep.subr.bf16.mxu0 0
        %2071 = vmatpush1.bf16.msra.mxu0 0
        %2072 = vmatprep.subr.bf16.mxu0 0
        %2073 = vmatpush1.bf16.msra.mxu0 0
        %2074 = vmatprep.subr.bf16.mxu0 0
        %2075 = vmatpush1.bf16.msra.mxu0 0
        %2076 = vmatprep.subr.bf16.mxu0 0
        %2077 = vmatpush1.bf16.msra.mxu0 0
        %2078 = vmatprep.subr.bf16.mxu0 0
        %2079 = vmatpush1.bf16.msra.mxu0 0
        %2080 = vmatprep.subr.bf16.mxu0 0
        %2081 = vmatpush1.bf16.msra.mxu0 0
        %2082 = vmatprep.subr.bf16.mxu0 0
        %2083 = vmatpush1.bf16.msra.mxu0 0
        %2084 = vmatprep.subr.bf16.mxu0 0
        %2085 = vmatpush1.bf16.msra.mxu0 0
        %2086 = vmatprep.mubr.bf16.mxu0 0
        %2087 = vmatmul.mubr.bf16.gmra.mrb[0].mxu0 %v492
        %v2088 = vpop.f32.mrb[0].mxu0
        %v2089 = vadd.f32 0.0, %v2088
        %v2090 = vpop.f32.mrb[0].mxu0
        %v2091 = vpop.f32.mrb[0].mxu0
        %v2092 = vpop.f32.mrb[0].mxu0
        %2093 = vdwg.mxu0
        %v2094 = vadd.f32 %v2048, %v2089
        %s2095 = sadd.s32 %s1801, 2
        %s2096 = smul.addr %s2095, 2
        %s2097 = scalar_lea.vmem %s180, %s2096 [#allocation2]
        %v2098 = vld [vmem:[%s2097] sm:$0x3]
        %v2100 = vsel %vm242, %v2098, 0
        %2102 = vmatprep.subr.bf16.mxu0 0
        %2103 = vmatpush1.bf16.msra.mxu0 %v2100
        %2104 = vmatprep.subr.bf16.mxu0 0
        %2105 = vmatpush1.bf16.msra.mxu0 0
        %2106 = vmatprep.subr.bf16.mxu0 0
        %2107 = vmatpush1.bf16.msra.mxu0 0
        %2108 = vmatprep.subr.bf16.mxu0 0
        %2109 = vmatpush1.bf16.msra.mxu0 0
        %2110 = vmatprep.subr.bf16.mxu0 0
        %2111 = vmatpush1.bf16.msra.mxu0 0
        %2112 = vmatprep.subr.bf16.mxu0 0
        %2113 = vmatpush1.bf16.msra.mxu0 0
        %2114 = vmatprep.subr.bf16.mxu0 0
        %2115 = vmatpush1.bf16.msra.mxu0 0
        %2116 = vmatprep.subr.bf16.mxu0 0
        %2117 = vmatpush1.bf16.msra.mxu0 0
        %2118 = vmatprep.subr.bf16.mxu0 0
        %2119 = vmatpush1.bf16.msra.mxu0 0
        %2120 = vmatprep.subr.bf16.mxu0 0
        %2121 = vmatpush1.bf16.msra.mxu0 0
        %2122 = vmatprep.subr.bf16.mxu0 0
        %2123 = vmatpush1.bf16.msra.mxu0 0
        %2124 = vmatprep.subr.bf16.mxu0 0
        %2125 = vmatpush1.bf16.msra.mxu0 0
        %2126 = vmatprep.subr.bf16.mxu0 0
        %2127 = vmatpush1.bf16.msra.mxu0 0
        %2128 = vmatprep.subr.bf16.mxu0 0
        %2129 = vmatpush1.bf16.msra.mxu0 0
        %2130 = vmatprep.subr.bf16.mxu0 0
        %2131 = vmatpush1.bf16.msra.mxu0 0
        %2132 = vmatprep.subr.bf16.mxu0 0
        %2133 = vmatpush1.bf16.msra.mxu0 0
        %2134 = vmatprep.mubr.bf16.mxu0 0
        %2135 = vmatmul.mubr.bf16.gmra.mrb[0].mxu0 %v543
        %v2136 = vpop.f32.mrb[0].mxu0
        %v2137 = vadd.f32 0.0, %v2136
        %v2138 = vpop.f32.mrb[0].mxu0
        %v2139 = vpop.f32.mrb[0].mxu0
        %v2140 = vpop.f32.mrb[0].mxu0
        %2141 = vdwg.mxu0
        %v2142 = vadd.f32 %v2094, %v2137
        %v2145 = vunpack.c.l.s4 1983009808
        %v2146 = vunpack.c.0.s8 %v2145
        %v2147 = vlaneseq
        %v2148 = vshrl.u32 %v2147, 7
        %v2149 = vsub.s32 %v2146, %v2148
        %v2150 = vrot.slane %v2098, %v2149
        %2151 = vrot.lane.b32.xlu0 %v2150, 127
        %v2152 = vpop.permute.xlu0 %2151
        %v2154 = vsel %vm242, %v2152, 0
        %2156 = vmatprep.subr.bf16.mxu0 0
        %2157 = vmatpush1.bf16.msra.mxu0 %v2154
        %2158 = vmatprep.subr.bf16.mxu0 0
        %2159 = vmatpush1.bf16.msra.mxu0 0
        %2160 = vmatprep.subr.bf16.mxu0 0
        %2161 = vmatpush1.bf16.msra.mxu0 0
        %2162 = vmatprep.subr.bf16.mxu0 0
        %2163 = vmatpush1.bf16.msra.mxu0 0
        %2164 = vmatprep.subr.bf16.mxu0 0
        %2165 = vmatpush1.bf16.msra.mxu0 0
        %2166 = vmatprep.subr.bf16.mxu0 0
        %2167 = vmatpush1.bf16.msra.mxu0 0
        %2168 = vmatprep.subr.bf16.mxu0 0
        %2169 = vmatpush1.bf16.msra.mxu0 0
        %2170 = vmatprep.subr.bf16.mxu0 0
        %2171 = vmatpush1.bf16.msra.mxu0 0
        %2172 = vmatprep.subr.bf16.mxu0 0
        %2173 = vmatpush1.bf16.msra.mxu0 0
        %2174 = vmatprep.subr.bf16.mxu0 0
        %2175 = vmatpush1.bf16.msra.mxu0 0
        %2176 = vmatprep.subr.bf16.mxu0 0
        %2177 = vmatpush1.bf16.msra.mxu0 0
        %2178 = vmatprep.subr.bf16.mxu0 0
        %2179 = vmatpush1.bf16.msra.mxu0 0
        %2180 = vmatprep.subr.bf16.mxu0 0
        %2181 = vmatpush1.bf16.msra.mxu0 0
        %2182 = vmatprep.subr.bf16.mxu0 0
        %2183 = vmatpush1.bf16.msra.mxu0 0
        %2184 = vmatprep.subr.bf16.mxu0 0
        %2185 = vmatpush1.bf16.msra.mxu0 0
        %2186 = vmatprep.subr.bf16.mxu0 0
        %2187 = vmatpush1.bf16.msra.mxu0 0
        %2188 = vmatprep.mubr.bf16.mxu0 0
        %2189 = vmatmul.mubr.bf16.gmra.mrb[0].mxu0 %v600
        %v2190 = vpop.f32.mrb[0].mxu0
        %v2191 = vadd.f32 0.0, %v2190
        %v2192 = vpop.f32.mrb[0].mxu0
        %v2193 = vpop.f32.mrb[0].mxu0
        %v2194 = vpop.f32.mrb[0].mxu0
        %2195 = vdwg.mxu0
        %v2196 = vadd.f32 %v2142, %v2191
        %2197 = vrot.lane.b32.xlu0 %v2150, 126
        %v2198 = vpop.permute.xlu0 %2197
        %v2200 = vsel %vm242, %v2198, 0
        %2202 = vmatprep.subr.bf16.mxu0 0
        %2203 = vmatpush1.bf16.msra.mxu0 %v2200
        %2204 = vmatprep.subr.bf16.mxu0 0
        %2205 = vmatpush1.bf16.msra.mxu0 0
        %2206 = vmatprep.subr.bf16.mxu0 0
        %2207 = vmatpush1.bf16.msra.mxu0 0
        %2208 = vmatprep.subr.bf16.mxu0 0
        %2209 = vmatpush1.bf16.msra.mxu0 0
        %2210 = vmatprep.subr.bf16.mxu0 0
        %2211 = vmatpush1.bf16.msra.mxu0 0
        %2212 = vmatprep.subr.bf16.mxu0 0
        %2213 = vmatpush1.bf16.msra.mxu0 0
        %2214 = vmatprep.subr.bf16.mxu0 0
        %2215 = vmatpush1.bf16.msra.mxu0 0
        %2216 = vmatprep.subr.bf16.mxu0 0
        %2217 = vmatpush1.bf16.msra.mxu0 0
        %2218 = vmatprep.subr.bf16.mxu0 0
        %2219 = vmatpush1.bf16.msra.mxu0 0
        %2220 = vmatprep.subr.bf16.mxu0 0
        %2221 = vmatpush1.bf16.msra.mxu0 0
        %2222 = vmatprep.subr.bf16.mxu0 0
        %2223 = vmatpush1.bf16.msra.mxu0 0
        %2224 = vmatprep.subr.bf16.mxu0 0
        %2225 = vmatpush1.bf16.msra.mxu0 0
        %2226 = vmatprep.subr.bf16.mxu0 0
        %2227 = vmatpush1.bf16.msra.mxu0 0
        %2228 = vmatprep.subr.bf16.mxu0 0
        %2229 = vmatpush1.bf16.msra.mxu0 0
        %2230 = vmatprep.subr.bf16.mxu0 0
        %2231 = vmatpush1.bf16.msra.mxu0 0
        %2232 = vmatprep.subr.bf16.mxu0 0
        %2233 = vmatpush1.bf16.msra.mxu0 0
        %2234 = vmatprep.mubr.bf16.mxu0 0
        %2235 = vmatmul.mubr.bf16.gmra.mrb[0].mxu0 %v649
        %v2236 = vpop.f32.mrb[0].mxu0
        %v2237 = vadd.f32 0.0, %v2236
        %v2238 = vpop.f32.mrb[0].mxu0
        %v2239 = vpop.f32.mrb[0].mxu0
        %v2240 = vpop.f32.mrb[0].mxu0
        %2241 = vdwg.mxu0
        %v2242 = vadd.f32 %v2196, %v2237
        %v2243 = vadd.f32 %v2242, %v698
        %vm2244 = vcmp.gt.f32.partialorder %v2243, 0.0
        %v2245 = vmul.f32 %v2243, 0.1
        %v2246 = vsel %vm2244, %v2243, %v2245
        %v2248 = vcombine.high %v2246, %v2246
        %v2250 = vunpack.c.l.s4 1966171168
        %v2251 = vunpack.c.0.s8 %v2250
        %v2252 = vlaneseq
        %v2253 = vshrl.u32 %v2252, 7
        %v2254 = vsub.s32 %v2251, %v2253
        %v2255 = vrot.slane %v2246, %v2254
        %v2257 = vunpack.c.l.s4 1966171168
        %v2258 = vunpack.c.0.s8 %v2257
        %v2259 = vlaneseq
        %v2260 = vshrl.u32 %v2259, 7
        %v2261 = vsub.s32 %v2258, %v2260
        %v2262 = vrot.slane %v2248, %v2261
        %v2263 = vcombine.high %v2255, %v2255
        %v2264 = vcombine.high %v2262, %v2262
        %v2266 = vunpack.c.l.s4 1966171168
        %v2267 = vunpack.c.0.s8 %v2266
        %v2268 = vlaneseq
        %v2269 = vshrl.u32 %v2268, 7
        %v2270 = vsub.s32 %v2267, %v2269
        %v2271 = vrot.slane %v2255, %v2270
        %v2273 = vunpack.c.l.s4 1966171168
        %v2274 = vunpack.c.0.s8 %v2273
        %v2275 = vlaneseq
        %v2276 = vshrl.u32 %v2275, 7
        %v2277 = vsub.s32 %v2274, %v2276
        %v2278 = vrot.slane %v2262, %v2277
        %v2280 = vunpack.c.l.s4 1966171168
        %v2281 = vunpack.c.0.s8 %v2280
        %v2282 = vlaneseq
        %v2283 = vshrl.u32 %v2282, 7
        %v2284 = vsub.s32 %v2281, %v2283
        %v2285 = vrot.slane %v2263, %v2284
        %v2287 = vunpack.c.l.s4 1966171168
        %v2288 = vunpack.c.0.s8 %v2287
        %v2289 = vlaneseq
        %v2290 = vshrl.u32 %v2289, 7
        %v2291 = vsub.s32 %v2288, %v2290
        %v2292 = vrot.slane %v2264, %v2291
        %v2293 = vcombine.high %v2271, %v2271
        %v2294 = vcombine.high %v2278, %v2278
        %v2295 = vcombine.high %v2285, %v2285
        %v2296 = vcombine.high %v2292, %v2292
        %2305 = vst.msk [vmem:[%s202 + $0x3] sm:$0x1] %vm762, %v2271
        %2306 = vst.msk [vmem:[%s202 + $0xb] sm:$0x1] %vm762, %v2285
        %2307 = vst.msk [vmem:[%s202 + $0x13] sm:$0x1] %vm762, %v2293
        %2308 = vst.msk [vmem:[%s202 + $0x1b] sm:$0x1] %vm762, %v2295
        %2309 = vst.msk [vmem:[%s202 + $0x23] sm:$0x1] %vm762, %v2278
        %2310 = vst.msk [vmem:[%s202 + $0x2b] sm:$0x1] %vm762, %v2292
        %2311 = vst.msk [vmem:[%s202 + $0x33] sm:$0x1] %vm762, %v2294
        %2312 = vst.msk [vmem:[%s202 + $0x3b] sm:$0x1] %vm762, %v2296
        %s2313 = sadd.s32 %s222, 4
        %p2314 = scmp.lt.s32.totalorder %s2313, 15
        %s2315 = scalar_select %p2314, %s2313, 15
        %s2316 = smul.addr %s2315, 2
        %s2317 = scalar_lea.vmem %s180, %s2316 [#allocation2]
        %v2318 = vld [vmem:[%s2317] sm:$0x3]
        %v2321 = vunpack.c.l.s4 1983009808
        %v2322 = vunpack.c.0.s8 %v2321
        %v2323 = vlaneseq
        %v2324 = vshrl.u32 %v2323, 7
        %v2325 = vsub.s32 %v2322, %v2324
        %v2326 = vrot.slane %v2318, %v2325
        %2327 = vrot.lane.b32.xlu0 %v2326, 127
        %v2328 = vpop.permute.xlu0 %2327
        %v2330 = vsel %vm242, %v2328, 0
        %2332 = vmatprep.subr.bf16.mxu0 0
        %2333 = vmatpush1.bf16.msra.mxu0 %v2330
        %2334 = vmatprep.subr.bf16.mxu0 0
        %2335 = vmatpush1.bf16.msra.mxu0 0
        %2336 = vmatprep.subr.bf16.mxu0 0
        %2337 = vmatpush1.bf16.msra.mxu0 0
        %2338 = vmatprep.subr.bf16.mxu0 0
        %2339 = vmatpush1.bf16.msra.mxu0 0
        %2340 = vmatprep.subr.bf16.mxu0 0
        %2341 = vmatpush1.bf16.msra.mxu0 0
        %2342 = vmatprep.subr.bf16.mxu0 0
        %2343 = vmatpush1.bf16.msra.mxu0 0
        %2344 = vmatprep.subr.bf16.mxu0 0
        %2345 = vmatpush1.bf16.msra.mxu0 0
        %2346 = vmatprep.subr.bf16.mxu0 0
        %2347 = vmatpush1.bf16.msra.mxu0 0
        %2348 = vmatprep.subr.bf16.mxu0 0
        %2349 = vmatpush1.bf16.msra.mxu0 0
        %2350 = vmatprep.subr.bf16.mxu0 0
        %2351 = vmatpush1.bf16.msra.mxu0 0
        %2352 = vmatprep.subr.bf16.mxu0 0
        %2353 = vmatpush1.bf16.msra.mxu0 0
        %2354 = vmatprep.subr.bf16.mxu0 0
        %2355 = vmatpush1.bf16.msra.mxu0 0
        %2356 = vmatprep.subr.bf16.mxu0 0
        %2357 = vmatpush1.bf16.msra.mxu0 0
        %2358 = vmatprep.subr.bf16.mxu0 0
        %2359 = vmatpush1.bf16.msra.mxu0 0
        %2360 = vmatprep.subr.bf16.mxu0 0
        %2361 = vmatpush1.bf16.msra.mxu0 0
        %2362 = vmatprep.subr.bf16.mxu0 0
        %2363 = vmatpush1.bf16.msra.mxu0 0
        %2364 = vmatprep.mubr.bf16.mxu0 0
        %2365 = vmatmul.mubr.bf16.gmra.mrb[0].mxu0 %v240
        %v2366 = vpop.f32.mrb[0].mxu0
        %v2367 = vadd.f32 0.0, %v2366
        %v2368 = vpop.f32.mrb[0].mxu0
        %v2369 = vpop.f32.mrb[0].mxu0
        %v2370 = vpop.f32.mrb[0].mxu0
        %2371 = vdwg.mxu0
        %v2373 = vsel %vm242, %v2318, 0
        %2375 = vmatprep.subr.bf16.mxu0 0
        %2376 = vmatpush1.bf16.msra.mxu0 %v2373
        %2377 = vmatprep.subr.bf16.mxu0 0
        %2378 = vmatpush1.bf16.msra.mxu0 0
        %2379 = vmatprep.subr.bf16.mxu0 0
        %2380 = vmatpush1.bf16.msra.mxu0 0
        %2381 = vmatprep.subr.bf16.mxu0 0
        %2382 = vmatpush1.bf16.msra.mxu0 0
        %2383 = vmatprep.subr.bf16.mxu0 0
        %2384 = vmatpush1.bf16.msra.mxu0 0
        %2385 = vmatprep.subr.bf16.mxu0 0
        %2386 = vmatpush1.bf16.msra.mxu0 0
        %2387 = vmatprep.subr.bf16.mxu0 0
        %2388 = vmatpush1.bf16.msra.mxu0 0
        %2389 = vmatprep.subr.bf16.mxu0 0
        %2390 = vmatpush1.bf16.msra.mxu0 0
        %2391 = vmatprep.subr.bf16.mxu0 0
        %2392 = vmatpush1.bf16.msra.mxu0 0
        %2393 = vmatprep.subr.bf16.mxu0 0
        %2394 = vmatpush1.bf16.msra.mxu0 0
        %2395 = vmatprep.subr.bf16.mxu0 0
        %2396 = vmatpush1.bf16.msra.mxu0 0
        %2397 = vmatprep.subr.bf16.mxu0 0
        %2398 = vmatpush1.bf16.msra.mxu0 0
        %2399 = vmatprep.subr.bf16.mxu0 0
        %2400 = vmatpush1.bf16.msra.mxu0 0
        %2401 = vmatprep.subr.bf16.mxu0 0
        %2402 = vmatpush1.bf16.msra.mxu0 0
        %2403 = vmatprep.subr.bf16.mxu0 0
        %2404 = vmatpush1.bf16.msra.mxu0 0
        %2405 = vmatprep.subr.bf16.mxu0 0
        %2406 = vmatpush1.bf16.msra.mxu0 0
        %2407 = vmatprep.mubr.bf16.mxu0 0
        %2408 = vmatmul.mubr.bf16.gmra.mrb[0].mxu0 %v287
        %v2409 = vpop.f32.mrb[0].mxu0
        %v2410 = vadd.f32 %v2367, %v2409
        %v2411 = vpop.f32.mrb[0].mxu0
        %v2412 = vpop.f32.mrb[0].mxu0
        %v2413 = vpop.f32.mrb[0].mxu0
        %2414 = vdwg.mxu0
        %2415 = vrot.lane.b32.xlu0 %v2326, 126
        %v2416 = vpop.permute.xlu0 %2415
        %v2418 = vsel %vm242, %v2416, 0
        %2420 = vmatprep.subr.bf16.mxu0 0
        %2421 = vmatpush1.bf16.msra.mxu0 %v2418
        %2422 = vmatprep.subr.bf16.mxu0 0
        %2423 = vmatpush1.bf16.msra.mxu0 0
        %2424 = vmatprep.subr.bf16.mxu0 0
        %2425 = vmatpush1.bf16.msra.mxu0 0
        %2426 = vmatprep.subr.bf16.mxu0 0
        %2427 = vmatpush1.bf16.msra.mxu0 0
        %2428 = vmatprep.subr.bf16.mxu0 0
        %2429 = vmatpush1.bf16.msra.mxu0 0
        %2430 = vmatprep.subr.bf16.mxu0 0
        %2431 = vmatpush1.bf16.msra.mxu0 0
        %2432 = vmatprep.subr.bf16.mxu0 0
        %2433 = vmatpush1.bf16.msra.mxu0 0
        %2434 = vmatprep.subr.bf16.mxu0 0
        %2435 = vmatpush1.bf16.msra.mxu0 0
        %2436 = vmatprep.subr.bf16.mxu0 0
        %2437 = vmatpush1.bf16.msra.mxu0 0
        %2438 = vmatprep.subr.bf16.mxu0 0
        %2439 = vmatpush1.bf16.msra.mxu0 0
        %2440 = vmatprep.subr.bf16.mxu0 0
        %2441 = vmatpush1.bf16.msra.mxu0 0
        %2442 = vmatprep.subr.bf16.mxu0 0
        %2443 = vmatpush1.bf16.msra.mxu0 0
        %2444 = vmatprep.subr.bf16.mxu0 0
        %2445 = vmatpush1.bf16.msra.mxu0 0
        %2446 = vmatprep.subr.bf16.mxu0 0
        %2447 = vmatpush1.bf16.msra.mxu0 0
        %2448 = vmatprep.subr.bf16.mxu0 0
        %2449 = vmatpush1.bf16.msra.mxu0 0
        %2450 = vmatprep.subr.bf16.mxu0 0
        %2451 = vmatpush1.bf16.msra.mxu0 0
        %2452 = vmatprep.mubr.bf16.mxu0 0
        %2453 = vmatmul.mubr.bf16.gmra.mrb[0].mxu0 %v335
        %v2454 = vpop.f32.mrb[0].mxu0
        %v2455 = vadd.f32 0.0, %v2454
        %v2456 = vpop.f32.mrb[0].mxu0
        %v2457 = vpop.f32.mrb[0].mxu0
        %v2458 = vpop.f32.mrb[0].mxu0
        %2459 = vdwg.mxu0
        %v2460 = vadd.f32 %v2410, %v2455
        %s2461 = sadd.s32 %s2315, 1
        %s2462 = smul.addr %s2461, 2
        %s2463 = scalar_lea.vmem %s180, %s2462 [#allocation2]
        %v2464 = vld [vmem:[%s2463] sm:$0x3]
        %v2466 = vsel %vm242, %v2464, 0
        %2468 = vmatprep.subr.bf16.mxu0 0
        %2469 = vmatpush1.bf16.msra.mxu0 %v2466
        %2470 = vmatprep.subr.bf16.mxu0 0
        %2471 = vmatpush1.bf16.msra.mxu0 0
        %2472 = vmatprep.subr.bf16.mxu0 0
        %2473 = vmatpush1.bf16.msra.mxu0 0
        %2474 = vmatprep.subr.bf16.mxu0 0
        %2475 = vmatpush1.bf16.msra.mxu0 0
        %2476 = vmatprep.subr.bf16.mxu0 0
        %2477 = vmatpush1.bf16.msra.mxu0 0
        %2478 = vmatprep.subr.bf16.mxu0 0
        %2479 = vmatpush1.bf16.msra.mxu0 0
        %2480 = vmatprep.subr.bf16.mxu0 0
        %2481 = vmatpush1.bf16.msra.mxu0 0
        %2482 = vmatprep.subr.bf16.mxu0 0
        %2483 = vmatpush1.bf16.msra.mxu0 0
        %2484 = vmatprep.subr.bf16.mxu0 0
        %2485 = vmatpush1.bf16.msra.mxu0 0
        %2486 = vmatprep.subr.bf16.mxu0 0
        %2487 = vmatpush1.bf16.msra.mxu0 0
        %2488 = vmatprep.subr.bf16.mxu0 0
        %2489 = vmatpush1.bf16.msra.mxu0 0
        %2490 = vmatprep.subr.bf16.mxu0 0
        %2491 = vmatpush1.bf16.msra.mxu0 0
        %2492 = vmatprep.subr.bf16.mxu0 0
        %2493 = vmatpush1.bf16.msra.mxu0 0
        %2494 = vmatprep.subr.bf16.mxu0 0
        %2495 = vmatpush1.bf16.msra.mxu0 0
        %2496 = vmatprep.subr.bf16.mxu0 0
        %2497 = vmatpush1.bf16.msra.mxu0 0
        %2498 = vmatprep.subr.bf16.mxu0 0
        %2499 = vmatpush1.bf16.msra.mxu0 0
        %2500 = vmatprep.mubr.bf16.mxu0 0
        %2501 = vmatmul.mubr.bf16.gmra.mrb[0].mxu0 %v386
        %v2502 = vpop.f32.mrb[0].mxu0
        %v2503 = vadd.f32 0.0, %v2502
        %v2504 = vpop.f32.mrb[0].mxu0
        %v2505 = vpop.f32.mrb[0].mxu0
        %v2506 = vpop.f32.mrb[0].mxu0
        %2507 = vdwg.mxu0
        %v2508 = vadd.f32 %v2460, %v2503
        %v2511 = vunpack.c.l.s4 1983009808
        %v2512 = vunpack.c.0.s8 %v2511
        %v2513 = vlaneseq
        %v2514 = vshrl.u32 %v2513, 7
        %v2515 = vsub.s32 %v2512, %v2514
        %v2516 = vrot.slane %v2464, %v2515
        %2517 = vrot.lane.b32.xlu0 %v2516, 127
        %v2518 = vpop.permute.xlu0 %2517
        %v2520 = vsel %vm242, %v2518, 0
        %2522 = vmatprep.subr.bf16.mxu0 0
        %2523 = vmatpush1.bf16.msra.mxu0 %v2520
        %2524 = vmatprep.subr.bf16.mxu0 0
        %2525 = vmatpush1.bf16.msra.mxu0 0
        %2526 = vmatprep.subr.bf16.mxu0 0
        %2527 = vmatpush1.bf16.msra.mxu0 0
        %2528 = vmatprep.subr.bf16.mxu0 0
        %2529 = vmatpush1.bf16.msra.mxu0 0
        %2530 = vmatprep.subr.bf16.mxu0 0
        %2531 = vmatpush1.bf16.msra.mxu0 0
        %2532 = vmatprep.subr.bf16.mxu0 0
        %2533 = vmatpush1.bf16.msra.mxu0 0
        %2534 = vmatprep.subr.bf16.mxu0 0
        %2535 = vmatpush1.bf16.msra.mxu0 0
        %2536 = vmatprep.subr.bf16.mxu0 0
        %2537 = vmatpush1.bf16.msra.mxu0 0
        %2538 = vmatprep.subr.bf16.mxu0 0
        %2539 = vmatpush1.bf16.msra.mxu0 0
        %2540 = vmatprep.subr.bf16.mxu0 0
        %2541 = vmatpush1.bf16.msra.mxu0 0
        %2542 = vmatprep.subr.bf16.mxu0 0
        %2543 = vmatpush1.bf16.msra.mxu0 0
        %2544 = vmatprep.subr.bf16.mxu0 0
        %2545 = vmatpush1.bf16.msra.mxu0 0
        %2546 = vmatprep.subr.bf16.mxu0 0
        %2547 = vmatpush1.bf16.msra.mxu0 0
        %2548 = vmatprep.subr.bf16.mxu0 0
        %2549 = vmatpush1.bf16.msra.mxu0 0
        %2550 = vmatprep.subr.bf16.mxu0 0
        %2551 = vmatpush1.bf16.msra.mxu0 0
        %2552 = vmatprep.subr.bf16.mxu0 0
        %2553 = vmatpush1.bf16.msra.mxu0 0
        %2554 = vmatprep.mubr.bf16.mxu0 0
        %2555 = vmatmul.mubr.bf16.gmra.mrb[0].mxu0 %v443
        %v2556 = vpop.f32.mrb[0].mxu0
        %v2557 = vadd.f32 0.0, %v2556
        %v2558 = vpop.f32.mrb[0].mxu0
        %v2559 = vpop.f32.mrb[0].mxu0
        %v2560 = vpop.f32.mrb[0].mxu0
        %2561 = vdwg.mxu0
        %v2562 = vadd.f32 %v2508, %v2557
        %2563 = vrot.lane.b32.xlu0 %v2516, 126
        %v2564 = vpop.permute.xlu0 %2563
        %v2566 = vsel %vm242, %v2564, 0
        %2568 = vmatprep.subr.bf16.mxu0 0
        %2569 = vmatpush1.bf16.msra.mxu0 %v2566
        %2570 = vmatprep.subr.bf16.mxu0 0
        %2571 = vmatpush1.bf16.msra.mxu0 0
        %2572 = vmatprep.subr.bf16.mxu0 0
        %2573 = vmatpush1.bf16.msra.mxu0 0
        %2574 = vmatprep.subr.bf16.mxu0 0
        %2575 = vmatpush1.bf16.msra.mxu0 0
        %2576 = vmatprep.subr.bf16.mxu0 0
        %2577 = vmatpush1.bf16.msra.mxu0 0
        %2578 = vmatprep.subr.bf16.mxu0 0
        %2579 = vmatpush1.bf16.msra.mxu0 0
        %2580 = vmatprep.subr.bf16.mxu0 0
        %2581 = vmatpush1.bf16.msra.mxu0 0
        %2582 = vmatprep.subr.bf16.mxu0 0
        %2583 = vmatpush1.bf16.msra.mxu0 0
        %2584 = vmatprep.subr.bf16.mxu0 0
        %2585 = vmatpush1.bf16.msra.mxu0 0
        %2586 = vmatprep.subr.bf16.mxu0 0
        %2587 = vmatpush1.bf16.msra.mxu0 0
        %2588 = vmatprep.subr.bf16.mxu0 0
        %2589 = vmatpush1.bf16.msra.mxu0 0
        %2590 = vmatprep.subr.bf16.mxu0 0
        %2591 = vmatpush1.bf16.msra.mxu0 0
        %2592 = vmatprep.subr.bf16.mxu0 0
        %2593 = vmatpush1.bf16.msra.mxu0 0
        %2594 = vmatprep.subr.bf16.mxu0 0
        %2595 = vmatpush1.bf16.msra.mxu0 0
        %2596 = vmatprep.subr.bf16.mxu0 0
        %2597 = vmatpush1.bf16.msra.mxu0 0
        %2598 = vmatprep.subr.bf16.mxu0 0
        %2599 = vmatpush1.bf16.msra.mxu0 0
        %2600 = vmatprep.mubr.bf16.mxu0 0
        %2601 = vmatmul.mubr.bf16.gmra.mrb[0].mxu0 %v492
        %v2602 = vpop.f32.mrb[0].mxu0
        %v2603 = vadd.f32 0.0, %v2602
        %v2604 = vpop.f32.mrb[0].mxu0
        %v2605 = vpop.f32.mrb[0].mxu0
        %v2606 = vpop.f32.mrb[0].mxu0
        %2607 = vdwg.mxu0
        %v2608 = vadd.f32 %v2562, %v2603
        %s2609 = sadd.s32 %s2315, 2
        %s2610 = smul.addr %s2609, 2
        %s2611 = scalar_lea.vmem %s180, %s2610 [#allocation2]
        %v2612 = vld [vmem:[%s2611] sm:$0x3]
        %v2614 = vsel %vm242, %v2612, 0
        %2616 = vmatprep.subr.bf16.mxu0 0
        %2617 = vmatpush1.bf16.msra.mxu0 %v2614
        %2618 = vmatprep.subr.bf16.mxu0 0
        %2619 = vmatpush1.bf16.msra.mxu0 0
        %2620 = vmatprep.subr.bf16.mxu0 0
        %2621 = vmatpush1.bf16.msra.mxu0 0
        %2622 = vmatprep.subr.bf16.mxu0 0
        %2623 = vmatpush1.bf16.msra.mxu0 0
        %2624 = vmatprep.subr.bf16.mxu0 0
        %2625 = vmatpush1.bf16.msra.mxu0 0
        %2626 = vmatprep.subr.bf16.mxu0 0
        %2627 = vmatpush1.bf16.msra.mxu0 0
        %2628 = vmatprep.subr.bf16.mxu0 0
        %2629 = vmatpush1.bf16.msra.mxu0 0
        %2630 = vmatprep.subr.bf16.mxu0 0
        %2631 = vmatpush1.bf16.msra.mxu0 0
        %2632 = vmatprep.subr.bf16.mxu0 0
        %2633 = vmatpush1.bf16.msra.mxu0 0
        %2634 = vmatprep.subr.bf16.mxu0 0
        %2635 = vmatpush1.bf16.msra.mxu0 0
        %2636 = vmatprep.subr.bf16.mxu0 0
        %2637 = vmatpush1.bf16.msra.mxu0 0
        %2638 = vmatprep.subr.bf16.mxu0 0
        %2639 = vmatpush1.bf16.msra.mxu0 0
        %2640 = vmatprep.subr.bf16.mxu0 0
        %2641 = vmatpush1.bf16.msra.mxu0 0
        %2642 = vmatprep.subr.bf16.mxu0 0
        %2643 = vmatpush1.bf16.msra.mxu0 0
        %2644 = vmatprep.subr.bf16.mxu0 0
        %2645 = vmatpush1.bf16.msra.mxu0 0
        %2646 = vmatprep.subr.bf16.mxu0 0
        %2647 = vmatpush1.bf16.msra.mxu0 0
        %2648 = vmatprep.mubr.bf16.mxu0 0
        %2649 = vmatmul.mubr.bf16.gmra.mrb[0].mxu0 %v543
        %v2650 = vpop.f32.mrb[0].mxu0
        %v2651 = vadd.f32 0.0, %v2650
        %v2652 = vpop.f32.mrb[0].mxu0
        %v2653 = vpop.f32.mrb[0].mxu0
        %v2654 = vpop.f32.mrb[0].mxu0
        %2655 = vdwg.mxu0
        %v2656 = vadd.f32 %v2608, %v2651
        %v2659 = vunpack.c.l.s4 1983009808
        %v2660 = vunpack.c.0.s8 %v2659
        %v2661 = vlaneseq
        %v2662 = vshrl.u32 %v2661, 7
        %v2663 = vsub.s32 %v2660, %v2662
        %v2664 = vrot.slane %v2612, %v2663
        %2665 = vrot.lane.b32.xlu0 %v2664, 127
        %v2666 = vpop.permute.xlu0 %2665
        %v2668 = vsel %vm242, %v2666, 0
        %2670 = vmatprep.subr.bf16.mxu0 0
        %2671 = vmatpush1.bf16.msra.mxu0 %v2668
        %2672 = vmatprep.subr.bf16.mxu0 0
        %2673 = vmatpush1.bf16.msra.mxu0 0
        %2674 = vmatprep.subr.bf16.mxu0 0
        %2675 = vmatpush1.bf16.msra.mxu0 0
        %2676 = vmatprep.subr.bf16.mxu0 0
        %2677 = vmatpush1.bf16.msra.mxu0 0
        %2678 = vmatprep.subr.bf16.mxu0 0
        %2679 = vmatpush1.bf16.msra.mxu0 0
        %2680 = vmatprep.subr.bf16.mxu0 0
        %2681 = vmatpush1.bf16.msra.mxu0 0
        %2682 = vmatprep.subr.bf16.mxu0 0
        %2683 = vmatpush1.bf16.msra.mxu0 0
        %2684 = vmatprep.subr.bf16.mxu0 0
        %2685 = vmatpush1.bf16.msra.mxu0 0
        %2686 = vmatprep.subr.bf16.mxu0 0
        %2687 = vmatpush1.bf16.msra.mxu0 0
        %2688 = vmatprep.subr.bf16.mxu0 0
        %2689 = vmatpush1.bf16.msra.mxu0 0
        %2690 = vmatprep.subr.bf16.mxu0 0
        %2691 = vmatpush1.bf16.msra.mxu0 0
        %2692 = vmatprep.subr.bf16.mxu0 0
        %2693 = vmatpush1.bf16.msra.mxu0 0
        %2694 = vmatprep.subr.bf16.mxu0 0
        %2695 = vmatpush1.bf16.msra.mxu0 0
        %2696 = vmatprep.subr.bf16.mxu0 0
        %2697 = vmatpush1.bf16.msra.mxu0 0
        %2698 = vmatprep.subr.bf16.mxu0 0
        %2699 = vmatpush1.bf16.msra.mxu0 0
        %2700 = vmatprep.subr.bf16.mxu0 0
        %2701 = vmatpush1.bf16.msra.mxu0 0
        %2702 = vmatprep.mubr.bf16.mxu0 0
        %2703 = vmatmul.mubr.bf16.gmra.mrb[0].mxu0 %v600
        %v2704 = vpop.f32.mrb[0].mxu0
        %v2705 = vadd.f32 0.0, %v2704
        %v2706 = vpop.f32.mrb[0].mxu0
        %v2707 = vpop.f32.mrb[0].mxu0
        %v2708 = vpop.f32.mrb[0].mxu0
        %2709 = vdwg.mxu0
        %v2710 = vadd.f32 %v2656, %v2705
        %2711 = vrot.lane.b32.xlu0 %v2664, 126
        %v2712 = vpop.permute.xlu0 %2711
        %v2714 = vsel %vm242, %v2712, 0
        %2716 = vmatprep.subr.bf16.mxu0 0
        %2717 = vmatpush1.bf16.msra.mxu0 %v2714
        %2718 = vmatprep.subr.bf16.mxu0 0
        %2719 = vmatpush1.bf16.msra.mxu0 0
        %2720 = vmatprep.subr.bf16.mxu0 0
        %2721 = vmatpush1.bf16.msra.mxu0 0
        %2722 = vmatprep.subr.bf16.mxu0 0
        %2723 = vmatpush1.bf16.msra.mxu0 0
        %2724 = vmatprep.subr.bf16.mxu0 0
        %2725 = vmatpush1.bf16.msra.mxu0 0
        %2726 = vmatprep.subr.bf16.mxu0 0
        %2727 = vmatpush1.bf16.msra.mxu0 0
        %2728 = vmatprep.subr.bf16.mxu0 0
        %2729 = vmatpush1.bf16.msra.mxu0 0
        %2730 = vmatprep.subr.bf16.mxu0 0
        %2731 = vmatpush1.bf16.msra.mxu0 0
        %2732 = vmatprep.subr.bf16.mxu0 0
        %2733 = vmatpush1.bf16.msra.mxu0 0
        %2734 = vmatprep.subr.bf16.mxu0 0
        %2735 = vmatpush1.bf16.msra.mxu0 0
        %2736 = vmatprep.subr.bf16.mxu0 0
        %2737 = vmatpush1.bf16.msra.mxu0 0
        %2738 = vmatprep.subr.bf16.mxu0 0
        %2739 = vmatpush1.bf16.msra.mxu0 0
        %2740 = vmatprep.subr.bf16.mxu0 0
        %2741 = vmatpush1.bf16.msra.mxu0 0
        %2742 = vmatprep.subr.bf16.mxu0 0
        %2743 = vmatpush1.bf16.msra.mxu0 0
        %2744 = vmatprep.subr.bf16.mxu0 0
        %2745 = vmatpush1.bf16.msra.mxu0 0
        %2746 = vmatprep.subr.bf16.mxu0 0
        %2747 = vmatpush1.bf16.msra.mxu0 0
        %2748 = vmatprep.mubr.bf16.mxu0 0
        %2749 = vmatmul.mubr.bf16.gmra.mrb[0].mxu0 %v649
        %v2750 = vpop.f32.mrb[0].mxu0
        %v2751 = vadd.f32 0.0, %v2750
        %v2752 = vpop.f32.mrb[0].mxu0
        %v2753 = vpop.f32.mrb[0].mxu0
        %v2754 = vpop.f32.mrb[0].mxu0
        %2755 = vdwg.mxu0
        %v2756 = vadd.f32 %v2710, %v2751
        %v2757 = vadd.f32 %v2756, %v698
        %vm2758 = vcmp.gt.f32.partialorder %v2757, 0.0
        %v2759 = vmul.f32 %v2757, 0.1
        %v2760 = vsel %vm2758, %v2757, %v2759
        %v2762 = vcombine.high %v2760, %v2760
        %v2764 = vunpack.c.l.s4 1966171168
        %v2765 = vunpack.c.0.s8 %v2764
        %v2766 = vlaneseq
        %v2767 = vshrl.u32 %v2766, 7
        %v2768 = vsub.s32 %v2765, %v2767
        %v2769 = vrot.slane %v2760, %v2768
        %v2771 = vunpack.c.l.s4 1966171168
        %v2772 = vunpack.c.0.s8 %v2771
        %v2773 = vlaneseq
        %v2774 = vshrl.u32 %v2773, 7
        %v2775 = vsub.s32 %v2772, %v2774
        %v2776 = vrot.slane %v2762, %v2775
        %v2777 = vcombine.high %v2769, %v2769
        %v2778 = vcombine.high %v2776, %v2776
        %v2780 = vunpack.c.l.s4 1966171168
        %v2781 = vunpack.c.0.s8 %v2780
        %v2782 = vlaneseq
        %v2783 = vshrl.u32 %v2782, 7
        %v2784 = vsub.s32 %v2781, %v2783
        %v2785 = vrot.slane %v2769, %v2784
        %v2787 = vunpack.c.l.s4 1966171168
        %v2788 = vunpack.c.0.s8 %v2787
        %v2789 = vlaneseq
        %v2790 = vshrl.u32 %v2789, 7
        %v2791 = vsub.s32 %v2788, %v2790
        %v2792 = vrot.slane %v2776, %v2791
        %v2794 = vunpack.c.l.s4 1966171168
        %v2795 = vunpack.c.0.s8 %v2794
        %v2796 = vlaneseq
        %v2797 = vshrl.u32 %v2796, 7
        %v2798 = vsub.s32 %v2795, %v2797
        %v2799 = vrot.slane %v2777, %v2798
        %v2801 = vunpack.c.l.s4 1966171168
        %v2802 = vunpack.c.0.s8 %v2801
        %v2803 = vlaneseq
        %v2804 = vshrl.u32 %v2803, 7
        %v2805 = vsub.s32 %v2802, %v2804
        %v2806 = vrot.slane %v2778, %v2805
        %v2807 = vcombine.high %v2785, %v2785
        %v2808 = vcombine.high %v2792, %v2792
        %v2809 = vcombine.high %v2799, %v2799
        %v2810 = vcombine.high %v2806, %v2806
        %2819 = vst.msk [vmem:[%s202 + $0x4] sm:$0x1] %vm762, %v2785
        %2820 = vst.msk [vmem:[%s202 + $0xc] sm:$0x1] %vm762, %v2799
        %2821 = vst.msk [vmem:[%s202 + $0x14] sm:$0x1] %vm762, %v2807
        %2822 = vst.msk [vmem:[%s202 + $0x1c] sm:$0x1] %vm762, %v2809
        %2823 = vst.msk [vmem:[%s202 + $0x24] sm:$0x1] %vm762, %v2792
        %2824 = vst.msk [vmem:[%s202 + $0x2c] sm:$0x1] %vm762, %v2806
        %2825 = vst.msk [vmem:[%s202 + $0x34] sm:$0x1] %vm762, %v2808
        %2826 = vst.msk [vmem:[%s202 + $0x3c] sm:$0x1] %vm762, %v2810
        %s2827 = sadd.s32 %s222, 5
        %p2828 = scmp.lt.s32.totalorder %s2827, 15
        %s2829 = scalar_select %p2828, %s2827, 15
        %s2830 = smul.addr %s2829, 2
        %s2831 = scalar_lea.vmem %s180, %s2830 [#allocation2]
        %v2832 = vld [vmem:[%s2831] sm:$0x3]
        %v2835 = vunpack.c.l.s4 1983009808
        %v2836 = vunpack.c.0.s8 %v2835
        %v2837 = vlaneseq
        %v2838 = vshrl.u32 %v2837, 7
        %v2839 = vsub.s32 %v2836, %v2838
        %v2840 = vrot.slane %v2832, %v2839
        %2841 = vrot.lane.b32.xlu0 %v2840, 127
        %v2842 = vpop.permute.xlu0 %2841
        %v2844 = vsel %vm242, %v2842, 0
        %2846 = vmatprep.subr.bf16.mxu0 0
        %2847 = vmatpush1.bf16.msra.mxu0 %v2844
        %2848 = vmatprep.subr.bf16.mxu0 0
        %2849 = vmatpush1.bf16.msra.mxu0 0
        %2850 = vmatprep.subr.bf16.mxu0 0
        %2851 = vmatpush1.bf16.msra.mxu0 0
        %2852 = vmatprep.subr.bf16.mxu0 0
        %2853 = vmatpush1.bf16.msra.mxu0 0
        %2854 = vmatprep.subr.bf16.mxu0 0
        %2855 = vmatpush1.bf16.msra.mxu0 0
        %2856 = vmatprep.subr.bf16.mxu0 0
        %2857 = vmatpush1.bf16.msra.mxu0 0
        %2858 = vmatprep.subr.bf16.mxu0 0
        %2859 = vmatpush1.bf16.msra.mxu0 0
        %2860 = vmatprep.subr.bf16.mxu0 0
        %2861 = vmatpush1.bf16.msra.mxu0 0
        %2862 = vmatprep.subr.bf16.mxu0 0
        %2863 = vmatpush1.bf16.msra.mxu0 0
        %2864 = vmatprep.subr.bf16.mxu0 0
        %2865 = vmatpush1.bf16.msra.mxu0 0
        %2866 = vmatprep.subr.bf16.mxu0 0
        %2867 = vmatpush1.bf16.msra.mxu0 0
        %2868 = vmatprep.subr.bf16.mxu0 0
        %2869 = vmatpush1.bf16.msra.mxu0 0
        %2870 = vmatprep.subr.bf16.mxu0 0
        %2871 = vmatpush1.bf16.msra.mxu0 0
        %2872 = vmatprep.subr.bf16.mxu0 0
        %2873 = vmatpush1.bf16.msra.mxu0 0
        %2874 = vmatprep.subr.bf16.mxu0 0
        %2875 = vmatpush1.bf16.msra.mxu0 0
        %2876 = vmatprep.subr.bf16.mxu0 0
        %2877 = vmatpush1.bf16.msra.mxu0 0
        %2878 = vmatprep.mubr.bf16.mxu0 0
        %2879 = vmatmul.mubr.bf16.gmra.mrb[0].mxu0 %v240
        %v2880 = vpop.f32.mrb[0].mxu0
        %v2881 = vadd.f32 0.0, %v2880
        %v2882 = vpop.f32.mrb[0].mxu0
        %v2883 = vpop.f32.mrb[0].mxu0
        %v2884 = vpop.f32.mrb[0].mxu0
        %2885 = vdwg.mxu0
        %v2887 = vsel %vm242, %v2832, 0
        %2889 = vmatprep.subr.bf16.mxu0 0
        %2890 = vmatpush1.bf16.msra.mxu0 %v2887
        %2891 = vmatprep.subr.bf16.mxu0 0
        %2892 = vmatpush1.bf16.msra.mxu0 0
        %2893 = vmatprep.subr.bf16.mxu0 0
        %2894 = vmatpush1.bf16.msra.mxu0 0
        %2895 = vmatprep.subr.bf16.mxu0 0
        %2896 = vmatpush1.bf16.msra.mxu0 0
        %2897 = vmatprep.subr.bf16.mxu0 0
        %2898 = vmatpush1.bf16.msra.mxu0 0
        %2899 = vmatprep.subr.bf16.mxu0 0
        %2900 = vmatpush1.bf16.msra.mxu0 0
        %2901 = vmatprep.subr.bf16.mxu0 0
        %2902 = vmatpush1.bf16.msra.mxu0 0
        %2903 = vmatprep.subr.bf16.mxu0 0
        %2904 = vmatpush1.bf16.msra.mxu0 0
        %2905 = vmatprep.subr.bf16.mxu0 0
        %2906 = vmatpush1.bf16.msra.mxu0 0
        %2907 = vmatprep.subr.bf16.mxu0 0
        %2908 = vmatpush1.bf16.msra.mxu0 0
        %2909 = vmatprep.subr.bf16.mxu0 0
        %2910 = vmatpush1.bf16.msra.mxu0 0
        %2911 = vmatprep.subr.bf16.mxu0 0
        %2912 = vmatpush1.bf16.msra.mxu0 0
        %2913 = vmatprep.subr.bf16.mxu0 0
        %2914 = vmatpush1.bf16.msra.mxu0 0
        %2915 = vmatprep.subr.bf16.mxu0 0
        %2916 = vmatpush1.bf16.msra.mxu0 0
        %2917 = vmatprep.subr.bf16.mxu0 0
        %2918 = vmatpush1.bf16.msra.mxu0 0
        %2919 = vmatprep.subr.bf16.mxu0 0
        %2920 = vmatpush1.bf16.msra.mxu0 0
        %2921 = vmatprep.mubr.bf16.mxu0 0
        %2922 = vmatmul.mubr.bf16.gmra.mrb[0].mxu0 %v287
        %v2923 = vpop.f32.mrb[0].mxu0
        %v2924 = vadd.f32 %v2881, %v2923
        %v2925 = vpop.f32.mrb[0].mxu0
        %v2926 = vpop.f32.mrb[0].mxu0
        %v2927 = vpop.f32.mrb[0].mxu0
        %2928 = vdwg.mxu0
        %2929 = vrot.lane.b32.xlu0 %v2840, 126
        %v2930 = vpop.permute.xlu0 %2929
        %v2932 = vsel %vm242, %v2930, 0
        %2934 = vmatprep.subr.bf16.mxu0 0
        %2935 = vmatpush1.bf16.msra.mxu0 %v2932
        %2936 = vmatprep.subr.bf16.mxu0 0
        %2937 = vmatpush1.bf16.msra.mxu0 0
        %2938 = vmatprep.subr.bf16.mxu0 0
        %2939 = vmatpush1.bf16.msra.mxu0 0
        %2940 = vmatprep.subr.bf16.mxu0 0
        %2941 = vmatpush1.bf16.msra.mxu0 0
        %2942 = vmatprep.subr.bf16.mxu0 0
        %2943 = vmatpush1.bf16.msra.mxu0 0
        %2944 = vmatprep.subr.bf16.mxu0 0
        %2945 = vmatpush1.bf16.msra.mxu0 0
        %2946 = vmatprep.subr.bf16.mxu0 0
        %2947 = vmatpush1.bf16.msra.mxu0 0
        %2948 = vmatprep.subr.bf16.mxu0 0
        %2949 = vmatpush1.bf16.msra.mxu0 0
        %2950 = vmatprep.subr.bf16.mxu0 0
        %2951 = vmatpush1.bf16.msra.mxu0 0
        %2952 = vmatprep.subr.bf16.mxu0 0
        %2953 = vmatpush1.bf16.msra.mxu0 0
        %2954 = vmatprep.subr.bf16.mxu0 0
        %2955 = vmatpush1.bf16.msra.mxu0 0
        %2956 = vmatprep.subr.bf16.mxu0 0
        %2957 = vmatpush1.bf16.msra.mxu0 0
        %2958 = vmatprep.subr.bf16.mxu0 0
        %2959 = vmatpush1.bf16.msra.mxu0 0
        %2960 = vmatprep.subr.bf16.mxu0 0
        %2961 = vmatpush1.bf16.msra.mxu0 0
        %2962 = vmatprep.subr.bf16.mxu0 0
        %2963 = vmatpush1.bf16.msra.mxu0 0
        %2964 = vmatprep.subr.bf16.mxu0 0
        %2965 = vmatpush1.bf16.msra.mxu0 0
        %2966 = vmatprep.mubr.bf16.mxu0 0
        %2967 = vmatmul.mubr.bf16.gmra.mrb[0].mxu0 %v335
        %v2968 = vpop.f32.mrb[0].mxu0
        %v2969 = vadd.f32 0.0, %v2968
        %v2970 = vpop.f32.mrb[0].mxu0
        %v2971 = vpop.f32.mrb[0].mxu0
        %v2972 = vpop.f32.mrb[0].mxu0
        %2973 = vdwg.mxu0
        %v2974 = vadd.f32 %v2924, %v2969
        %s2975 = sadd.s32 %s2829, 1
        %s2976 = smul.addr %s2975, 2
        %s2977 = scalar_lea.vmem %s180, %s2976 [#allocation2]
        %v2978 = vld [vmem:[%s2977] sm:$0x3]
        %v2980 = vsel %vm242, %v2978, 0
        %2982 = vmatprep.subr.bf16.mxu0 0
        %2983 = vmatpush1.bf16.msra.mxu0 %v2980
        %2984 = vmatprep.subr.bf16.mxu0 0
        %2985 = vmatpush1.bf16.msra.mxu0 0
        %2986 = vmatprep.subr.bf16.mxu0 0
        %2987 = vmatpush1.bf16.msra.mxu0 0
        %2988 = vmatprep.subr.bf16.mxu0 0
        %2989 = vmatpush1.bf16.msra.mxu0 0
        %2990 = vmatprep.subr.bf16.mxu0 0
        %2991 = vmatpush1.bf16.msra.mxu0 0
        %2992 = vmatprep.subr.bf16.mxu0 0
        %2993 = vmatpush1.bf16.msra.mxu0 0
        %2994 = vmatprep.subr.bf16.mxu0 0
        %2995 = vmatpush1.bf16.msra.mxu0 0
        %2996 = vmatprep.subr.bf16.mxu0 0
        %2997 = vmatpush1.bf16.msra.mxu0 0
        %2998 = vmatprep.subr.bf16.mxu0 0
        %2999 = vmatpush1.bf16.msra.mxu0 0
        %3000 = vmatprep.subr.bf16.mxu0 0
        %3001 = vmatpush1.bf16.msra.mxu0 0
        %3002 = vmatprep.subr.bf16.mxu0 0
        %3003 = vmatpush1.bf16.msra.mxu0 0
        %3004 = vmatprep.subr.bf16.mxu0 0
        %3005 = vmatpush1.bf16.msra.mxu0 0
        %3006 = vmatprep.subr.bf16.mxu0 0
        %3007 = vmatpush1.bf16.msra.mxu0 0
        %3008 = vmatprep.subr.bf16.mxu0 0
        %3009 = vmatpush1.bf16.msra.mxu0 0
        %3010 = vmatprep.subr.bf16.mxu0 0
        %3011 = vmatpush1.bf16.msra.mxu0 0
        %3012 = vmatprep.subr.bf16.mxu0 0
        %3013 = vmatpush1.bf16.msra.mxu0 0
        %3014 = vmatprep.mubr.bf16.mxu0 0
        %3015 = vmatmul.mubr.bf16.gmra.mrb[0].mxu0 %v386
        %v3016 = vpop.f32.mrb[0].mxu0
        %v3017 = vadd.f32 0.0, %v3016
        %v3018 = vpop.f32.mrb[0].mxu0
        %v3019 = vpop.f32.mrb[0].mxu0
        %v3020 = vpop.f32.mrb[0].mxu0
        %3021 = vdwg.mxu0
        %v3022 = vadd.f32 %v2974, %v3017
        %v3025 = vunpack.c.l.s4 1983009808
        %v3026 = vunpack.c.0.s8 %v3025
        %v3027 = vlaneseq
        %v3028 = vshrl.u32 %v3027, 7
        %v3029 = vsub.s32 %v3026, %v3028
        %v3030 = vrot.slane %v2978, %v3029
        %3031 = vrot.lane.b32.xlu0 %v3030, 127
        %v3032 = vpop.permute.xlu0 %3031
        %v3034 = vsel %vm242, %v3032, 0
        %3036 = vmatprep.subr.bf16.mxu0 0
        %3037 = vmatpush1.bf16.msra.mxu0 %v3034
        %3038 = vmatprep.subr.bf16.mxu0 0
        %3039 = vmatpush1.bf16.msra.mxu0 0
        %3040 = vmatprep.subr.bf16.mxu0 0
        %3041 = vmatpush1.bf16.msra.mxu0 0
        %3042 = vmatprep.subr.bf16.mxu0 0
        %3043 = vmatpush1.bf16.msra.mxu0 0
        %3044 = vmatprep.subr.bf16.mxu0 0
        %3045 = vmatpush1.bf16.msra.mxu0 0
        %3046 = vmatprep.subr.bf16.mxu0 0
        %3047 = vmatpush1.bf16.msra.mxu0 0
        %3048 = vmatprep.subr.bf16.mxu0 0
        %3049 = vmatpush1.bf16.msra.mxu0 0
        %3050 = vmatprep.subr.bf16.mxu0 0
        %3051 = vmatpush1.bf16.msra.mxu0 0
        %3052 = vmatprep.subr.bf16.mxu0 0
        %3053 = vmatpush1.bf16.msra.mxu0 0
        %3054 = vmatprep.subr.bf16.mxu0 0
        %3055 = vmatpush1.bf16.msra.mxu0 0
        %3056 = vmatprep.subr.bf16.mxu0 0
        %3057 = vmatpush1.bf16.msra.mxu0 0
        %3058 = vmatprep.subr.bf16.mxu0 0
        %3059 = vmatpush1.bf16.msra.mxu0 0
        %3060 = vmatprep.subr.bf16.mxu0 0
        %3061 = vmatpush1.bf16.msra.mxu0 0
        %3062 = vmatprep.subr.bf16.mxu0 0
        %3063 = vmatpush1.bf16.msra.mxu0 0
        %3064 = vmatprep.subr.bf16.mxu0 0
        %3065 = vmatpush1.bf16.msra.mxu0 0
        %3066 = vmatprep.subr.bf16.mxu0 0
        %3067 = vmatpush1.bf16.msra.mxu0 0
        %3068 = vmatprep.mubr.bf16.mxu0 0
        %3069 = vmatmul.mubr.bf16.gmra.mrb[0].mxu0 %v443
        %v3070 = vpop.f32.mrb[0].mxu0
        %v3071 = vadd.f32 0.0, %v3070
        %v3072 = vpop.f32.mrb[0].mxu0
        %v3073 = vpop.f32.mrb[0].mxu0
        %v3074 = vpop.f32.mrb[0].mxu0
        %3075 = vdwg.mxu0
        %v3076 = vadd.f32 %v3022, %v3071
        %3077 = vrot.lane.b32.xlu0 %v3030, 126
        %v3078 = vpop.permute.xlu0 %3077
        %v3080 = vsel %vm242, %v3078, 0
        %3082 = vmatprep.subr.bf16.mxu0 0
        %3083 = vmatpush1.bf16.msra.mxu0 %v3080
        %3084 = vmatprep.subr.bf16.mxu0 0
        %3085 = vmatpush1.bf16.msra.mxu0 0
        %3086 = vmatprep.subr.bf16.mxu0 0
        %3087 = vmatpush1.bf16.msra.mxu0 0
        %3088 = vmatprep.subr.bf16.mxu0 0
        %3089 = vmatpush1.bf16.msra.mxu0 0
        %3090 = vmatprep.subr.bf16.mxu0 0
        %3091 = vmatpush1.bf16.msra.mxu0 0
        %3092 = vmatprep.subr.bf16.mxu0 0
        %3093 = vmatpush1.bf16.msra.mxu0 0
        %3094 = vmatprep.subr.bf16.mxu0 0
        %3095 = vmatpush1.bf16.msra.mxu0 0
        %3096 = vmatprep.subr.bf16.mxu0 0
        %3097 = vmatpush1.bf16.msra.mxu0 0
        %3098 = vmatprep.subr.bf16.mxu0 0
        %3099 = vmatpush1.bf16.msra.mxu0 0
        %3100 = vmatprep.subr.bf16.mxu0 0
        %3101 = vmatpush1.bf16.msra.mxu0 0
        %3102 = vmatprep.subr.bf16.mxu0 0
        %3103 = vmatpush1.bf16.msra.mxu0 0
        %3104 = vmatprep.subr.bf16.mxu0 0
        %3105 = vmatpush1.bf16.msra.mxu0 0
        %3106 = vmatprep.subr.bf16.mxu0 0
        %3107 = vmatpush1.bf16.msra.mxu0 0
        %3108 = vmatprep.subr.bf16.mxu0 0
        %3109 = vmatpush1.bf16.msra.mxu0 0
        %3110 = vmatprep.subr.bf16.mxu0 0
        %3111 = vmatpush1.bf16.msra.mxu0 0
        %3112 = vmatprep.subr.bf16.mxu0 0
        %3113 = vmatpush1.bf16.msra.mxu0 0
        %3114 = vmatprep.mubr.bf16.mxu0 0
        %3115 = vmatmul.mubr.bf16.gmra.mrb[0].mxu0 %v492
        %v3116 = vpop.f32.mrb[0].mxu0
        %v3117 = vadd.f32 0.0, %v3116
        %v3118 = vpop.f32.mrb[0].mxu0
        %v3119 = vpop.f32.mrb[0].mxu0
        %v3120 = vpop.f32.mrb[0].mxu0
        %3121 = vdwg.mxu0
        %v3122 = vadd.f32 %v3076, %v3117
        %s3123 = sadd.s32 %s2829, 2
        %s3124 = smul.addr %s3123, 2
        %s3125 = scalar_lea.vmem %s180, %s3124 [#allocation2]
        %v3126 = vld [vmem:[%s3125] sm:$0x3]
        %v3128 = vsel %vm242, %v3126, 0
        %3130 = vmatprep.subr.bf16.mxu0 0
        %3131 = vmatpush1.bf16.msra.mxu0 %v3128
        %3132 = vmatprep.subr.bf16.mxu0 0
        %3133 = vmatpush1.bf16.msra.mxu0 0
        %3134 = vmatprep.subr.bf16.mxu0 0
        %3135 = vmatpush1.bf16.msra.mxu0 0
        %3136 = vmatprep.subr.bf16.mxu0 0
        %3137 = vmatpush1.bf16.msra.mxu0 0
        %3138 = vmatprep.subr.bf16.mxu0 0
        %3139 = vmatpush1.bf16.msra.mxu0 0
        %3140 = vmatprep.subr.bf16.mxu0 0
        %3141 = vmatpush1.bf16.msra.mxu0 0
        %3142 = vmatprep.subr.bf16.mxu0 0
        %3143 = vmatpush1.bf16.msra.mxu0 0
        %3144 = vmatprep.subr.bf16.mxu0 0
        %3145 = vmatpush1.bf16.msra.mxu0 0
        %3146 = vmatprep.subr.bf16.mxu0 0
        %3147 = vmatpush1.bf16.msra.mxu0 0
        %3148 = vmatprep.subr.bf16.mxu0 0
        %3149 = vmatpush1.bf16.msra.mxu0 0
        %3150 = vmatprep.subr.bf16.mxu0 0
        %3151 = vmatpush1.bf16.msra.mxu0 0
        %3152 = vmatprep.subr.bf16.mxu0 0
        %3153 = vmatpush1.bf16.msra.mxu0 0
        %3154 = vmatprep.subr.bf16.mxu0 0
        %3155 = vmatpush1.bf16.msra.mxu0 0
        %3156 = vmatprep.subr.bf16.mxu0 0
        %3157 = vmatpush1.bf16.msra.mxu0 0
        %3158 = vmatprep.subr.bf16.mxu0 0
        %3159 = vmatpush1.bf16.msra.mxu0 0
        %3160 = vmatprep.subr.bf16.mxu0 0
        %3161 = vmatpush1.bf16.msra.mxu0 0
        %3162 = vmatprep.mubr.bf16.mxu0 0
        %3163 = vmatmul.mubr.bf16.gmra.mrb[0].mxu0 %v543
        %v3164 = vpop.f32.mrb[0].mxu0
        %v3165 = vadd.f32 0.0, %v3164
        %v3166 = vpop.f32.mrb[0].mxu0
        %v3167 = vpop.f32.mrb[0].mxu0
        %v3168 = vpop.f32.mrb[0].mxu0
        %3169 = vdwg.mxu0
        %v3170 = vadd.f32 %v3122, %v3165
        %v3173 = vunpack.c.l.s4 1983009808
        %v3174 = vunpack.c.0.s8 %v3173
        %v3175 = vlaneseq
        %v3176 = vshrl.u32 %v3175, 7
        %v3177 = vsub.s32 %v3174, %v3176
        %v3178 = vrot.slane %v3126, %v3177
        %3179 = vrot.lane.b32.xlu0 %v3178, 127
        %v3180 = vpop.permute.xlu0 %3179
        %v3182 = vsel %vm242, %v3180, 0
        %3184 = vmatprep.subr.bf16.mxu0 0
        %3185 = vmatpush1.bf16.msra.mxu0 %v3182
        %3186 = vmatprep.subr.bf16.mxu0 0
        %3187 = vmatpush1.bf16.msra.mxu0 0
        %3188 = vmatprep.subr.bf16.mxu0 0
        %3189 = vmatpush1.bf16.msra.mxu0 0
        %3190 = vmatprep.subr.bf16.mxu0 0
        %3191 = vmatpush1.bf16.msra.mxu0 0
        %3192 = vmatprep.subr.bf16.mxu0 0
        %3193 = vmatpush1.bf16.msra.mxu0 0
        %3194 = vmatprep.subr.bf16.mxu0 0
        %3195 = vmatpush1.bf16.msra.mxu0 0
        %3196 = vmatprep.subr.bf16.mxu0 0
        %3197 = vmatpush1.bf16.msra.mxu0 0
        %3198 = vmatprep.subr.bf16.mxu0 0
        %3199 = vmatpush1.bf16.msra.mxu0 0
        %3200 = vmatprep.subr.bf16.mxu0 0
        %3201 = vmatpush1.bf16.msra.mxu0 0
        %3202 = vmatprep.subr.bf16.mxu0 0
        %3203 = vmatpush1.bf16.msra.mxu0 0
        %3204 = vmatprep.subr.bf16.mxu0 0
        %3205 = vmatpush1.bf16.msra.mxu0 0
        %3206 = vmatprep.subr.bf16.mxu0 0
        %3207 = vmatpush1.bf16.msra.mxu0 0
        %3208 = vmatprep.subr.bf16.mxu0 0
        %3209 = vmatpush1.bf16.msra.mxu0 0
        %3210 = vmatprep.subr.bf16.mxu0 0
        %3211 = vmatpush1.bf16.msra.mxu0 0
        %3212 = vmatprep.subr.bf16.mxu0 0
        %3213 = vmatpush1.bf16.msra.mxu0 0
        %3214 = vmatprep.subr.bf16.mxu0 0
        %3215 = vmatpush1.bf16.msra.mxu0 0
        %3216 = vmatprep.mubr.bf16.mxu0 0
        %3217 = vmatmul.mubr.bf16.gmra.mrb[0].mxu0 %v600
        %v3218 = vpop.f32.mrb[0].mxu0
        %v3219 = vadd.f32 0.0, %v3218
        %v3220 = vpop.f32.mrb[0].mxu0
        %v3221 = vpop.f32.mrb[0].mxu0
        %v3222 = vpop.f32.mrb[0].mxu0
        %3223 = vdwg.mxu0
        %v3224 = vadd.f32 %v3170, %v3219
        %3225 = vrot.lane.b32.xlu0 %v3178, 126
        %v3226 = vpop.permute.xlu0 %3225
        %v3228 = vsel %vm242, %v3226, 0
        %3230 = vmatprep.subr.bf16.mxu0 0
        %3231 = vmatpush1.bf16.msra.mxu0 %v3228
        %3232 = vmatprep.subr.bf16.mxu0 0
        %3233 = vmatpush1.bf16.msra.mxu0 0
        %3234 = vmatprep.subr.bf16.mxu0 0
        %3235 = vmatpush1.bf16.msra.mxu0 0
        %3236 = vmatprep.subr.bf16.mxu0 0
        %3237 = vmatpush1.bf16.msra.mxu0 0
        %3238 = vmatprep.subr.bf16.mxu0 0
        %3239 = vmatpush1.bf16.msra.mxu0 0
        %3240 = vmatprep.subr.bf16.mxu0 0
        %3241 = vmatpush1.bf16.msra.mxu0 0
        %3242 = vmatprep.subr.bf16.mxu0 0
        %3243 = vmatpush1.bf16.msra.mxu0 0
        %3244 = vmatprep.subr.bf16.mxu0 0
        %3245 = vmatpush1.bf16.msra.mxu0 0
        %3246 = vmatprep.subr.bf16.mxu0 0
        %3247 = vmatpush1.bf16.msra.mxu0 0
        %3248 = vmatprep.subr.bf16.mxu0 0
        %3249 = vmatpush1.bf16.msra.mxu0 0
        %3250 = vmatprep.subr.bf16.mxu0 0
        %3251 = vmatpush1.bf16.msra.mxu0 0
        %3252 = vmatprep.subr.bf16.mxu0 0
        %3253 = vmatpush1.bf16.msra.mxu0 0
        %3254 = vmatprep.subr.bf16.mxu0 0
        %3255 = vmatpush1.bf16.msra.mxu0 0
        %3256 = vmatprep.subr.bf16.mxu0 0
        %3257 = vmatpush1.bf16.msra.mxu0 0
        %3258 = vmatprep.subr.bf16.mxu0 0
        %3259 = vmatpush1.bf16.msra.mxu0 0
        %3260 = vmatprep.subr.bf16.mxu0 0
        %3261 = vmatpush1.bf16.msra.mxu0 0
        %3262 = vmatprep.mubr.bf16.mxu0 0
        %3263 = vmatmul.mubr.bf16.gmra.mrb[0].mxu0 %v649
        %v3264 = vpop.f32.mrb[0].mxu0
        %v3265 = vadd.f32 0.0, %v3264
        %v3266 = vpop.f32.mrb[0].mxu0
        %v3267 = vpop.f32.mrb[0].mxu0
        %v3268 = vpop.f32.mrb[0].mxu0
        %3269 = vdwg.mxu0
        %v3270 = vadd.f32 %v3224, %v3265
        %v3271 = vadd.f32 %v3270, %v698
        %vm3272 = vcmp.gt.f32.partialorder %v3271, 0.0
        %v3273 = vmul.f32 %v3271, 0.1
        %v3274 = vsel %vm3272, %v3271, %v3273
        %v3276 = vcombine.high %v3274, %v3274
        %v3278 = vunpack.c.l.s4 1966171168
        %v3279 = vunpack.c.0.s8 %v3278
        %v3280 = vlaneseq
        %v3281 = vshrl.u32 %v3280, 7
        %v3282 = vsub.s32 %v3279, %v3281
        %v3283 = vrot.slane %v3274, %v3282
        %v3285 = vunpack.c.l.s4 1966171168
        %v3286 = vunpack.c.0.s8 %v3285
        %v3287 = vlaneseq
        %v3288 = vshrl.u32 %v3287, 7
        %v3289 = vsub.s32 %v3286, %v3288
        %v3290 = vrot.slane %v3276, %v3289
        %v3291 = vcombine.high %v3283, %v3283
        %v3292 = vcombine.high %v3290, %v3290
        %v3294 = vunpack.c.l.s4 1966171168
        %v3295 = vunpack.c.0.s8 %v3294
        %v3296 = vlaneseq
        %v3297 = vshrl.u32 %v3296, 7
        %v3298 = vsub.s32 %v3295, %v3297
        %v3299 = vrot.slane %v3283, %v3298
        %v3301 = vunpack.c.l.s4 1966171168
        %v3302 = vunpack.c.0.s8 %v3301
        %v3303 = vlaneseq
        %v3304 = vshrl.u32 %v3303, 7
        %v3305 = vsub.s32 %v3302, %v3304
        %v3306 = vrot.slane %v3290, %v3305
        %v3308 = vunpack.c.l.s4 1966171168
        %v3309 = vunpack.c.0.s8 %v3308
        %v3310 = vlaneseq
        %v3311 = vshrl.u32 %v3310, 7
        %v3312 = vsub.s32 %v3309, %v3311
        %v3313 = vrot.slane %v3291, %v3312
        %v3315 = vunpack.c.l.s4 1966171168
        %v3316 = vunpack.c.0.s8 %v3315
        %v3317 = vlaneseq
        %v3318 = vshrl.u32 %v3317, 7
        %v3319 = vsub.s32 %v3316, %v3318
        %v3320 = vrot.slane %v3292, %v3319
        %v3321 = vcombine.high %v3299, %v3299
        %v3322 = vcombine.high %v3306, %v3306
        %v3323 = vcombine.high %v3313, %v3313
        %v3324 = vcombine.high %v3320, %v3320
        %3333 = vst.msk [vmem:[%s202 + $0x5] sm:$0x1] %vm762, %v3299
        %3334 = vst.msk [vmem:[%s202 + $0xd] sm:$0x1] %vm762, %v3313
        %3335 = vst.msk [vmem:[%s202 + $0x15] sm:$0x1] %vm762, %v3321
        %3336 = vst.msk [vmem:[%s202 + $0x1d] sm:$0x1] %vm762, %v3323
        %3337 = vst.msk [vmem:[%s202 + $0x25] sm:$0x1] %vm762, %v3306
        %3338 = vst.msk [vmem:[%s202 + $0x2d] sm:$0x1] %vm762, %v3320
        %3339 = vst.msk [vmem:[%s202 + $0x35] sm:$0x1] %vm762, %v3322
        %3340 = vst.msk [vmem:[%s202 + $0x3d] sm:$0x1] %vm762, %v3324
        %s3341 = sadd.s32 %s222, 6
        %p3342 = scmp.lt.s32.totalorder %s3341, 15
        %s3343 = scalar_select %p3342, %s3341, 15
        %s3344 = smul.addr %s3343, 2
        %s3345 = scalar_lea.vmem %s180, %s3344 [#allocation2]
        %v3346 = vld [vmem:[%s3345] sm:$0x3]
        %v3349 = vunpack.c.l.s4 1983009808
        %v3350 = vunpack.c.0.s8 %v3349
        %v3351 = vlaneseq
        %v3352 = vshrl.u32 %v3351, 7
        %v3353 = vsub.s32 %v3350, %v3352
        %v3354 = vrot.slane %v3346, %v3353
        %3355 = vrot.lane.b32.xlu0 %v3354, 127
        %v3356 = vpop.permute.xlu0 %3355
        %v3358 = vsel %vm242, %v3356, 0
        %3360 = vmatprep.subr.bf16.mxu0 0
        %3361 = vmatpush1.bf16.msra.mxu0 %v3358
        %3362 = vmatprep.subr.bf16.mxu0 0
        %3363 = vmatpush1.bf16.msra.mxu0 0
        %3364 = vmatprep.subr.bf16.mxu0 0
        %3365 = vmatpush1.bf16.msra.mxu0 0
        %3366 = vmatprep.subr.bf16.mxu0 0
        %3367 = vmatpush1.bf16.msra.mxu0 0
        %3368 = vmatprep.subr.bf16.mxu0 0
        %3369 = vmatpush1.bf16.msra.mxu0 0
        %3370 = vmatprep.subr.bf16.mxu0 0
        %3371 = vmatpush1.bf16.msra.mxu0 0
        %3372 = vmatprep.subr.bf16.mxu0 0
        %3373 = vmatpush1.bf16.msra.mxu0 0
        %3374 = vmatprep.subr.bf16.mxu0 0
        %3375 = vmatpush1.bf16.msra.mxu0 0
        %3376 = vmatprep.subr.bf16.mxu0 0
        %3377 = vmatpush1.bf16.msra.mxu0 0
        %3378 = vmatprep.subr.bf16.mxu0 0
        %3379 = vmatpush1.bf16.msra.mxu0 0
        %3380 = vmatprep.subr.bf16.mxu0 0
        %3381 = vmatpush1.bf16.msra.mxu0 0
        %3382 = vmatprep.subr.bf16.mxu0 0
        %3383 = vmatpush1.bf16.msra.mxu0 0
        %3384 = vmatprep.subr.bf16.mxu0 0
        %3385 = vmatpush1.bf16.msra.mxu0 0
        %3386 = vmatprep.subr.bf16.mxu0 0
        %3387 = vmatpush1.bf16.msra.mxu0 0
        %3388 = vmatprep.subr.bf16.mxu0 0
        %3389 = vmatpush1.bf16.msra.mxu0 0
        %3390 = vmatprep.subr.bf16.mxu0 0
        %3391 = vmatpush1.bf16.msra.mxu0 0
        %3392 = vmatprep.mubr.bf16.mxu0 0
        %3393 = vmatmul.mubr.bf16.gmra.mrb[0].mxu0 %v240
        %v3394 = vpop.f32.mrb[0].mxu0
        %v3395 = vadd.f32 0.0, %v3394
        %v3396 = vpop.f32.mrb[0].mxu0
        %v3397 = vpop.f32.mrb[0].mxu0
        %v3398 = vpop.f32.mrb[0].mxu0
        %3399 = vdwg.mxu0
        %v3401 = vsel %vm242, %v3346, 0
        %3403 = vmatprep.subr.bf16.mxu0 0
        %3404 = vmatpush1.bf16.msra.mxu0 %v3401
        %3405 = vmatprep.subr.bf16.mxu0 0
        %3406 = vmatpush1.bf16.msra.mxu0 0
        %3407 = vmatprep.subr.bf16.mxu0 0
        %3408 = vmatpush1.bf16.msra.mxu0 0
        %3409 = vmatprep.subr.bf16.mxu0 0
        %3410 = vmatpush1.bf16.msra.mxu0 0
        %3411 = vmatprep.subr.bf16.mxu0 0
        %3412 = vmatpush1.bf16.msra.mxu0 0
        %3413 = vmatprep.subr.bf16.mxu0 0
        %3414 = vmatpush1.bf16.msra.mxu0 0
        %3415 = vmatprep.subr.bf16.mxu0 0
        %3416 = vmatpush1.bf16.msra.mxu0 0
        %3417 = vmatprep.subr.bf16.mxu0 0
        %3418 = vmatpush1.bf16.msra.mxu0 0
        %3419 = vmatprep.subr.bf16.mxu0 0
        %3420 = vmatpush1.bf16.msra.mxu0 0
        %3421 = vmatprep.subr.bf16.mxu0 0
        %3422 = vmatpush1.bf16.msra.mxu0 0
        %3423 = vmatprep.subr.bf16.mxu0 0
        %3424 = vmatpush1.bf16.msra.mxu0 0
        %3425 = vmatprep.subr.bf16.mxu0 0
        %3426 = vmatpush1.bf16.msra.mxu0 0
        %3427 = vmatprep.subr.bf16.mxu0 0
        %3428 = vmatpush1.bf16.msra.mxu0 0
        %3429 = vmatprep.subr.bf16.mxu0 0
        %3430 = vmatpush1.bf16.msra.mxu0 0
        %3431 = vmatprep.subr.bf16.mxu0 0
        %3432 = vmatpush1.bf16.msra.mxu0 0
        %3433 = vmatprep.subr.bf16.mxu0 0
        %3434 = vmatpush1.bf16.msra.mxu0 0
        %3435 = vmatprep.mubr.bf16.mxu0 0
        %3436 = vmatmul.mubr.bf16.gmra.mrb[0].mxu0 %v287
        %v3437 = vpop.f32.mrb[0].mxu0
        %v3438 = vadd.f32 %v3395, %v3437
        %v3439 = vpop.f32.mrb[0].mxu0
        %v3440 = vpop.f32.mrb[0].mxu0
        %v3441 = vpop.f32.mrb[0].mxu0
        %3442 = vdwg.mxu0
        %3443 = vrot.lane.b32.xlu0 %v3354, 126
        %v3444 = vpop.permute.xlu0 %3443
        %v3446 = vsel %vm242, %v3444, 0
        %3448 = vmatprep.subr.bf16.mxu0 0
        %3449 = vmatpush1.bf16.msra.mxu0 %v3446
        %3450 = vmatprep.subr.bf16.mxu0 0
        %3451 = vmatpush1.bf16.msra.mxu0 0
        %3452 = vmatprep.subr.bf16.mxu0 0
        %3453 = vmatpush1.bf16.msra.mxu0 0
        %3454 = vmatprep.subr.bf16.mxu0 0
        %3455 = vmatpush1.bf16.msra.mxu0 0
        %3456 = vmatprep.subr.bf16.mxu0 0
        %3457 = vmatpush1.bf16.msra.mxu0 0
        %3458 = vmatprep.subr.bf16.mxu0 0
        %3459 = vmatpush1.bf16.msra.mxu0 0
        %3460 = vmatprep.subr.bf16.mxu0 0
        %3461 = vmatpush1.bf16.msra.mxu0 0
        %3462 = vmatprep.subr.bf16.mxu0 0
        %3463 = vmatpush1.bf16.msra.mxu0 0
        %3464 = vmatprep.subr.bf16.mxu0 0
        %3465 = vmatpush1.bf16.msra.mxu0 0
        %3466 = vmatprep.subr.bf16.mxu0 0
        %3467 = vmatpush1.bf16.msra.mxu0 0
        %3468 = vmatprep.subr.bf16.mxu0 0
        %3469 = vmatpush1.bf16.msra.mxu0 0
        %3470 = vmatprep.subr.bf16.mxu0 0
        %3471 = vmatpush1.bf16.msra.mxu0 0
        %3472 = vmatprep.subr.bf16.mxu0 0
        %3473 = vmatpush1.bf16.msra.mxu0 0
        %3474 = vmatprep.subr.bf16.mxu0 0
        %3475 = vmatpush1.bf16.msra.mxu0 0
        %3476 = vmatprep.subr.bf16.mxu0 0
        %3477 = vmatpush1.bf16.msra.mxu0 0
        %3478 = vmatprep.subr.bf16.mxu0 0
        %3479 = vmatpush1.bf16.msra.mxu0 0
        %3480 = vmatprep.mubr.bf16.mxu0 0
        %3481 = vmatmul.mubr.bf16.gmra.mrb[0].mxu0 %v335
        %v3482 = vpop.f32.mrb[0].mxu0
        %v3483 = vadd.f32 0.0, %v3482
        %v3484 = vpop.f32.mrb[0].mxu0
        %v3485 = vpop.f32.mrb[0].mxu0
        %v3486 = vpop.f32.mrb[0].mxu0
        %3487 = vdwg.mxu0
        %v3488 = vadd.f32 %v3438, %v3483
        %s3489 = sadd.s32 %s3343, 1
        %s3490 = smul.addr %s3489, 2
        %s3491 = scalar_lea.vmem %s180, %s3490 [#allocation2]
        %v3492 = vld [vmem:[%s3491] sm:$0x3]
        %v3494 = vsel %vm242, %v3492, 0
        %3496 = vmatprep.subr.bf16.mxu0 0
        %3497 = vmatpush1.bf16.msra.mxu0 %v3494
        %3498 = vmatprep.subr.bf16.mxu0 0
        %3499 = vmatpush1.bf16.msra.mxu0 0
        %3500 = vmatprep.subr.bf16.mxu0 0
        %3501 = vmatpush1.bf16.msra.mxu0 0
        %3502 = vmatprep.subr.bf16.mxu0 0
        %3503 = vmatpush1.bf16.msra.mxu0 0
        %3504 = vmatprep.subr.bf16.mxu0 0
        %3505 = vmatpush1.bf16.msra.mxu0 0
        %3506 = vmatprep.subr.bf16.mxu0 0
        %3507 = vmatpush1.bf16.msra.mxu0 0
        %3508 = vmatprep.subr.bf16.mxu0 0
        %3509 = vmatpush1.bf16.msra.mxu0 0
        %3510 = vmatprep.subr.bf16.mxu0 0
        %3511 = vmatpush1.bf16.msra.mxu0 0
        %3512 = vmatprep.subr.bf16.mxu0 0
        %3513 = vmatpush1.bf16.msra.mxu0 0
        %3514 = vmatprep.subr.bf16.mxu0 0
        %3515 = vmatpush1.bf16.msra.mxu0 0
        %3516 = vmatprep.subr.bf16.mxu0 0
        %3517 = vmatpush1.bf16.msra.mxu0 0
        %3518 = vmatprep.subr.bf16.mxu0 0
        %3519 = vmatpush1.bf16.msra.mxu0 0
        %3520 = vmatprep.subr.bf16.mxu0 0
        %3521 = vmatpush1.bf16.msra.mxu0 0
        %3522 = vmatprep.subr.bf16.mxu0 0
        %3523 = vmatpush1.bf16.msra.mxu0 0
        %3524 = vmatprep.subr.bf16.mxu0 0
        %3525 = vmatpush1.bf16.msra.mxu0 0
        %3526 = vmatprep.subr.bf16.mxu0 0
        %3527 = vmatpush1.bf16.msra.mxu0 0
        %3528 = vmatprep.mubr.bf16.mxu0 0
        %3529 = vmatmul.mubr.bf16.gmra.mrb[0].mxu0 %v386
        %v3530 = vpop.f32.mrb[0].mxu0
        %v3531 = vadd.f32 0.0, %v3530
        %v3532 = vpop.f32.mrb[0].mxu0
        %v3533 = vpop.f32.mrb[0].mxu0
        %v3534 = vpop.f32.mrb[0].mxu0
        %3535 = vdwg.mxu0
        %v3536 = vadd.f32 %v3488, %v3531
        %v3539 = vunpack.c.l.s4 1983009808
        %v3540 = vunpack.c.0.s8 %v3539
        %v3541 = vlaneseq
        %v3542 = vshrl.u32 %v3541, 7
        %v3543 = vsub.s32 %v3540, %v3542
        %v3544 = vrot.slane %v3492, %v3543
        %3545 = vrot.lane.b32.xlu0 %v3544, 127
        %v3546 = vpop.permute.xlu0 %3545
        %v3548 = vsel %vm242, %v3546, 0
        %3550 = vmatprep.subr.bf16.mxu0 0
        %3551 = vmatpush1.bf16.msra.mxu0 %v3548
        %3552 = vmatprep.subr.bf16.mxu0 0
        %3553 = vmatpush1.bf16.msra.mxu0 0
        %3554 = vmatprep.subr.bf16.mxu0 0
        %3555 = vmatpush1.bf16.msra.mxu0 0
        %3556 = vmatprep.subr.bf16.mxu0 0
        %3557 = vmatpush1.bf16.msra.mxu0 0
        %3558 = vmatprep.subr.bf16.mxu0 0
        %3559 = vmatpush1.bf16.msra.mxu0 0
        %3560 = vmatprep.subr.bf16.mxu0 0
        %3561 = vmatpush1.bf16.msra.mxu0 0
        %3562 = vmatprep.subr.bf16.mxu0 0
        %3563 = vmatpush1.bf16.msra.mxu0 0
        %3564 = vmatprep.subr.bf16.mxu0 0
        %3565 = vmatpush1.bf16.msra.mxu0 0
        %3566 = vmatprep.subr.bf16.mxu0 0
        %3567 = vmatpush1.bf16.msra.mxu0 0
        %3568 = vmatprep.subr.bf16.mxu0 0
        %3569 = vmatpush1.bf16.msra.mxu0 0
        %3570 = vmatprep.subr.bf16.mxu0 0
        %3571 = vmatpush1.bf16.msra.mxu0 0
        %3572 = vmatprep.subr.bf16.mxu0 0
        %3573 = vmatpush1.bf16.msra.mxu0 0
        %3574 = vmatprep.subr.bf16.mxu0 0
        %3575 = vmatpush1.bf16.msra.mxu0 0
        %3576 = vmatprep.subr.bf16.mxu0 0
        %3577 = vmatpush1.bf16.msra.mxu0 0
        %3578 = vmatprep.subr.bf16.mxu0 0
        %3579 = vmatpush1.bf16.msra.mxu0 0
        %3580 = vmatprep.subr.bf16.mxu0 0
        %3581 = vmatpush1.bf16.msra.mxu0 0
        %3582 = vmatprep.mubr.bf16.mxu0 0
        %3583 = vmatmul.mubr.bf16.gmra.mrb[0].mxu0 %v443
        %v3584 = vpop.f32.mrb[0].mxu0
        %v3585 = vadd.f32 0.0, %v3584
        %v3586 = vpop.f32.mrb[0].mxu0
        %v3587 = vpop.f32.mrb[0].mxu0
        %v3588 = vpop.f32.mrb[0].mxu0
        %3589 = vdwg.mxu0
        %v3590 = vadd.f32 %v3536, %v3585
        %3591 = vrot.lane.b32.xlu0 %v3544, 126
        %v3592 = vpop.permute.xlu0 %3591
        %v3594 = vsel %vm242, %v3592, 0
        %3596 = vmatprep.subr.bf16.mxu0 0
        %3597 = vmatpush1.bf16.msra.mxu0 %v3594
        %3598 = vmatprep.subr.bf16.mxu0 0
        %3599 = vmatpush1.bf16.msra.mxu0 0
        %3600 = vmatprep.subr.bf16.mxu0 0
        %3601 = vmatpush1.bf16.msra.mxu0 0
        %3602 = vmatprep.subr.bf16.mxu0 0
        %3603 = vmatpush1.bf16.msra.mxu0 0
        %3604 = vmatprep.subr.bf16.mxu0 0
        %3605 = vmatpush1.bf16.msra.mxu0 0
        %3606 = vmatprep.subr.bf16.mxu0 0
        %3607 = vmatpush1.bf16.msra.mxu0 0
        %3608 = vmatprep.subr.bf16.mxu0 0
        %3609 = vmatpush1.bf16.msra.mxu0 0
        %3610 = vmatprep.subr.bf16.mxu0 0
        %3611 = vmatpush1.bf16.msra.mxu0 0
        %3612 = vmatprep.subr.bf16.mxu0 0
        %3613 = vmatpush1.bf16.msra.mxu0 0
        %3614 = vmatprep.subr.bf16.mxu0 0
        %3615 = vmatpush1.bf16.msra.mxu0 0
        %3616 = vmatprep.subr.bf16.mxu0 0
        %3617 = vmatpush1.bf16.msra.mxu0 0
        %3618 = vmatprep.subr.bf16.mxu0 0
        %3619 = vmatpush1.bf16.msra.mxu0 0
        %3620 = vmatprep.subr.bf16.mxu0 0
        %3621 = vmatpush1.bf16.msra.mxu0 0
        %3622 = vmatprep.subr.bf16.mxu0 0
        %3623 = vmatpush1.bf16.msra.mxu0 0
        %3624 = vmatprep.subr.bf16.mxu0 0
        %3625 = vmatpush1.bf16.msra.mxu0 0
        %3626 = vmatprep.subr.bf16.mxu0 0
        %3627 = vmatpush1.bf16.msra.mxu0 0
        %3628 = vmatprep.mubr.bf16.mxu0 0
        %3629 = vmatmul.mubr.bf16.gmra.mrb[0].mxu0 %v492
        %v3630 = vpop.f32.mrb[0].mxu0
        %v3631 = vadd.f32 0.0, %v3630
        %v3632 = vpop.f32.mrb[0].mxu0
        %v3633 = vpop.f32.mrb[0].mxu0
        %v3634 = vpop.f32.mrb[0].mxu0
        %3635 = vdwg.mxu0
        %v3636 = vadd.f32 %v3590, %v3631
        %s3637 = sadd.s32 %s3343, 2
        %s3638 = smul.addr %s3637, 2
        %s3639 = scalar_lea.vmem %s180, %s3638 [#allocation2]
        %v3640 = vld [vmem:[%s3639] sm:$0x3]
        %v3642 = vsel %vm242, %v3640, 0
        %3644 = vmatprep.subr.bf16.mxu0 0
        %3645 = vmatpush1.bf16.msra.mxu0 %v3642
        %3646 = vmatprep.subr.bf16.mxu0 0
        %3647 = vmatpush1.bf16.msra.mxu0 0
        %3648 = vmatprep.subr.bf16.mxu0 0
        %3649 = vmatpush1.bf16.msra.mxu0 0
        %3650 = vmatprep.subr.bf16.mxu0 0
        %3651 = vmatpush1.bf16.msra.mxu0 0
        %3652 = vmatprep.subr.bf16.mxu0 0
        %3653 = vmatpush1.bf16.msra.mxu0 0
        %3654 = vmatprep.subr.bf16.mxu0 0
        %3655 = vmatpush1.bf16.msra.mxu0 0
        %3656 = vmatprep.subr.bf16.mxu0 0
        %3657 = vmatpush1.bf16.msra.mxu0 0
        %3658 = vmatprep.subr.bf16.mxu0 0
        %3659 = vmatpush1.bf16.msra.mxu0 0
        %3660 = vmatprep.subr.bf16.mxu0 0
        %3661 = vmatpush1.bf16.msra.mxu0 0
        %3662 = vmatprep.subr.bf16.mxu0 0
        %3663 = vmatpush1.bf16.msra.mxu0 0
        %3664 = vmatprep.subr.bf16.mxu0 0
        %3665 = vmatpush1.bf16.msra.mxu0 0
        %3666 = vmatprep.subr.bf16.mxu0 0
        %3667 = vmatpush1.bf16.msra.mxu0 0
        %3668 = vmatprep.subr.bf16.mxu0 0
        %3669 = vmatpush1.bf16.msra.mxu0 0
        %3670 = vmatprep.subr.bf16.mxu0 0
        %3671 = vmatpush1.bf16.msra.mxu0 0
        %3672 = vmatprep.subr.bf16.mxu0 0
        %3673 = vmatpush1.bf16.msra.mxu0 0
        %3674 = vmatprep.subr.bf16.mxu0 0
        %3675 = vmatpush1.bf16.msra.mxu0 0
        %3676 = vmatprep.mubr.bf16.mxu0 0
        %3677 = vmatmul.mubr.bf16.gmra.mrb[0].mxu0 %v543
        %v3678 = vpop.f32.mrb[0].mxu0
        %v3679 = vadd.f32 0.0, %v3678
        %v3680 = vpop.f32.mrb[0].mxu0
        %v3681 = vpop.f32.mrb[0].mxu0
        %v3682 = vpop.f32.mrb[0].mxu0
        %3683 = vdwg.mxu0
        %v3684 = vadd.f32 %v3636, %v3679
        %v3687 = vunpack.c.l.s4 1983009808
        %v3688 = vunpack.c.0.s8 %v3687
        %v3689 = vlaneseq
        %v3690 = vshrl.u32 %v3689, 7
        %v3691 = vsub.s32 %v3688, %v3690
        %v3692 = vrot.slane %v3640, %v3691
        %3693 = vrot.lane.b32.xlu0 %v3692, 127
        %v3694 = vpop.permute.xlu0 %3693
        %v3696 = vsel %vm242, %v3694, 0
        %3698 = vmatprep.subr.bf16.mxu0 0
        %3699 = vmatpush1.bf16.msra.mxu0 %v3696
        %3700 = vmatprep.subr.bf16.mxu0 0
        %3701 = vmatpush1.bf16.msra.mxu0 0
        %3702 = vmatprep.subr.bf16.mxu0 0
        %3703 = vmatpush1.bf16.msra.mxu0 0
        %3704 = vmatprep.subr.bf16.mxu0 0
        %3705 = vmatpush1.bf16.msra.mxu0 0
        %3706 = vmatprep.subr.bf16.mxu0 0
        %3707 = vmatpush1.bf16.msra.mxu0 0
        %3708 = vmatprep.subr.bf16.mxu0 0
        %3709 = vmatpush1.bf16.msra.mxu0 0
        %3710 = vmatprep.subr.bf16.mxu0 0
        %3711 = vmatpush1.bf16.msra.mxu0 0
        %3712 = vmatprep.subr.bf16.mxu0 0
        %3713 = vmatpush1.bf16.msra.mxu0 0
        %3714 = vmatprep.subr.bf16.mxu0 0
        %3715 = vmatpush1.bf16.msra.mxu0 0
        %3716 = vmatprep.subr.bf16.mxu0 0
        %3717 = vmatpush1.bf16.msra.mxu0 0
        %3718 = vmatprep.subr.bf16.mxu0 0
        %3719 = vmatpush1.bf16.msra.mxu0 0
        %3720 = vmatprep.subr.bf16.mxu0 0
        %3721 = vmatpush1.bf16.msra.mxu0 0
        %3722 = vmatprep.subr.bf16.mxu0 0
        %3723 = vmatpush1.bf16.msra.mxu0 0
        %3724 = vmatprep.subr.bf16.mxu0 0
        %3725 = vmatpush1.bf16.msra.mxu0 0
        %3726 = vmatprep.subr.bf16.mxu0 0
        %3727 = vmatpush1.bf16.msra.mxu0 0
        %3728 = vmatprep.subr.bf16.mxu0 0
        %3729 = vmatpush1.bf16.msra.mxu0 0
        %3730 = vmatprep.mubr.bf16.mxu0 0
        %3731 = vmatmul.mubr.bf16.gmra.mrb[0].mxu0 %v600
        %v3732 = vpop.f32.mrb[0].mxu0
        %v3733 = vadd.f32 0.0, %v3732
        %v3734 = vpop.f32.mrb[0].mxu0
        %v3735 = vpop.f32.mrb[0].mxu0
        %v3736 = vpop.f32.mrb[0].mxu0
        %3737 = vdwg.mxu0
        %v3738 = vadd.f32 %v3684, %v3733
        %3739 = vrot.lane.b32.xlu0 %v3692, 126
        %v3740 = vpop.permute.xlu0 %3739
        %v3742 = vsel %vm242, %v3740, 0
        %3744 = vmatprep.subr.bf16.mxu0 0
        %3745 = vmatpush1.bf16.msra.mxu0 %v3742
        %3746 = vmatprep.subr.bf16.mxu0 0
        %3747 = vmatpush1.bf16.msra.mxu0 0
        %3748 = vmatprep.subr.bf16.mxu0 0
        %3749 = vmatpush1.bf16.msra.mxu0 0
        %3750 = vmatprep.subr.bf16.mxu0 0
        %3751 = vmatpush1.bf16.msra.mxu0 0
        %3752 = vmatprep.subr.bf16.mxu0 0
        %3753 = vmatpush1.bf16.msra.mxu0 0
        %3754 = vmatprep.subr.bf16.mxu0 0
        %3755 = vmatpush1.bf16.msra.mxu0 0
        %3756 = vmatprep.subr.bf16.mxu0 0
        %3757 = vmatpush1.bf16.msra.mxu0 0
        %3758 = vmatprep.subr.bf16.mxu0 0
        %3759 = vmatpush1.bf16.msra.mxu0 0
        %3760 = vmatprep.subr.bf16.mxu0 0
        %3761 = vmatpush1.bf16.msra.mxu0 0
        %3762 = vmatprep.subr.bf16.mxu0 0
        %3763 = vmatpush1.bf16.msra.mxu0 0
        %3764 = vmatprep.subr.bf16.mxu0 0
        %3765 = vmatpush1.bf16.msra.mxu0 0
        %3766 = vmatprep.subr.bf16.mxu0 0
        %3767 = vmatpush1.bf16.msra.mxu0 0
        %3768 = vmatprep.subr.bf16.mxu0 0
        %3769 = vmatpush1.bf16.msra.mxu0 0
        %3770 = vmatprep.subr.bf16.mxu0 0
        %3771 = vmatpush1.bf16.msra.mxu0 0
        %3772 = vmatprep.subr.bf16.mxu0 0
        %3773 = vmatpush1.bf16.msra.mxu0 0
        %3774 = vmatprep.subr.bf16.mxu0 0
        %3775 = vmatpush1.bf16.msra.mxu0 0
        %3776 = vmatprep.mubr.bf16.mxu0 0
        %3777 = vmatmul.mubr.bf16.gmra.mrb[0].mxu0 %v649
        %v3778 = vpop.f32.mrb[0].mxu0
        %v3779 = vadd.f32 0.0, %v3778
        %v3780 = vpop.f32.mrb[0].mxu0
        %v3781 = vpop.f32.mrb[0].mxu0
        %v3782 = vpop.f32.mrb[0].mxu0
        %3783 = vdwg.mxu0
        %v3784 = vadd.f32 %v3738, %v3779
        %v3785 = vadd.f32 %v3784, %v698
        %vm3786 = vcmp.gt.f32.partialorder %v3785, 0.0
        %v3787 = vmul.f32 %v3785, 0.1
        %v3788 = vsel %vm3786, %v3785, %v3787
        %v3790 = vcombine.high %v3788, %v3788
        %v3792 = vunpack.c.l.s4 1966171168
        %v3793 = vunpack.c.0.s8 %v3792
        %v3794 = vlaneseq
        %v3795 = vshrl.u32 %v3794, 7
        %v3796 = vsub.s32 %v3793, %v3795
        %v3797 = vrot.slane %v3788, %v3796
        %v3799 = vunpack.c.l.s4 1966171168
        %v3800 = vunpack.c.0.s8 %v3799
        %v3801 = vlaneseq
        %v3802 = vshrl.u32 %v3801, 7
        %v3803 = vsub.s32 %v3800, %v3802
        %v3804 = vrot.slane %v3790, %v3803
        %v3805 = vcombine.high %v3797, %v3797
        %v3806 = vcombine.high %v3804, %v3804
        %v3808 = vunpack.c.l.s4 1966171168
        %v3809 = vunpack.c.0.s8 %v3808
        %v3810 = vlaneseq
        %v3811 = vshrl.u32 %v3810, 7
        %v3812 = vsub.s32 %v3809, %v3811
        %v3813 = vrot.slane %v3797, %v3812
        %v3815 = vunpack.c.l.s4 1966171168
        %v3816 = vunpack.c.0.s8 %v3815
        %v3817 = vlaneseq
        %v3818 = vshrl.u32 %v3817, 7
        %v3819 = vsub.s32 %v3816, %v3818
        %v3820 = vrot.slane %v3804, %v3819
        %v3822 = vunpack.c.l.s4 1966171168
        %v3823 = vunpack.c.0.s8 %v3822
        %v3824 = vlaneseq
        %v3825 = vshrl.u32 %v3824, 7
        %v3826 = vsub.s32 %v3823, %v3825
        %v3827 = vrot.slane %v3805, %v3826
        %v3829 = vunpack.c.l.s4 1966171168
        %v3830 = vunpack.c.0.s8 %v3829
        %v3831 = vlaneseq
        %v3832 = vshrl.u32 %v3831, 7
        %v3833 = vsub.s32 %v3830, %v3832
        %v3834 = vrot.slane %v3806, %v3833
        %v3835 = vcombine.high %v3813, %v3813
        %v3836 = vcombine.high %v3820, %v3820
        %v3837 = vcombine.high %v3827, %v3827
        %v3838 = vcombine.high %v3834, %v3834
        %3847 = vst.msk [vmem:[%s202 + $0x6] sm:$0x1] %vm762, %v3813
        %3848 = vst.msk [vmem:[%s202 + $0xe] sm:$0x1] %vm762, %v3827
        %3849 = vst.msk [vmem:[%s202 + $0x16] sm:$0x1] %vm762, %v3835
        %3850 = vst.msk [vmem:[%s202 + $0x1e] sm:$0x1] %vm762, %v3837
        %3851 = vst.msk [vmem:[%s202 + $0x26] sm:$0x1] %vm762, %v3820
        %3852 = vst.msk [vmem:[%s202 + $0x2e] sm:$0x1] %vm762, %v3834
        %3853 = vst.msk [vmem:[%s202 + $0x36] sm:$0x1] %vm762, %v3836
        %3854 = vst.msk [vmem:[%s202 + $0x3e] sm:$0x1] %vm762, %v3838
        %s3855 = sadd.s32 %s222, 7
        %p3856 = scmp.lt.s32.totalorder %s3855, 15
        %s3857 = scalar_select %p3856, %s3855, 15
        %s3858 = smul.addr %s3857, 2
        %s3859 = scalar_lea.vmem %s180, %s3858 [#allocation2]
        %v3860 = vld [vmem:[%s3859] sm:$0x3]
        %v3863 = vunpack.c.l.s4 1983009808
        %v3864 = vunpack.c.0.s8 %v3863
        %v3865 = vlaneseq
        %v3866 = vshrl.u32 %v3865, 7
        %v3867 = vsub.s32 %v3864, %v3866
        %v3868 = vrot.slane %v3860, %v3867
        %3869 = vrot.lane.b32.xlu0 %v3868, 127
        %v3870 = vpop.permute.xlu0 %3869
        %v3872 = vsel %vm242, %v3870, 0
        %3874 = vmatprep.subr.bf16.mxu0 0
        %3875 = vmatpush1.bf16.msra.mxu0 %v3872
        %3876 = vmatprep.subr.bf16.mxu0 0
        %3877 = vmatpush1.bf16.msra.mxu0 0
        %3878 = vmatprep.subr.bf16.mxu0 0
        %3879 = vmatpush1.bf16.msra.mxu0 0
        %3880 = vmatprep.subr.bf16.mxu0 0
        %3881 = vmatpush1.bf16.msra.mxu0 0
        %3882 = vmatprep.subr.bf16.mxu0 0
        %3883 = vmatpush1.bf16.msra.mxu0 0
        %3884 = vmatprep.subr.bf16.mxu0 0
        %3885 = vmatpush1.bf16.msra.mxu0 0
        %3886 = vmatprep.subr.bf16.mxu0 0
        %3887 = vmatpush1.bf16.msra.mxu0 0
        %3888 = vmatprep.subr.bf16.mxu0 0
        %3889 = vmatpush1.bf16.msra.mxu0 0
        %3890 = vmatprep.subr.bf16.mxu0 0
        %3891 = vmatpush1.bf16.msra.mxu0 0
        %3892 = vmatprep.subr.bf16.mxu0 0
        %3893 = vmatpush1.bf16.msra.mxu0 0
        %3894 = vmatprep.subr.bf16.mxu0 0
        %3895 = vmatpush1.bf16.msra.mxu0 0
        %3896 = vmatprep.subr.bf16.mxu0 0
        %3897 = vmatpush1.bf16.msra.mxu0 0
        %3898 = vmatprep.subr.bf16.mxu0 0
        %3899 = vmatpush1.bf16.msra.mxu0 0
        %3900 = vmatprep.subr.bf16.mxu0 0
        %3901 = vmatpush1.bf16.msra.mxu0 0
        %3902 = vmatprep.subr.bf16.mxu0 0
        %3903 = vmatpush1.bf16.msra.mxu0 0
        %3904 = vmatprep.subr.bf16.mxu0 0
        %3905 = vmatpush1.bf16.msra.mxu0 0
        %3906 = vmatprep.mubr.bf16.mxu0 0
        %3907 = vmatmul.mubr.bf16.gmra.mrb[0].mxu0 %v240
        %v3908 = vpop.f32.mrb[0].mxu0
        %v3909 = vadd.f32 0.0, %v3908
        %v3910 = vpop.f32.mrb[0].mxu0
        %v3911 = vpop.f32.mrb[0].mxu0
        %v3912 = vpop.f32.mrb[0].mxu0
        %3913 = vdwg.mxu0
        %v3915 = vsel %vm242, %v3860, 0
        %3917 = vmatprep.subr.bf16.mxu0 0
        %3918 = vmatpush1.bf16.msra.mxu0 %v3915
        %3919 = vmatprep.subr.bf16.mxu0 0
        %3920 = vmatpush1.bf16.msra.mxu0 0
        %3921 = vmatprep.subr.bf16.mxu0 0
        %3922 = vmatpush1.bf16.msra.mxu0 0
        %3923 = vmatprep.subr.bf16.mxu0 0
        %3924 = vmatpush1.bf16.msra.mxu0 0
        %3925 = vmatprep.subr.bf16.mxu0 0
        %3926 = vmatpush1.bf16.msra.mxu0 0
        %3927 = vmatprep.subr.bf16.mxu0 0
        %3928 = vmatpush1.bf16.msra.mxu0 0
        %3929 = vmatprep.subr.bf16.mxu0 0
        %3930 = vmatpush1.bf16.msra.mxu0 0
        %3931 = vmatprep.subr.bf16.mxu0 0
        %3932 = vmatpush1.bf16.msra.mxu0 0
        %3933 = vmatprep.subr.bf16.mxu0 0
        %3934 = vmatpush1.bf16.msra.mxu0 0
        %3935 = vmatprep.subr.bf16.mxu0 0
        %3936 = vmatpush1.bf16.msra.mxu0 0
        %3937 = vmatprep.subr.bf16.mxu0 0
        %3938 = vmatpush1.bf16.msra.mxu0 0
        %3939 = vmatprep.subr.bf16.mxu0 0
        %3940 = vmatpush1.bf16.msra.mxu0 0
        %3941 = vmatprep.subr.bf16.mxu0 0
        %3942 = vmatpush1.bf16.msra.mxu0 0
        %3943 = vmatprep.subr.bf16.mxu0 0
        %3944 = vmatpush1.bf16.msra.mxu0 0
        %3945 = vmatprep.subr.bf16.mxu0 0
        %3946 = vmatpush1.bf16.msra.mxu0 0
        %3947 = vmatprep.subr.bf16.mxu0 0
        %3948 = vmatpush1.bf16.msra.mxu0 0
        %3949 = vmatprep.mubr.bf16.mxu0 0
        %3950 = vmatmul.mubr.bf16.gmra.mrb[0].mxu0 %v287
        %v3951 = vpop.f32.mrb[0].mxu0
        %v3952 = vadd.f32 %v3909, %v3951
        %v3953 = vpop.f32.mrb[0].mxu0
        %v3954 = vpop.f32.mrb[0].mxu0
        %v3955 = vpop.f32.mrb[0].mxu0
        %3956 = vdwg.mxu0
        %3957 = vrot.lane.b32.xlu0 %v3868, 126
        %v3958 = vpop.permute.xlu0 %3957
        %v3960 = vsel %vm242, %v3958, 0
        %3962 = vmatprep.subr.bf16.mxu0 0
        %3963 = vmatpush1.bf16.msra.mxu0 %v3960
        %3964 = vmatprep.subr.bf16.mxu0 0
        %3965 = vmatpush1.bf16.msra.mxu0 0
        %3966 = vmatprep.subr.bf16.mxu0 0
        %3967 = vmatpush1.bf16.msra.mxu0 0
        %3968 = vmatprep.subr.bf16.mxu0 0
        %3969 = vmatpush1.bf16.msra.mxu0 0
        %3970 = vmatprep.subr.bf16.mxu0 0
        %3971 = vmatpush1.bf16.msra.mxu0 0
        %3972 = vmatprep.subr.bf16.mxu0 0
        %3973 = vmatpush1.bf16.msra.mxu0 0
        %3974 = vmatprep.subr.bf16.mxu0 0
        %3975 = vmatpush1.bf16.msra.mxu0 0
        %3976 = vmatprep.subr.bf16.mxu0 0
        %3977 = vmatpush1.bf16.msra.mxu0 0
        %3978 = vmatprep.subr.bf16.mxu0 0
        %3979 = vmatpush1.bf16.msra.mxu0 0
        %3980 = vmatprep.subr.bf16.mxu0 0
        %3981 = vmatpush1.bf16.msra.mxu0 0
        %3982 = vmatprep.subr.bf16.mxu0 0
        %3983 = vmatpush1.bf16.msra.mxu0 0
        %3984 = vmatprep.subr.bf16.mxu0 0
        %3985 = vmatpush1.bf16.msra.mxu0 0
        %3986 = vmatprep.subr.bf16.mxu0 0
        %3987 = vmatpush1.bf16.msra.mxu0 0
        %3988 = vmatprep.subr.bf16.mxu0 0
        %3989 = vmatpush1.bf16.msra.mxu0 0
        %3990 = vmatprep.subr.bf16.mxu0 0
        %3991 = vmatpush1.bf16.msra.mxu0 0
        %3992 = vmatprep.subr.bf16.mxu0 0
        %3993 = vmatpush1.bf16.msra.mxu0 0
        %3994 = vmatprep.mubr.bf16.mxu0 0
        %3995 = vmatmul.mubr.bf16.gmra.mrb[0].mxu0 %v335
        %v3996 = vpop.f32.mrb[0].mxu0
        %v3997 = vadd.f32 0.0, %v3996
        %v3998 = vpop.f32.mrb[0].mxu0
        %v3999 = vpop.f32.mrb[0].mxu0
        %v4000 = vpop.f32.mrb[0].mxu0
        %4001 = vdwg.mxu0
        %v4002 = vadd.f32 %v3952, %v3997
        %s4003 = sadd.s32 %s3857, 1
        %s4004 = smul.addr %s4003, 2
        %s4005 = scalar_lea.vmem %s180, %s4004 [#allocation2]
        %v4006 = vld [vmem:[%s4005] sm:$0x3]
        %v4008 = vsel %vm242, %v4006, 0
        %4010 = vmatprep.subr.bf16.mxu0 0
        %4011 = vmatpush1.bf16.msra.mxu0 %v4008
        %4012 = vmatprep.subr.bf16.mxu0 0
        %4013 = vmatpush1.bf16.msra.mxu0 0
        %4014 = vmatprep.subr.bf16.mxu0 0
        %4015 = vmatpush1.bf16.msra.mxu0 0
        %4016 = vmatprep.subr.bf16.mxu0 0
        %4017 = vmatpush1.bf16.msra.mxu0 0
        %4018 = vmatprep.subr.bf16.mxu0 0
        %4019 = vmatpush1.bf16.msra.mxu0 0
        %4020 = vmatprep.subr.bf16.mxu0 0
        %4021 = vmatpush1.bf16.msra.mxu0 0
        %4022 = vmatprep.subr.bf16.mxu0 0
        %4023 = vmatpush1.bf16.msra.mxu0 0
        %4024 = vmatprep.subr.bf16.mxu0 0
        %4025 = vmatpush1.bf16.msra.mxu0 0
        %4026 = vmatprep.subr.bf16.mxu0 0
        %4027 = vmatpush1.bf16.msra.mxu0 0
        %4028 = vmatprep.subr.bf16.mxu0 0
        %4029 = vmatpush1.bf16.msra.mxu0 0
        %4030 = vmatprep.subr.bf16.mxu0 0
        %4031 = vmatpush1.bf16.msra.mxu0 0
        %4032 = vmatprep.subr.bf16.mxu0 0
        %4033 = vmatpush1.bf16.msra.mxu0 0
        %4034 = vmatprep.subr.bf16.mxu0 0
        %4035 = vmatpush1.bf16.msra.mxu0 0
        %4036 = vmatprep.subr.bf16.mxu0 0
        %4037 = vmatpush1.bf16.msra.mxu0 0
        %4038 = vmatprep.subr.bf16.mxu0 0
        %4039 = vmatpush1.bf16.msra.mxu0 0
        %4040 = vmatprep.subr.bf16.mxu0 0
        %4041 = vmatpush1.bf16.msra.mxu0 0
        %4042 = vmatprep.mubr.bf16.mxu0 0
        %4043 = vmatmul.mubr.bf16.gmra.mrb[0].mxu0 %v386
        %v4044 = vpop.f32.mrb[0].mxu0
        %v4045 = vadd.f32 0.0, %v4044
        %v4046 = vpop.f32.mrb[0].mxu0
        %v4047 = vpop.f32.mrb[0].mxu0
        %v4048 = vpop.f32.mrb[0].mxu0
        %4049 = vdwg.mxu0
        %v4050 = vadd.f32 %v4002, %v4045
        %v4053 = vunpack.c.l.s4 1983009808
        %v4054 = vunpack.c.0.s8 %v4053
        %v4055 = vlaneseq
        %v4056 = vshrl.u32 %v4055, 7
        %v4057 = vsub.s32 %v4054, %v4056
        %v4058 = vrot.slane %v4006, %v4057
        %4059 = vrot.lane.b32.xlu0 %v4058, 127
        %v4060 = vpop.permute.xlu0 %4059
        %v4062 = vsel %vm242, %v4060, 0
        %4064 = vmatprep.subr.bf16.mxu0 0
        %4065 = vmatpush1.bf16.msra.mxu0 %v4062
        %4066 = vmatprep.subr.bf16.mxu0 0
        %4067 = vmatpush1.bf16.msra.mxu0 0
        %4068 = vmatprep.subr.bf16.mxu0 0
        %4069 = vmatpush1.bf16.msra.mxu0 0
        %4070 = vmatprep.subr.bf16.mxu0 0
        %4071 = vmatpush1.bf16.msra.mxu0 0
        %4072 = vmatprep.subr.bf16.mxu0 0
        %4073 = vmatpush1.bf16.msra.mxu0 0
        %4074 = vmatprep.subr.bf16.mxu0 0
        %4075 = vmatpush1.bf16.msra.mxu0 0
        %4076 = vmatprep.subr.bf16.mxu0 0
        %4077 = vmatpush1.bf16.msra.mxu0 0
        %4078 = vmatprep.subr.bf16.mxu0 0
        %4079 = vmatpush1.bf16.msra.mxu0 0
        %4080 = vmatprep.subr.bf16.mxu0 0
        %4081 = vmatpush1.bf16.msra.mxu0 0
        %4082 = vmatprep.subr.bf16.mxu0 0
        %4083 = vmatpush1.bf16.msra.mxu0 0
        %4084 = vmatprep.subr.bf16.mxu0 0
        %4085 = vmatpush1.bf16.msra.mxu0 0
        %4086 = vmatprep.subr.bf16.mxu0 0
        %4087 = vmatpush1.bf16.msra.mxu0 0
        %4088 = vmatprep.subr.bf16.mxu0 0
        %4089 = vmatpush1.bf16.msra.mxu0 0
        %4090 = vmatprep.subr.bf16.mxu0 0
        %4091 = vmatpush1.bf16.msra.mxu0 0
        %4092 = vmatprep.subr.bf16.mxu0 0
        %4093 = vmatpush1.bf16.msra.mxu0 0
        %4094 = vmatprep.subr.bf16.mxu0 0
        %4095 = vmatpush1.bf16.msra.mxu0 0
        %4096 = vmatprep.mubr.bf16.mxu0 0
        %4097 = vmatmul.mubr.bf16.gmra.mrb[0].mxu0 %v443
        %v4098 = vpop.f32.mrb[0].mxu0
        %v4099 = vadd.f32 0.0, %v4098
        %v4100 = vpop.f32.mrb[0].mxu0
        %v4101 = vpop.f32.mrb[0].mxu0
        %v4102 = vpop.f32.mrb[0].mxu0
        %4103 = vdwg.mxu0
        %v4104 = vadd.f32 %v4050, %v4099
        %4105 = vrot.lane.b32.xlu0 %v4058, 126
        %v4106 = vpop.permute.xlu0 %4105
        %v4108 = vsel %vm242, %v4106, 0
        %4110 = vmatprep.subr.bf16.mxu0 0
        %4111 = vmatpush1.bf16.msra.mxu0 %v4108
        %4112 = vmatprep.subr.bf16.mxu0 0
        %4113 = vmatpush1.bf16.msra.mxu0 0
        %4114 = vmatprep.subr.bf16.mxu0 0
        %4115 = vmatpush1.bf16.msra.mxu0 0
        %4116 = vmatprep.subr.bf16.mxu0 0
        %4117 = vmatpush1.bf16.msra.mxu0 0
        %4118 = vmatprep.subr.bf16.mxu0 0
        %4119 = vmatpush1.bf16.msra.mxu0 0
        %4120 = vmatprep.subr.bf16.mxu0 0
        %4121 = vmatpush1.bf16.msra.mxu0 0
        %4122 = vmatprep.subr.bf16.mxu0 0
        %4123 = vmatpush1.bf16.msra.mxu0 0
        %4124 = vmatprep.subr.bf16.mxu0 0
        %4125 = vmatpush1.bf16.msra.mxu0 0
        %4126 = vmatprep.subr.bf16.mxu0 0
        %4127 = vmatpush1.bf16.msra.mxu0 0
        %4128 = vmatprep.subr.bf16.mxu0 0
        %4129 = vmatpush1.bf16.msra.mxu0 0
        %4130 = vmatprep.subr.bf16.mxu0 0
        %4131 = vmatpush1.bf16.msra.mxu0 0
        %4132 = vmatprep.subr.bf16.mxu0 0
        %4133 = vmatpush1.bf16.msra.mxu0 0
        %4134 = vmatprep.subr.bf16.mxu0 0
        %4135 = vmatpush1.bf16.msra.mxu0 0
        %4136 = vmatprep.subr.bf16.mxu0 0
        %4137 = vmatpush1.bf16.msra.mxu0 0
        %4138 = vmatprep.subr.bf16.mxu0 0
        %4139 = vmatpush1.bf16.msra.mxu0 0
        %4140 = vmatprep.subr.bf16.mxu0 0
        %4141 = vmatpush1.bf16.msra.mxu0 0
        %4142 = vmatprep.mubr.bf16.mxu0 0
        %4143 = vmatmul.mubr.bf16.gmra.mrb[0].mxu0 %v492
        %v4144 = vpop.f32.mrb[0].mxu0
        %v4145 = vadd.f32 0.0, %v4144
        %v4146 = vpop.f32.mrb[0].mxu0
        %v4147 = vpop.f32.mrb[0].mxu0
        %v4148 = vpop.f32.mrb[0].mxu0
        %4149 = vdwg.mxu0
        %v4150 = vadd.f32 %v4104, %v4145
        %s4151 = sadd.s32 %s3857, 2
        %s4152 = smul.addr %s4151, 2
        %s4153 = scalar_lea.vmem %s180, %s4152 [#allocation2]
        %v4154 = vld [vmem:[%s4153] sm:$0x3]
        %v4156 = vsel %vm242, %v4154, 0
        %4158 = vmatprep.subr.bf16.mxu0 0
        %4159 = vmatpush1.bf16.msra.mxu0 %v4156
        %4160 = vmatprep.subr.bf16.mxu0 0
        %4161 = vmatpush1.bf16.msra.mxu0 0
        %4162 = vmatprep.subr.bf16.mxu0 0
        %4163 = vmatpush1.bf16.msra.mxu0 0
        %4164 = vmatprep.subr.bf16.mxu0 0
        %4165 = vmatpush1.bf16.msra.mxu0 0
        %4166 = vmatprep.subr.bf16.mxu0 0
        %4167 = vmatpush1.bf16.msra.mxu0 0
        %4168 = vmatprep.subr.bf16.mxu0 0
        %4169 = vmatpush1.bf16.msra.mxu0 0
        %4170 = vmatprep.subr.bf16.mxu0 0
        %4171 = vmatpush1.bf16.msra.mxu0 0
        %4172 = vmatprep.subr.bf16.mxu0 0
        %4173 = vmatpush1.bf16.msra.mxu0 0
        %4174 = vmatprep.subr.bf16.mxu0 0
        %4175 = vmatpush1.bf16.msra.mxu0 0
        %4176 = vmatprep.subr.bf16.mxu0 0
        %4177 = vmatpush1.bf16.msra.mxu0 0
        %4178 = vmatprep.subr.bf16.mxu0 0
        %4179 = vmatpush1.bf16.msra.mxu0 0
        %4180 = vmatprep.subr.bf16.mxu0 0
        %4181 = vmatpush1.bf16.msra.mxu0 0
        %4182 = vmatprep.subr.bf16.mxu0 0
        %4183 = vmatpush1.bf16.msra.mxu0 0
        %4184 = vmatprep.subr.bf16.mxu0 0
        %4185 = vmatpush1.bf16.msra.mxu0 0
        %4186 = vmatprep.subr.bf16.mxu0 0
        %4187 = vmatpush1.bf16.msra.mxu0 0
        %4188 = vmatprep.subr.bf16.mxu0 0
        %4189 = vmatpush1.bf16.msra.mxu0 0
        %4190 = vmatprep.mubr.bf16.mxu0 0
        %4191 = vmatmul.mubr.bf16.gmra.mrb[0].mxu0 %v543
        %v4192 = vpop.f32.mrb[0].mxu0
        %v4193 = vadd.f32 0.0, %v4192
        %v4194 = vpop.f32.mrb[0].mxu0
        %v4195 = vpop.f32.mrb[0].mxu0
        %v4196 = vpop.f32.mrb[0].mxu0
        %4197 = vdwg.mxu0
        %v4198 = vadd.f32 %v4150, %v4193
        %v4201 = vunpack.c.l.s4 1983009808
        %v4202 = vunpack.c.0.s8 %v4201
        %v4203 = vlaneseq
        %v4204 = vshrl.u32 %v4203, 7
        %v4205 = vsub.s32 %v4202, %v4204
        %v4206 = vrot.slane %v4154, %v4205
        %4207 = vrot.lane.b32.xlu0 %v4206, 127
        %v4208 = vpop.permute.xlu0 %4207
        %v4210 = vsel %vm242, %v4208, 0
        %4212 = vmatprep.subr.bf16.mxu0 0
        %4213 = vmatpush1.bf16.msra.mxu0 %v4210
        %4214 = vmatprep.subr.bf16.mxu0 0
        %4215 = vmatpush1.bf16.msra.mxu0 0
        %4216 = vmatprep.subr.bf16.mxu0 0
        %4217 = vmatpush1.bf16.msra.mxu0 0
        %4218 = vmatprep.subr.bf16.mxu0 0
        %4219 = vmatpush1.bf16.msra.mxu0 0
        %4220 = vmatprep.subr.bf16.mxu0 0
        %4221 = vmatpush1.bf16.msra.mxu0 0
        %4222 = vmatprep.subr.bf16.mxu0 0
        %4223 = vmatpush1.bf16.msra.mxu0 0
        %4224 = vmatprep.subr.bf16.mxu0 0
        %4225 = vmatpush1.bf16.msra.mxu0 0
        %4226 = vmatprep.subr.bf16.mxu0 0
        %4227 = vmatpush1.bf16.msra.mxu0 0
        %4228 = vmatprep.subr.bf16.mxu0 0
        %4229 = vmatpush1.bf16.msra.mxu0 0
        %4230 = vmatprep.subr.bf16.mxu0 0
        %4231 = vmatpush1.bf16.msra.mxu0 0
        %4232 = vmatprep.subr.bf16.mxu0 0
        %4233 = vmatpush1.bf16.msra.mxu0 0
        %4234 = vmatprep.subr.bf16.mxu0 0
        %4235 = vmatpush1.bf16.msra.mxu0 0
        %4236 = vmatprep.subr.bf16.mxu0 0
        %4237 = vmatpush1.bf16.msra.mxu0 0
        %4238 = vmatprep.subr.bf16.mxu0 0
        %4239 = vmatpush1.bf16.msra.mxu0 0
        %4240 = vmatprep.subr.bf16.mxu0 0
        %4241 = vmatpush1.bf16.msra.mxu0 0
        %4242 = vmatprep.subr.bf16.mxu0 0
        %4243 = vmatpush1.bf16.msra.mxu0 0
        %4244 = vmatprep.mubr.bf16.mxu0 0
        %4245 = vmatmul.mubr.bf16.gmra.mrb[0].mxu0 %v600
        %v4246 = vpop.f32.mrb[0].mxu0
        %v4247 = vadd.f32 0.0, %v4246
        %v4248 = vpop.f32.mrb[0].mxu0
        %v4249 = vpop.f32.mrb[0].mxu0
        %v4250 = vpop.f32.mrb[0].mxu0
        %4251 = vdwg.mxu0
        %v4252 = vadd.f32 %v4198, %v4247
        %4253 = vrot.lane.b32.xlu0 %v4206, 126
        %v4254 = vpop.permute.xlu0 %4253
        %v4256 = vsel %vm242, %v4254, 0
        %4258 = vmatprep.subr.bf16.mxu0 0
        %4259 = vmatpush1.bf16.msra.mxu0 %v4256
        %4260 = vmatprep.subr.bf16.mxu0 0
        %4261 = vmatpush1.bf16.msra.mxu0 0
        %4262 = vmatprep.subr.bf16.mxu0 0
        %4263 = vmatpush1.bf16.msra.mxu0 0
        %4264 = vmatprep.subr.bf16.mxu0 0
        %4265 = vmatpush1.bf16.msra.mxu0 0
        %4266 = vmatprep.subr.bf16.mxu0 0
        %4267 = vmatpush1.bf16.msra.mxu0 0
        %4268 = vmatprep.subr.bf16.mxu0 0
        %4269 = vmatpush1.bf16.msra.mxu0 0
        %4270 = vmatprep.subr.bf16.mxu0 0
        %4271 = vmatpush1.bf16.msra.mxu0 0
        %4272 = vmatprep.subr.bf16.mxu0 0
        %4273 = vmatpush1.bf16.msra.mxu0 0
        %4274 = vmatprep.subr.bf16.mxu0 0
        %4275 = vmatpush1.bf16.msra.mxu0 0
        %4276 = vmatprep.subr.bf16.mxu0 0
        %4277 = vmatpush1.bf16.msra.mxu0 0
        %4278 = vmatprep.subr.bf16.mxu0 0
        %4279 = vmatpush1.bf16.msra.mxu0 0
        %4280 = vmatprep.subr.bf16.mxu0 0
        %4281 = vmatpush1.bf16.msra.mxu0 0
        %4282 = vmatprep.subr.bf16.mxu0 0
        %4283 = vmatpush1.bf16.msra.mxu0 0
        %4284 = vmatprep.subr.bf16.mxu0 0
        %4285 = vmatpush1.bf16.msra.mxu0 0
        %4286 = vmatprep.subr.bf16.mxu0 0
        %4287 = vmatpush1.bf16.msra.mxu0 0
        %4288 = vmatprep.subr.bf16.mxu0 0
        %4289 = vmatpush1.bf16.msra.mxu0 0
        %4290 = vmatprep.mubr.bf16.mxu0 0
        %4291 = vmatmul.mubr.bf16.gmra.mrb[0].mxu0 %v649
        %v4292 = vpop.f32.mrb[0].mxu0
        %v4293 = vadd.f32 0.0, %v4292
        %v4294 = vpop.f32.mrb[0].mxu0
        %v4295 = vpop.f32.mrb[0].mxu0
        %v4296 = vpop.f32.mrb[0].mxu0
        %4297 = vdwg.mxu0
        %v4298 = vadd.f32 %v4252, %v4293
        %v4299 = vadd.f32 %v4298, %v698
        %vm4300 = vcmp.gt.f32.partialorder %v4299, 0.0
        %v4301 = vmul.f32 %v4299, 0.1
        %v4302 = vsel %vm4300, %v4299, %v4301
        %v4304 = vcombine.high %v4302, %v4302
        %v4306 = vunpack.c.l.s4 1966171168
        %v4307 = vunpack.c.0.s8 %v4306
        %v4308 = vlaneseq
        %v4309 = vshrl.u32 %v4308, 7
        %v4310 = vsub.s32 %v4307, %v4309
        %v4311 = vrot.slane %v4302, %v4310
        %v4313 = vunpack.c.l.s4 1966171168
        %v4314 = vunpack.c.0.s8 %v4313
        %v4315 = vlaneseq
        %v4316 = vshrl.u32 %v4315, 7
        %v4317 = vsub.s32 %v4314, %v4316
        %v4318 = vrot.slane %v4304, %v4317
        %v4319 = vcombine.high %v4311, %v4311
        %v4320 = vcombine.high %v4318, %v4318
        %v4322 = vunpack.c.l.s4 1966171168
        %v4323 = vunpack.c.0.s8 %v4322
        %v4324 = vlaneseq
        %v4325 = vshrl.u32 %v4324, 7
        %v4326 = vsub.s32 %v4323, %v4325
        %v4327 = vrot.slane %v4311, %v4326
        %v4329 = vunpack.c.l.s4 1966171168
        %v4330 = vunpack.c.0.s8 %v4329
        %v4331 = vlaneseq
        %v4332 = vshrl.u32 %v4331, 7
        %v4333 = vsub.s32 %v4330, %v4332
        %v4334 = vrot.slane %v4318, %v4333
        %v4336 = vunpack.c.l.s4 1966171168
        %v4337 = vunpack.c.0.s8 %v4336
        %v4338 = vlaneseq
        %v4339 = vshrl.u32 %v4338, 7
        %v4340 = vsub.s32 %v4337, %v4339
        %v4341 = vrot.slane %v4319, %v4340
        %v4343 = vunpack.c.l.s4 1966171168
        %v4344 = vunpack.c.0.s8 %v4343
        %v4345 = vlaneseq
        %v4346 = vshrl.u32 %v4345, 7
        %v4347 = vsub.s32 %v4344, %v4346
        %v4348 = vrot.slane %v4320, %v4347
        %v4349 = vcombine.high %v4327, %v4327
        %v4350 = vcombine.high %v4334, %v4334
        %v4351 = vcombine.high %v4341, %v4341
        %v4352 = vcombine.high %v4348, %v4348
        %4361 = vst.msk [vmem:[%s202 + $0x7] sm:$0x1] %vm762, %v4327
        %4362 = vst.msk [vmem:[%s202 + $0xf] sm:$0x1] %vm762, %v4341
        %4363 = vst.msk [vmem:[%s202 + $0x17] sm:$0x1] %vm762, %v4349
        %4364 = vst.msk [vmem:[%s202 + $0x1f] sm:$0x1] %vm762, %v4351
        %4365 = vst.msk [vmem:[%s202 + $0x27] sm:$0x1] %vm762, %v4334
        %4366 = vst.msk [vmem:[%s202 + $0x2f] sm:$0x1] %vm762, %v4348
        %4367 = vst.msk [vmem:[%s202 + $0x37] sm:$0x1] %vm762, %v4350
        %4368 = vst.msk [vmem:[%s202 + $0x3f] sm:$0x1] %vm762, %v4352
        %s4369 = sand.u32 %s110, 1
        %s4370 = scalar_lea.sflag [#allocation4], %s4369
        %s4371 = sand.u32 %s110, 1
        %s4372 = smul.addr %s4371, 64
        %s4373 = scalar_lea.vmem [#allocation5], %s4372
        // Predicated region
        $region37: #{tpu_custom_call.1} parent=31 // pred_check
          %p4374 = pneg %p120
        $region38: #{tpu_custom_call.1} parent=31 // pred_check_branch
          %4376 = sbr.rel (%p4374) target = $region40
        $region39: #{tpu_custom_call.1} parent=31 // pred_region
          %s4378 = ssub.s32 1024, 1024
          %4379 = vsyncadd %s4370, %s4378
          %s4380 = smul.addr %s24, 16
          %s4381 = sadd.s32 %s25, %s4380
          %s4382 = smul.addr %s4381, 128
          %s4383 = scalar_lea.hbm %s3, %s4382
          %s4384 = sshll.u32 %s4373, 4
          %s4385 = int_to_ptr.vmem [resolvable:$true] %s4384
          %4390 = dma.vmem_to_hbm [thread:$0]  %s4385, 1024, %s4383, %s4370, 128, 256, 8
        $region40: #{tpu_custom_call.1} parent=31 // pred_fallthru
          _
      $region32: #{tpu_custom_call.1} parent=5 // pred_fallthru
        _
      %p4391 = scmp.le.s32.totalorder 2, %s15
      // Predicated region
      $region41: #{tpu_custom_call.1} parent=5 // pred_check
        %p4392 = pneg %p4391
      $region42: #{tpu_custom_call.1} parent=5 // pred_check_branch
        %4394 = sbr.rel (%p4392) target = $region44
      $region43: #{tpu_custom_call.1} parent=5 // pred_region
        %s4395 = ssub.s32 %s15, 2
        // Predicated region
        $region45: #{tpu_custom_call.1} parent=43 // pred_check
          %p4396 = pneg %p126
        $region46: #{tpu_custom_call.1} parent=43 // pred_check_branch
          %4398 = sbr.rel (%p4396) target = $region48
        $region47: #{tpu_custom_call.1} parent=43 // pred_region
          %s4399 = sand.u32 %s111, 1
          %s4400 = scalar_lea.sflag [#allocation4], %s4399
          %s4401 = sand.u32 %s111, 1
          %s4402 = smul.addr %s4401, 64
          %s4403 = scalar_lea.vmem [#allocation5], %s4402
          %4404 = dma.done %s4400, 1024
        $region48: #{tpu_custom_call.1} parent=43 // pred_fallthru
          _
      $region44: #{tpu_custom_call.1} parent=5 // pred_fallthru
        _
    $region6: #{tpu_custom_call.1} parent=1 // loop_footer
      %s19 = sadd.s32 1, %s15
    $region7: #{tpu_custom_call.1} parent=1 // loop_footer_branch
      %14 = sbr.rel target = $region3
    $region8: #{tpu_custom_call.1} parent=1 // loop_exit
      _
    %4405 = vsyncpa [#allocation3], 1
    %s4406 = scalar_lea.sflag [#allocation3], 1
    %4407 = vsyncpa %s4406, 1
    %4408 = vsyncpa [#allocation4], 1
    %s4409 = scalar_lea.sflag [#allocation4], 1
    %4410 = vsyncpa %s4409, 1

</llo_original>
